<compile_context>
chip_gen: v7x
topology: tpu7x:2x2x1
jax: 0.10.0
libtpu: 0.0.40
codegen_flags: <defaults>
</compile_context>

<pallas_src>
import math
import numpy as np

import jax
import jax.numpy as jnp
from jax import lax
from jax.experimental import pallas as pl
from jax.experimental.pallas import tpu as pltpu

LOGITS = 10
LANE = 128

# ---- static layout constants for the 28x28 -> 14x14 -> 7x7 pipeline ---------
PF2 = 72            # rows per conv2-input parity plane: 8*8 valid + 8 slack
R1 = 4 * PF2        # 288: conv1 output rows per (image, pool-phase)
WP2 = 8             # padded-w extent of conv2 parity planes
M2 = 7 * WP2        # 56: conv2 output rows per (image, pool-phase); col w==7 garbage
K2 = 9 * 32         # 288: tap-merged conv2 contraction
FLAT = M2 * 64      # 3584: flattened conv2 output per image (incl. garbage column)


# ----------------------------------------------------------------------------
# Pallas kernels
# ----------------------------------------------------------------------------
def fused_cnn_conv_kernel(a1_ref, mask_ref, w1_ref, b1_ref, w2_ref, b2_ref,
                          o_ref, planes_ref):
    """conv1+ReLU+pool1 -> conv2+ReLU+pool2 for one batch tile.

    a1_ref    : (4, TB, 288, 9)  conv1 im2col, pool-phase major; rows already in
                conv2's parity-plane layout (4 planes x 72 rows/plane).
    mask_ref  : (288, 1)  1.0 on valid plane rows, 0.0 on conv2-padding/slack rows.
    w1_ref    : (9, 32)    b1_ref : (1, 32)
    w2_ref    : (288, 64)  tap-merged (k*32 + cin, cout)    b2_ref : (1, 64)
    o_ref     : (TB, 56, 64) pooled conv2 output (row = ho*8 + wo; wo==7 garbage)
    planes_ref: VMEM scratch (TB, 4, 72, 32): conv1 pooled output, conv2 layout.
    """
    tb = a1_ref.shape[1]

    # -------- conv1: one MXU matmul, pool phases + batch + rows stacked in M.
    a1 = a1_ref[...].reshape(4 * tb * R1, 9)
    c1 = jnp.dot(a1, w1_ref[...], preferred_element_type=jnp.float32)
    c1 = jnp.maximum(c1 + b1_ref[...], 0.0).reshape(4, tb * R1, 32)
    p1 = jnp.maximum(jnp.maximum(c1[0], c1[1]), jnp.maximum(c1[2], c1[3]))
    p1 = p1.reshape(tb, R1, 32) * mask_ref[...]        # zero pad / slack rows
    planes_ref[...] = p1.reshape(tb, 4, PF2, 32)

    # -------- conv2: tap-merged im2col (K=288), phases + batch stacked in M.
    phase_blocks = []
    for dy in range(2):                                # 2x2 pool phases
        for dx in range(2):
            taps = []
            for ky in range(3):                        # 3x3 conv taps
                for kx in range(3):
                    s, t = dy + ky, dx + kx
                    ph = (s & 1) * 2 + (t & 1)                 # parity plane
                    st = (s >> 1) * WP2 + (t >> 1)             # flat row offset
                    taps.append(planes_ref[:, ph, pl.ds(st, M2), :])  # (TB,56,32)
            phase_blocks.append(jnp.concatenate(taps, axis=-1))      # (TB,56,288)
    a2 = jnp.concatenate(phase_blocks, axis=0).reshape(4 * tb * M2, K2)
    c2 = jnp.dot(a2, w2_ref[...], preferred_element_type=jnp.float32)
    c2 = jnp.maximum(c2 + b2_ref[...], 0.0).reshape(4, tb * M2, 64)
    p2 = jnp.maximum(jnp.maximum(c2[0], c2[1]), jnp.maximum(c2[2], c2[3]))
    o_ref[...] = p2.reshape(tb, M2, 64)


def matmul_bias_kernel(a_ref, w_ref, b_ref, o_ref):
    """o = a @ w + bias; a:(TM,K) w:(K,N) bias:(1,N) o:(TM,N)."""
    o_ref[...] = (
        jnp.dot(a_ref[...], w_ref[...], preferred_element_type=jnp.float32)
        + b_ref[...]
    ).astype(o_ref.dtype)


# ----------------------------------------------------------------------------
# Pallas wrappers
# ----------------------------------------------------------------------------
def conv_stage_pallas(a1, mask, w1k, b1k, w2k, b2k, tb):
    """a1:(4,Bp,288,9) -> pooled conv2 output (Bp, 56, 64)."""
    Bp = a1.shape[1]
    steps = Bp // tb
    return pl.pallas_call(
        fused_cnn_conv_kernel,
        out_shape=jax.ShapeDtypeStruct((Bp, M2, 64), jnp.float32),
        grid=(steps,),
        in_specs=[
            pl.BlockSpec((4, tb, R1, 9), lambda i: (0, i, 0, 0)),
            pl.BlockSpec((R1, 1), lambda i: (0, 0)),
            pl.BlockSpec((9, 32), lambda i: (0, 0)),
            pl.BlockSpec((1, 32), lambda i: (0, 0)),
            pl.BlockSpec((K2, 64), lambda i: (0, 0)),
            pl.BlockSpec((1, 64), lambda i: (0, 0)),
        ],
        out_specs=pl.BlockSpec((tb, M2, 64), lambda i: (i, 0, 0)),
        scratch_shapes=[pltpu.VMEM((tb, 4, PF2, 32), jnp.float32)],
        compiler_params=pltpu.CompilerParams(
            dimension_semantics=("parallel",)),
        cost_estimate=pl.CostEstimate(
            flops=2 * Bp * 4 * (R1 * 9 * 32 + M2 * K2 * 64),
            transcendentals=0,
            bytes_accessed=4 * (a1.size + w2k.size + Bp * M2 * 64)),
    )(a1, mask, w1k, b1k, w2k, b2k)


def linear_pallas(a, w, b):
    """a:(M,K) @ w:(K,N) + b:(1,N); M padded to >=8 and tiled; N lane-dense."""
    M, K = a.shape
    N = w.shape[1]
    m8 = max(8, ((M + 7) // 8) * 8)
    tm = min(128, m8)
    Mp = ((m8 + tm - 1) // tm) * tm
    if Mp != M:
        a = jnp.pad(a, ((0, Mp - M), (0, 0)))
    out = pl.pallas_call(
        matmul_bias_kernel,
        out_shape=jax.ShapeDtypeStruct((Mp, N), jnp.float32),
        grid=(Mp // tm,),
        in_specs=[
            pl.BlockSpec((tm, K), lambda i: (i, 0)),
            pl.BlockSpec((K, N), lambda i: (0, 0)),
            pl.BlockSpec((1, N), lambda i: (0, 0)),
        ],
        out_specs=pl.BlockSpec((tm, N), lambda i: (i, 0)),
        compiler_params=pltpu.CompilerParams(
            dimension_semantics=("parallel",)),
        cost_estimate=pl.CostEstimate(
            flops=2 * Mp * K * N, transcendentals=0,
            bytes_accessed=4 * (Mp * K + K * N + N + Mp * N)),
    )(a, w, b)
    return out[:M]


# ----------------------------------------------------------------------------
# Input / parameter preparation (thin XLA glue on the raw input & weights only)
# ----------------------------------------------------------------------------
def build_conv1_im2col(x):
    """x:(B,28,28) -> (4, B, 288, 9) conv1 im2col.

    Row m = plane*72 + i*8 + j maps to pooled position (h,w)=(2i+py-1, 2j+px-1),
    i.e. conv2's parity-plane layout; axis 0 is the 2x2 pool phase (dy,dx).
    Column k = ky*3 + kx is the conv tap.  Invalid / slack rows are masked to
    zero inside the kernel (after bias+ReLU), so their patch contents are moot.
    """
    B = x.shape[0]
    xp = jnp.pad(x, ((0, 0), (3, 3), (3, 3)))          # (B, 34, 34)
    qs = []
    for dy in (0, 1):
        for dx in (0, 1):
            cols = []
            for ky in range(3):
                for kx in range(3):
                    s, t = dy + ky, dx + kx            # in [0, 3]
                    g = xp[:, s:s + 32:2, t:t + 32:2]  # (B,16,16): g[u,v]=xp[s+2u,t+2v]
                    planes = []
                    for py in (0, 1):
                        for px in (0, 1):
                            pp = g[:, py::2, px::2].reshape(B, 64)   # (B, 8*8)
                            planes.append(jnp.pad(pp, ((0, 0), (0, 8))))  # +slack
                    cols.append(jnp.concatenate(planes, axis=1))     # (B, 288)
            qs.append(jnp.stack(cols, axis=-1))                      # (B, 288, 9)
    return jnp.stack(qs, axis=0)                                     # (4, B, 288, 9)


def build_valid_mask():
    """(288,1) mask: 1.0 where the plane row maps to a valid 14x14 position."""
    m = np.zeros((4, PF2), np.float32)
    for py in (0, 1):
        for px in (0, 1):
            p1 = py * 2 + px
            for i in range(8):
                for j in range(8):
                    h, w = 2 * i + py - 1, 2 * j + px - 1
                    if 0 <= h < 14 and 0 <= w < 14:
                        m[p1, i * 8 + j] = 1.0
    return jnp.asarray(m.reshape(R1, 1))


def init_params(key):
    """Parameters in the PyTorch module's native layout / init distributions."""
    k = jax.random.split(key, 6)
    bound1 = 1.0 / math.sqrt(1 * 3 * 3)
    bound2 = 1.0 / math.sqrt(32 * 3 * 3)
    bound3 = 1.0 / math.sqrt(7 * 7 * 64)
    w1 = jax.random.uniform(k[0], (32, 1, 3, 3), jnp.float32, -bound1, bound1)
    b1 = jax.random.uniform(k[1], (32,), jnp.float32, -bound1, bound1)
    w2 = jax.random.uniform(k[2], (64, 32, 3, 3), jnp.float32, -bound2, bound2)
    b2 = jax.random.uniform(k[3], (64,), jnp.float32, -bound2, bound2)
    # nn.Linear weight overridden by torch.nn.init.uniform_ -> U[0, 1)
    wl = jax.random.uniform(k[4], (LOGITS, 7 * 7 * 64), jnp.float32, 0.0, 1.0)
    bl = jax.random.uniform(k[5], (LOGITS,), jnp.float32, -bound3, bound3)
    return (w1, b1, w2, b2, wl, bl)


def prepare_params(params):
    """torch layout -> kernel layout."""
    w1, b1, w2, b2, wl, bl = params
    # conv weights OIHW -> tap-major: conv1 (9,32); conv2 tap-merged K rows (288,64).
    w1k = jnp.transpose(w1, (2, 3, 1, 0)).reshape(9, 32)
    w2k = jnp.transpose(w2, (2, 3, 1, 0)).reshape(K2, 64)
    # linear: torch flattens (c,h,w); our rows are (h*8+w)*64+c with a garbage
    # w==7 column -> zero those weight rows; pad N 10->128 for lane-dense stores.
    wt = jnp.transpose(wl.reshape(LOGITS, 64, 7, 7), (2, 3, 1, 0))   # (7,7,64,10)
    wt = jnp.pad(wt, ((0, 0), (0, 1), (0, 0), (0, 0)))               # (7,8,64,10)
    wlk = jnp.pad(wt.reshape(FLAT, LOGITS), ((0, 0), (0, LANE - LOGITS)))
    blk = jnp.pad(bl, (0, LANE - LOGITS)).reshape(1, LANE)
    mask = build_valid_mask()
    return (w1k, b1.reshape(1, 32), w2k, b2.reshape(1, 64), wlk, blk, mask)


# ----------------------------------------------------------------------------
# Model
# ----------------------------------------------------------------------------
def cnn_forward(x_nchw, prepared):
    w1k, b1k, w2k, b2k, wlk, blk, mask = prepared
    B = x_nchw.shape[0]
    x = x_nchw[:, 0]                                   # (B, 28, 28), Cin == 1

    # batch tiling: amortize grid-step overhead; keep >= 2 steps for v7x's 2 TCs.
    if B >= 16:
        tb = 8
    elif B >= 2:
        tb = max(1, B // 2)
    else:
        tb = 1
    Bp = ((B + tb - 1) // tb) * tb

    a1 = build_conv1_im2col(x)                         # (4, B, 288, 9)
    if Bp != B:
        a1 = jnp.pad(a1, ((0, 0), (0, Bp - B), (0, 0), (0, 0)))

    p2 = conv_stage_pallas(a1, mask, w1k, b1k, w2k, b2k, tb)   # (Bp, 56, 64)
    flat = p2.reshape(Bp, FLAT)                        # contiguous -> free reshape
    logits = linear_pallas(flat, wlk, blk)             # (Bp, 128)
    return logits[:B, :LOGITS]


def cnn_reference(x_nchw, params):
    """Pure-JAX reference mirroring the PyTorch module exactly (torch layouts)."""
    w1, b1, w2, b2, wl, bl = params
    dn = ("NCHW", "OIHW", "NCHW")
    h = lax.conv_general_dilated(x_nchw, w1, (1, 1), "SAME", dimension_numbers=dn)
    h = jax.nn.relu(h + b1[None, :, None, None])
    h = lax.reduce_window(h, -jnp.inf, lax.max, (1, 1, 2, 2), (1, 1, 2, 2), "VALID")
    h = lax.conv_general_dilated(h, w2, (1, 1), "SAME", dimension_numbers=dn)
    h = jax.nn.relu(h + b2[None, :, None, None])
    h = lax.reduce_window(h, -jnp.inf, lax.max, (1, 1, 2, 2), (1, 1, 2, 2), "VALID")
    h = h.reshape(h.shape[0], -1)                      # torch NCHW flatten
    return h @ wl.T + bl


# ----------------------------------------------------------------------------
if __name__ == "__main__":
    key = jax.random.PRNGKey(0)
    kp, kx = jax.random.split(key)
    params = init_params(kp)
    prepared = prepare_params(params)

    # 28x28 single-channel images (the linear expects 7*7*64 after two pools).
    x = jax.random.normal(kx, (2, 1, 28, 28), jnp.float32)

    fwd = jax.jit(cnn_forward)
    out = jax.block_until_ready(fwd(x, prepared))
    ref = jax.block_until_ready(cnn_reference(x, params))

    assert out.shape == (2, LOGITS), out.shape
    assert jnp.all(jnp.isfinite(out)), "non-finite output"
    rel_err = float(jnp.max(jnp.abs(out - ref)) / (jnp.max(jnp.abs(ref)) + 1e-6))
    assert rel_err < 1e-2, f"mismatch vs reference: rel_err={rel_err}"

    print("KERNEL_OK")
</pallas_src>

<mosaic_0001>
module attributes {stable_mosaic.version = 11 : i64} {
  func.func @fused_cnn_conv_kernel(%arg0: i32, %arg1: memref<4x1x288x9xf32, #tpu.memory_space<vmem>>, %arg2: memref<288x1xf32, #tpu.memory_space<vmem>>, %arg3: memref<9x32xf32, #tpu.memory_space<vmem>>, %arg4: memref<1x32xf32, #tpu.memory_space<vmem>>, %arg5: memref<288x64xf32, #tpu.memory_space<vmem>>, %arg6: memref<1x64xf32, #tpu.memory_space<vmem>>, %arg7: memref<1x56x64xf32, #tpu.memory_space<vmem>>, %arg8: memref<1x4x72x32xf32, #tpu.memory_space<vmem>>) attributes {dimension_semantics = [#tpu.dimension_semantics<parallel>], iteration_bounds = array<i64: 2>, scalar_prefetch = 0 : i64, scratch_operands = 1 : i64, tpu.core_type = #tpu.core_type<tc>, window_params = [{transform_indices = @transform_0, window_bounds = array<i64: 4, 1, 288, 9>}, {pipeline_mode = #tpu.pipeline_mode<synchronous>, transform_indices = @transform_1, window_bounds = array<i64: 288, 1>}, {pipeline_mode = #tpu.pipeline_mode<synchronous>, transform_indices = @transform_2, window_bounds = array<i64: 9, 32>}, {pipeline_mode = #tpu.pipeline_mode<synchronous>, transform_indices = @transform_3, window_bounds = array<i64: 1, 32>}, {pipeline_mode = #tpu.pipeline_mode<synchronous>, transform_indices = @transform_4, window_bounds = array<i64: 288, 64>}, {pipeline_mode = #tpu.pipeline_mode<synchronous>, transform_indices = @transform_5, window_bounds = array<i64: 1, 64>}, {transform_indices = @transform_6, window_bounds = array<i64: 1, 56, 64>}]} {
    %c0 = arith.constant 0 : index
    %c0_0 = arith.constant 0 : index
    %c0_1 = arith.constant 0 : index
    %c0_2 = arith.constant 0 : index
    %0 = vector.load %arg1[%c0, %c0_0, %c0_1, %c0_2] : memref<4x1x288x9xf32, #tpu.memory_space<vmem>>, vector<4x1x288x9xf32>
    %1 = vector.shape_cast %0 : vector<4x1x288x9xf32> to vector<1152x9xf32>
    %c0_3 = arith.constant 0 : index
    %c0_4 = arith.constant 0 : index
    %2 = vector.load %arg3[%c0_3, %c0_4] : memref<9x32xf32, #tpu.memory_space<vmem>>, vector<9x32xf32>
    %cst = arith.constant dense<0.000000e+00> : vector<1152x32xf32>
    %3 = tpu.matmul %1, %2, %cst {dimension_numbers = #tpu.dot_dimension_numbers<[1], [0], [0], [1], [0, 0, 1, 1], [], []>} : vector<1152x9xf32>, vector<9x32xf32>, vector<1152x32xf32> -> vector<1152x32xf32>
    %c0_5 = arith.constant 0 : index
    %c0_6 = arith.constant 0 : index
    %4 = vector.load %arg4[%c0_5, %c0_6] : memref<1x32xf32, #tpu.memory_space<vmem>>, vector<1x32xf32>
    %5 = vector.broadcast %4 : vector<1x32xf32> to vector<1152x32xf32>
    %6 = arith.addf %3, %5 : vector<1152x32xf32>
    %cst_7 = arith.constant 0.000000e+00 : f32
    %7 = vector.broadcast %cst_7 : f32 to vector<1152x32xf32>
    %8 = arith.maximumf %6, %7 : vector<1152x32xf32>
    %9 = vector.shape_cast %8 : vector<1152x32xf32> to vector<4x288x32xf32>
    %10 = vector.extract_strided_slice %9 {offsets = [0, 0, 0], sizes = [1, 288, 32], strides = [1, 1, 1]} : vector<4x288x32xf32> to vector<1x288x32xf32>
    %11 = vector.shape_cast %10 : vector<1x288x32xf32> to vector<288x32xf32>
    %12 = vector.extract_strided_slice %9 {offsets = [1, 0, 0], sizes = [1, 288, 32], strides = [1, 1, 1]} : vector<4x288x32xf32> to vector<1x288x32xf32>
    %13 = vector.shape_cast %12 : vector<1x288x32xf32> to vector<288x32xf32>
    %14 = arith.maximumf %11, %13 : vector<288x32xf32>
    %15 = vector.extract_strided_slice %9 {offsets = [2, 0, 0], sizes = [1, 288, 32], strides = [1, 1, 1]} : vector<4x288x32xf32> to vector<1x288x32xf32>
    %16 = vector.shape_cast %15 : vector<1x288x32xf32> to vector<288x32xf32>
    %17 = vector.extract_strided_slice %9 {offsets = [3, 0, 0], sizes = [1, 288, 32], strides = [1, 1, 1]} : vector<4x288x32xf32> to vector<1x288x32xf32>
    %18 = vector.shape_cast %17 : vector<1x288x32xf32> to vector<288x32xf32>
    %19 = arith.maximumf %16, %18 : vector<288x32xf32>
    %20 = arith.maximumf %14, %19 : vector<288x32xf32>
    %21 = vector.shape_cast %20 : vector<288x32xf32> to vector<1x288x32xf32>
    %c0_8 = arith.constant 0 : index
    %c0_9 = arith.constant 0 : index
    %22 = vector.load %arg2[%c0_8, %c0_9] : memref<288x1xf32, #tpu.memory_space<vmem>>, vector<288x1xf32>
    %23 = vector.shape_cast %22 : vector<288x1xf32> to vector<1x288x1xf32>
    %24 = vector.broadcast %23 : vector<1x288x1xf32> to vector<1x288x32xf32>
    %25 = arith.mulf %21, %24 : vector<1x288x32xf32>
    %26 = vector.shape_cast %25 : vector<1x288x32xf32> to vector<1x4x72x32xf32>
    %c0_10 = arith.constant 0 : index
    %c0_11 = arith.constant 0 : index
    %c0_12 = arith.constant 0 : index
    %c0_13 = arith.constant 0 : index
    %27 = vector.load %arg8[%c0_10, %c0_11, %c0_12, %c0_13] : memref<1x4x72x32xf32, #tpu.memory_space<vmem>>, vector<1x4x72x32xf32>
    tpu.vector_store %arg8[%c0_10, %c0_11, %c0_12, %c0_13], %26 {strides = array<i32>} : memref<1x4x72x32xf32, #tpu.memory_space<vmem>>, vector<1x4x72x32xf32>,
    %c0_14 = arith.constant 0 : index
    %c0_15 = arith.constant 0 : index
    %c0_16 = arith.constant 0 : index
    %c0_17 = arith.constant 0 : index
    %28 = vector.load %arg8[%c0_14, %c0_15, %c0_16, %c0_17] : memref<1x4x72x32xf32, #tpu.memory_space<vmem>>, vector<1x1x56x32xf32>
    %29 = vector.shape_cast %28 : vector<1x1x56x32xf32> to vector<1x56x32xf32>
    %c0_18 = arith.constant 0 : index
    %c1 = arith.constant 1 : index
    %c0_19 = arith.constant 0 : index
    %c0_20 = arith.constant 0 : index
    %30 = vector.load %arg8[%c0_18, %c1, %c0_19, %c0_20] : memref<1x4x72x32xf32, #tpu.memory_space<vmem>>, vector<1x1x56x32xf32>
    %31 = vector.shape_cast %30 : vector<1x1x56x32xf32> to vector<1x56x32xf32>
    %c0_21 = arith.constant 0 : index
    %c0_22 = arith.constant 0 : index
    %c1_23 = arith.constant 1 : index
    %c0_24 = arith.constant 0 : index
    %32 = vector.load %arg8[%c0_21, %c0_22, %c1_23, %c0_24] : memref<1x4x72x32xf32, #tpu.memory_space<vmem>>, vector<1x1x56x32xf32>
    %33 = vector.shape_cast %32 : vector<1x1x56x32xf32> to vector<1x56x32xf32>
    %c0_25 = arith.constant 0 : index
    %c2 = arith.constant 2 : index
    %c0_26 = arith.constant 0 : index
    %c0_27 = arith.constant 0 : index
    %34 = vector.load %arg8[%c0_25, %c2, %c0_26, %c0_27] : memref<1x4x72x32xf32, #tpu.memory_space<vmem>>, vector<1x1x56x32xf32>
    %35 = vector.shape_cast %34 : vector<1x1x56x32xf32> to vector<1x56x32xf32>
    %c0_28 = arith.constant 0 : index
    %c3 = arith.constant 3 : index
    %c0_29 = arith.constant 0 : index
    %c0_30 = arith.constant 0 : index
    %36 = vector.load %arg8[%c0_28, %c3, %c0_29, %c0_30] : memref<1x4x72x32xf32, #tpu.memory_space<vmem>>, vector<1x1x56x32xf32>
    %37 = vector.shape_cast %36 : vector<1x1x56x32xf32> to vector<1x56x32xf32>
    %c0_31 = arith.constant 0 : index
    %c2_32 = arith.constant 2 : index
    %c1_33 = arith.constant 1 : index
    %c0_34 = arith.constant 0 : index
    %38 = vector.load %arg8[%c0_31, %c2_32, %c1_33, %c0_34] : memref<1x4x72x32xf32, #tpu.memory_space<vmem>>, vector<1x1x56x32xf32>
    %39 = vector.shape_cast %38 : vector<1x1x56x32xf32> to vector<1x56x32xf32>
    %c0_35 = arith.constant 0 : index
    %c0_36 = arith.constant 0 : index
    %c8 = arith.constant 8 : index
    %c0_37 = arith.constant 0 : index
    %40 = vector.load %arg8[%c0_35, %c0_36, %c8, %c0_37] : memref<1x4x72x32xf32, #tpu.memory_space<vmem>>, vector<1x1x56x32xf32>
    %41 = vector.shape_cast %40 : vector<1x1x56x32xf32> to vector<1x56x32xf32>
    %c0_38 = arith.constant 0 : index
    %c1_39 = arith.constant 1 : index
    %c8_40 = arith.constant 8 : index
    %c0_41 = arith.constant 0 : index
    %42 = vector.load %arg8[%c0_38, %c1_39, %c8_40, %c0_41] : memref<1x4x72x32xf32, #tpu.memory_space<vmem>>, vector<1x1x56x32xf32>
    %43 = vector.shape_cast %42 : vector<1x1x56x32xf32> to vector<1x56x32xf32>
    %c0_42 = arith.constant 0 : index
    %c0_43 = arith.constant 0 : index
    %c9 = arith.constant 9 : index
    %c0_44 = arith.constant 0 : index
    %44 = vector.load %arg8[%c0_42, %c0_43, %c9, %c0_44] : memref<1x4x72x32xf32, #tpu.memory_space<vmem>>, vector<1x1x56x32xf32>
    %45 = vector.shape_cast %44 : vector<1x1x56x32xf32> to vector<1x56x32xf32>
    %46 = tpu.concatenate %29, %31, %33, %35, %37, %39, %41, %43, %45 in 2 : vector<1x56x32xf32>, vector<1x56x32xf32>, vector<1x56x32xf32>, vector<1x56x32xf32>, vector<1x56x32xf32>, vector<1x56x32xf32>, vector<1x56x32xf32>, vector<1x56x32xf32>, vector<1x56x32xf32> -> vector<1x56x288xf32>
    %c0_45 = arith.constant 0 : index
    %c1_46 = arith.constant 1 : index
    %c0_47 = arith.constant 0 : index
    %c0_48 = arith.constant 0 : index
    %47 = vector.load %arg8[%c0_45, %c1_46, %c0_47, %c0_48] : memref<1x4x72x32xf32, #tpu.memory_space<vmem>>, vector<1x1x56x32xf32>
    %48 = vector.shape_cast %47 : vector<1x1x56x32xf32> to vector<1x56x32xf32>
    %c0_49 = arith.constant 0 : index
    %c0_50 = arith.constant 0 : index
    %c1_51 = arith.constant 1 : index
    %c0_52 = arith.constant 0 : index
    %49 = vector.load %arg8[%c0_49, %c0_50, %c1_51, %c0_52] : memref<1x4x72x32xf32, #tpu.memory_space<vmem>>, vector<1x1x56x32xf32>
    %50 = vector.shape_cast %49 : vector<1x1x56x32xf32> to vector<1x56x32xf32>
    %c0_53 = arith.constant 0 : index
    %c1_54 = arith.constant 1 : index
    %c1_55 = arith.constant 1 : index
    %c0_56 = arith.constant 0 : index
    %51 = vector.load %arg8[%c0_53, %c1_54, %c1_55, %c0_56] : memref<1x4x72x32xf32, #tpu.memory_space<vmem>>, vector<1x1x56x32xf32>
    %52 = vector.shape_cast %51 : vector<1x1x56x32xf32> to vector<1x56x32xf32>
    %c0_57 = arith.constant 0 : index
    %c3_58 = arith.constant 3 : index
    %c0_59 = arith.constant 0 : index
    %c0_60 = arith.constant 0 : index
    %53 = vector.load %arg8[%c0_57, %c3_58, %c0_59, %c0_60] : memref<1x4x72x32xf32, #tpu.memory_space<vmem>>, vector<1x1x56x32xf32>
    %54 = vector.shape_cast %53 : vector<1x1x56x32xf32> to vector<1x56x32xf32>
    %c0_61 = arith.constant 0 : index
    %c2_62 = arith.constant 2 : index
    %c1_63 = arith.constant 1 : index
    %c0_64 = arith.constant 0 : index
    %55 = vector.load %arg8[%c0_61, %c2_62, %c1_63, %c0_64] : memref<1x4x72x32xf32, #tpu.memory_space<vmem>>, vector<1x1x56x32xf32>
    %56 = vector.shape_cast %55 : vector<1x1x56x32xf32> to vector<1x56x32xf32>
    %c0_65 = arith.constant 0 : index
    %c3_66 = arith.constant 3 : index
    %c1_67 = arith.constant 1 : index
    %c0_68 = arith.constant 0 : index
    %57 = vector.load %arg8[%c0_65, %c3_66, %c1_67, %c0_68] : memref<1x4x72x32xf32, #tpu.memory_space<vmem>>, vector<1x1x56x32xf32>
    %58 = vector.shape_cast %57 : vector<1x1x56x32xf32> to vector<1x56x32xf32>
    %c0_69 = arith.constant 0 : index
    %c1_70 = arith.constant 1 : index
    %c8_71 = arith.constant 8 : index
    %c0_72 = arith.constant 0 : index
    %59 = vector.load %arg8[%c0_69, %c1_70, %c8_71, %c0_72] : memref<1x4x72x32xf32, #tpu.memory_space<vmem>>, vector<1x1x56x32xf32>
    %60 = vector.shape_cast %59 : vector<1x1x56x32xf32> to vector<1x56x32xf32>
    %c0_73 = arith.constant 0 : index
    %c0_74 = arith.constant 0 : index
    %c9_75 = arith.constant 9 : index
    %c0_76 = arith.constant 0 : index
    %61 = vector.load %arg8[%c0_73, %c0_74, %c9_75, %c0_76] : memref<1x4x72x32xf32, #tpu.memory_space<vmem>>, vector<1x1x56x32xf32>
    %62 = vector.shape_cast %61 : vector<1x1x56x32xf32> to vector<1x56x32xf32>
    %c0_77 = arith.constant 0 : index
    %c1_78 = arith.constant 1 : index
    %c9_79 = arith.constant 9 : index
    %c0_80 = arith.constant 0 : index
    %63 = vector.load %arg8[%c0_77, %c1_78, %c9_79, %c0_80] : memref<1x4x72x32xf32, #tpu.memory_space<vmem>>, vector<1x1x56x32xf32>
    %64 = vector.shape_cast %63 : vector<1x1x56x32xf32> to vector<1x56x32xf32>
    %65 = tpu.concatenate %48, %50, %52, %54, %56, %58, %60, %62, %64 in 2 : vector<1x56x32xf32>, vector<1x56x32xf32>, vector<1x56x32xf32>, vector<1x56x32xf32>, vector<1x56x32xf32>, vector<1x56x32xf32>, vector<1x56x32xf32>, vector<1x56x32xf32>, vector<1x56x32xf32> -> vector<1x56x288xf32>
    %c0_81 = arith.constant 0 : index
    %c2_82 = arith.constant 2 : index
    %c0_83 = arith.constant 0 : index
    %c0_84 = arith.constant 0 : index
    %66 = vector.load %arg8[%c0_81, %c2_82, %c0_83, %c0_84] : memref<1x4x72x32xf32, #tpu.memory_space<vmem>>, vector<1x1x56x32xf32>
    %67 = vector.shape_cast %66 : vector<1x1x56x32xf32> to vector<1x56x32xf32>
    %c0_85 = arith.constant 0 : index
    %c3_86 = arith.constant 3 : index
    %c0_87 = arith.constant 0 : index
    %c0_88 = arith.constant 0 : index
    %68 = vector.load %arg8[%c0_85, %c3_86, %c0_87, %c0_88] : memref<1x4x72x32xf32, #tpu.memory_space<vmem>>, vector<1x1x56x32xf32>
    %69 = vector.shape_cast %68 : vector<1x1x56x32xf32> to vector<1x56x32xf32>
    %c0_89 = arith.constant 0 : index
    %c2_90 = arith.constant 2 : index
    %c1_91 = arith.constant 1 : index
    %c0_92 = arith.constant 0 : index
    %70 = vector.load %arg8[%c0_89, %c2_90, %c1_91, %c0_92] : memref<1x4x72x32xf32, #tpu.memory_space<vmem>>, vector<1x1x56x32xf32>
    %71 = vector.shape_cast %70 : vector<1x1x56x32xf32> to vector<1x56x32xf32>
    %c0_93 = arith.constant 0 : index
    %c0_94 = arith.constant 0 : index
    %c8_95 = arith.constant 8 : index
    %c0_96 = arith.constant 0 : index
    %72 = vector.load %arg8[%c0_93, %c0_94, %c8_95, %c0_96] : memref<1x4x72x32xf32, #tpu.memory_space<vmem>>, vector<1x1x56x32xf32>
    %73 = vector.shape_cast %72 : vector<1x1x56x32xf32> to vector<1x56x32xf32>
    %c0_97 = arith.constant 0 : index
    %c1_98 = arith.constant 1 : index
    %c8_99 = arith.constant 8 : index
    %c0_100 = arith.constant 0 : index
    %74 = vector.load %arg8[%c0_97, %c1_98, %c8_99, %c0_100] : memref<1x4x72x32xf32, #tpu.memory_space<vmem>>, vector<1x1x56x32xf32>
    %75 = vector.shape_cast %74 : vector<1x1x56x32xf32> to vector<1x56x32xf32>
    %c0_101 = arith.constant 0 : index
    %c0_102 = arith.constant 0 : index
    %c9_103 = arith.constant 9 : index
    %c0_104 = arith.constant 0 : index
    %76 = vector.load %arg8[%c0_101, %c0_102, %c9_103, %c0_104] : memref<1x4x72x32xf32, #tpu.memory_space<vmem>>, vector<1x1x56x32xf32>
    %77 = vector.shape_cast %76 : vector<1x1x56x32xf32> to vector<1x56x32xf32>
    %c0_105 = arith.constant 0 : index
    %c2_106 = arith.constant 2 : index
    %c8_107 = arith.constant 8 : index
    %c0_108 = arith.constant 0 : index
    %78 = vector.load %arg8[%c0_105, %c2_106, %c8_107, %c0_108] : memref<1x4x72x32xf32, #tpu.memory_space<vmem>>, vector<1x1x56x32xf32>
    %79 = vector.shape_cast %78 : vector<1x1x56x32xf32> to vector<1x56x32xf32>
    %c0_109 = arith.constant 0 : index
    %c3_110 = arith.constant 3 : index
    %c8_111 = arith.constant 8 : index
    %c0_112 = arith.constant 0 : index
    %80 = vector.load %arg8[%c0_109, %c3_110, %c8_111, %c0_112] : memref<1x4x72x32xf32, #tpu.memory_space<vmem>>, vector<1x1x56x32xf32>
    %81 = vector.shape_cast %80 : vector<1x1x56x32xf32> to vector<1x56x32xf32>
    %c0_113 = arith.constant 0 : index
    %c2_114 = arith.constant 2 : index
    %c9_115 = arith.constant 9 : index
    %c0_116 = arith.constant 0 : index
    %82 = vector.load %arg8[%c0_113, %c2_114, %c9_115, %c0_116] : memref<1x4x72x32xf32, #tpu.memory_space<vmem>>, vector<1x1x56x32xf32>
    %83 = vector.shape_cast %82 : vector<1x1x56x32xf32> to vector<1x56x32xf32>
    %84 = tpu.concatenate %67, %69, %71, %73, %75, %77, %79, %81, %83 in 2 : vector<1x56x32xf32>, vector<1x56x32xf32>, vector<1x56x32xf32>, vector<1x56x32xf32>, vector<1x56x32xf32>, vector<1x56x32xf32>, vector<1x56x32xf32>, vector<1x56x32xf32>, vector<1x56x32xf32> -> vector<1x56x288xf32>
    %c0_117 = arith.constant 0 : index
    %c3_118 = arith.constant 3 : index
    %c0_119 = arith.constant 0 : index
    %c0_120 = arith.constant 0 : index
    %85 = vector.load %arg8[%c0_117, %c3_118, %c0_119, %c0_120] : memref<1x4x72x32xf32, #tpu.memory_space<vmem>>, vector<1x1x56x32xf32>
    %86 = vector.shape_cast %85 : vector<1x1x56x32xf32> to vector<1x56x32xf32>
    %c0_121 = arith.constant 0 : index
    %c2_122 = arith.constant 2 : index
    %c1_123 = arith.constant 1 : index
    %c0_124 = arith.constant 0 : index
    %87 = vector.load %arg8[%c0_121, %c2_122, %c1_123, %c0_124] : memref<1x4x72x32xf32, #tpu.memory_space<vmem>>, vector<1x1x56x32xf32>
    %88 = vector.shape_cast %87 : vector<1x1x56x32xf32> to vector<1x56x32xf32>
    %c0_125 = arith.constant 0 : index
    %c3_126 = arith.constant 3 : index
    %c1_127 = arith.constant 1 : index
    %c0_128 = arith.constant 0 : index
    %89 = vector.load %arg8[%c0_125, %c3_126, %c1_127, %c0_128] : memref<1x4x72x32xf32, #tpu.memory_space<vmem>>, vector<1x1x56x32xf32>
    %90 = vector.shape_cast %89 : vector<1x1x56x32xf32> to vector<1x56x32xf32>
    %c0_129 = arith.constant 0 : index
    %c1_130 = arith.constant 1 : index
    %c8_131 = arith.constant 8 : index
    %c0_132 = arith.constant 0 : index
    %91 = vector.load %arg8[%c0_129, %c1_130, %c8_131, %c0_132] : memref<1x4x72x32xf32, #tpu.memory_space<vmem>>, vector<1x1x56x32xf32>
    %92 = vector.shape_cast %91 : vector<1x1x56x32xf32> to vector<1x56x32xf32>
    %c0_133 = arith.constant 0 : index
    %c0_134 = arith.constant 0 : index
    %c9_135 = arith.constant 9 : index
    %c0_136 = arith.constant 0 : index
    %93 = vector.load %arg8[%c0_133, %c0_134, %c9_135, %c0_136] : memref<1x4x72x32xf32, #tpu.memory_space<vmem>>, vector<1x1x56x32xf32>
    %94 = vector.shape_cast %93 : vector<1x1x56x32xf32> to vector<1x56x32xf32>
    %c0_137 = arith.constant 0 : index
    %c1_138 = arith.constant 1 : index
    %c9_139 = arith.constant 9 : index
    %c0_140 = arith.constant 0 : index
    %95 = vector.load %arg8[%c0_137, %c1_138, %c9_139, %c0_140] : memref<1x4x72x32xf32, #tpu.memory_space<vmem>>, vector<1x1x56x32xf32>
    %96 = vector.shape_cast %95 : vector<1x1x56x32xf32> to vector<1x56x32xf32>
    %c0_141 = arith.constant 0 : index
    %c3_142 = arith.constant 3 : index
    %c8_143 = arith.constant 8 : index
    %c0_144 = arith.constant 0 : index
    %97 = vector.load %arg8[%c0_141, %c3_142, %c8_143, %c0_144] : memref<1x4x72x32xf32, #tpu.memory_space<vmem>>, vector<1x1x56x32xf32>
    %98 = vector.shape_cast %97 : vector<1x1x56x32xf32> to vector<1x56x32xf32>
    %c0_145 = arith.constant 0 : index
    %c2_146 = arith.constant 2 : index
    %c9_147 = arith.constant 9 : index
    %c0_148 = arith.constant 0 : index
    %99 = vector.load %arg8[%c0_145, %c2_146, %c9_147, %c0_148] : memref<1x4x72x32xf32, #tpu.memory_space<vmem>>, vector<1x1x56x32xf32>
    %100 = vector.shape_cast %99 : vector<1x1x56x32xf32> to vector<1x56x32xf32>
    %c0_149 = arith.constant 0 : index
    %c3_150 = arith.constant 3 : index
    %c9_151 = arith.constant 9 : index
    %c0_152 = arith.constant 0 : index
    %101 = vector.load %arg8[%c0_149, %c3_150, %c9_151, %c0_152] : memref<1x4x72x32xf32, #tpu.memory_space<vmem>>, vector<1x1x56x32xf32>
    %102 = vector.shape_cast %101 : vector<1x1x56x32xf32> to vector<1x56x32xf32>
    %103 = tpu.concatenate %86, %88, %90, %92, %94, %96, %98, %100, %102 in 2 : vector<1x56x32xf32>, vector<1x56x32xf32>, vector<1x56x32xf32>, vector<1x56x32xf32>, vector<1x56x32xf32>, vector<1x56x32xf32>, vector<1x56x32xf32>, vector<1x56x32xf32>, vector<1x56x32xf32> -> vector<1x56x288xf32>
    %104 = tpu.concatenate %46, %65, %84, %103 in 0 : vector<1x56x288xf32>, vector<1x56x288xf32>, vector<1x56x288xf32>, vector<1x56x288xf32> -> vector<4x56x288xf32>
    %105 = vector.shape_cast %104 : vector<4x56x288xf32> to vector<224x288xf32>
    %c0_153 = arith.constant 0 : index
    %c0_154 = arith.constant 0 : index
    %106 = vector.load %arg5[%c0_153, %c0_154] : memref<288x64xf32, #tpu.memory_space<vmem>>, vector<288x64xf32>
    %cst_155 = arith.constant dense<0.000000e+00> : vector<224x64xf32>
    %107 = tpu.matmul %105, %106, %cst_155 {dimension_numbers = #tpu.dot_dimension_numbers<[1], [0], [0], [1], [0, 0, 1, 1], [], []>} : vector<224x288xf32>, vector<288x64xf32>, vector<224x64xf32> -> vector<224x64xf32>
    %c0_156 = arith.constant 0 : index
    %c0_157 = arith.constant 0 : index
    %108 = vector.load %arg6[%c0_156, %c0_157] : memref<1x64xf32, #tpu.memory_space<vmem>>, vector<1x64xf32>
    %109 = vector.broadcast %108 : vector<1x64xf32> to vector<224x64xf32>
    %110 = arith.addf %107, %109 : vector<224x64xf32>
    %cst_158 = arith.constant 0.000000e+00 : f32
    %111 = vector.broadcast %cst_158 : f32 to vector<224x64xf32>
    %112 = arith.maximumf %110, %111 : vector<224x64xf32>
    %113 = vector.shape_cast %112 : vector<224x64xf32> to vector<4x56x64xf32>
    %114 = vector.extract_strided_slice %113 {offsets = [0, 0, 0], sizes = [1, 56, 64], strides = [1, 1, 1]} : vector<4x56x64xf32> to vector<1x56x64xf32>
    %115 = vector.shape_cast %114 : vector<1x56x64xf32> to vector<56x64xf32>
    %116 = vector.extract_strided_slice %113 {offsets = [1, 0, 0], sizes = [1, 56, 64], strides = [1, 1, 1]} : vector<4x56x64xf32> to vector<1x56x64xf32>
    %117 = vector.shape_cast %116 : vector<1x56x64xf32> to vector<56x64xf32>
    %118 = arith.maximumf %115, %117 : vector<56x64xf32>
    %119 = vector.extract_strided_slice %113 {offsets = [2, 0, 0], sizes = [1, 56, 64], strides = [1, 1, 1]} : vector<4x56x64xf32> to vector<1x56x64xf32>
    %120 = vector.shape_cast %119 : vector<1x56x64xf32> to vector<56x64xf32>
    %121 = vector.extract_strided_slice %113 {offsets = [3, 0, 0], sizes = [1, 56, 64], strides = [1, 1, 1]} : vector<4x56x64xf32> to vector<1x56x64xf32>
    %122 = vector.shape_cast %121 : vector<1x56x64xf32> to vector<56x64xf32>
    %123 = arith.maximumf %120, %122 : vector<56x64xf32>
    %124 = arith.maximumf %118, %123 : vector<56x64xf32>
    %125 = vector.shape_cast %124 : vector<56x64xf32> to vector<1x56x64xf32>
    %c0_159 = arith.constant 0 : index
    %c0_160 = arith.constant 0 : index
    %c0_161 = arith.constant 0 : index
    %126 = vector.load %arg7[%c0_159, %c0_160, %c0_161] : memref<1x56x64xf32, #tpu.memory_space<vmem>>, vector<1x56x64xf32>
    tpu.vector_store %arg7[%c0_159, %c0_160, %c0_161], %125 {strides = array<i32>} : memref<1x56x64xf32, #tpu.memory_space<vmem>>, vector<1x56x64xf32>,
    return
  }
  func.func @transform_0(%arg0: i32) -> (i32, i32, i32, i32) {
    %c0_i32 = arith.constant 0 : i32
    %c0_i32_0 = arith.constant 0 : i32
    %c0_i32_1 = arith.constant 0 : i32
    %c0_i32_2 = arith.constant 0 : i32
    return %c0_i32, %arg0, %c0_i32_0, %c0_i32_1 : i32, i32, i32, i32
  }
  func.func @transform_1(%arg0: i32) -> (i32, i32) {
    %c0_i32 = arith.constant 0 : i32
    %c0_i32_0 = arith.constant 0 : i32
    %c0_i32_1 = arith.constant 0 : i32
    return %c0_i32, %c0_i32_0 : i32, i32
  }
  func.func @transform_2(%arg0: i32) -> (i32, i32) {
    %c0_i32 = arith.constant 0 : i32
    %c0_i32_0 = arith.constant 0 : i32
    %c0_i32_1 = arith.constant 0 : i32
    return %c0_i32, %c0_i32_0 : i32, i32
  }
  func.func @transform_3(%arg0: i32) -> (i32, i32) {
    %c0_i32 = arith.constant 0 : i32
    %c0_i32_0 = arith.constant 0 : i32
    %c0_i32_1 = arith.constant 0 : i32
    return %c0_i32, %c0_i32_0 : i32, i32
  }
  func.func @transform_4(%arg0: i32) -> (i32, i32) {
    %c0_i32 = arith.constant 0 : i32
    %c0_i32_0 = arith.constant 0 : i32
    %c0_i32_1 = arith.constant 0 : i32
    return %c0_i32, %c0_i32_0 : i32, i32
  }
  func.func @transform_5(%arg0: i32) -> (i32, i32) {
    %c0_i32 = arith.constant 0 : i32
    %c0_i32_0 = arith.constant 0 : i32
    %c0_i32_1 = arith.constant 0 : i32
    return %c0_i32, %c0_i32_0 : i32, i32
  }
  func.func @transform_6(%arg0: i32) -> (i32, i32, i32) {
    %c0_i32 = arith.constant 0 : i32
    %c0_i32_0 = arith.constant 0 : i32
    %c0_i32_1 = arith.constant 0 : i32
    return %arg0, %c0_i32, %c0_i32_0 : i32, i32, i32
  }
}

module attributes {stable_mosaic.version = 11 : i64} {
  func.func @matmul_bias_kernel(%arg0: i32, %arg1: memref<8x3584xf32, #tpu.memory_space<vmem>>, %arg2: memref<3584x128xf32, #tpu.memory_space<vmem>>, %arg3: memref<1x128xf32, #tpu.memory_space<vmem>>, %arg4: memref<8x128xf32, #tpu.memory_space<vmem>>) attributes {dimension_semantics = [#tpu.dimension_semantics<parallel>], iteration_bounds = array<i64: 1>, scalar_prefetch = 0 : i64, scratch_operands = 0 : i64, tpu.core_type = #tpu.core_type<tc>, window_params = [{transform_indices = @transform_0, window_bounds = array<i64: 8, 3584>}, {pipeline_mode = #tpu.pipeline_mode<synchronous>, transform_indices = @transform_1, window_bounds = array<i64: 3584, 128>}, {pipeline_mode = #tpu.pipeline_mode<synchronous>, transform_indices = @transform_2, window_bounds = array<i64: 1, 128>}, {transform_indices = @transform_3, window_bounds = array<i64: 8, 128>}]} {
    %c0 = arith.constant 0 : index
    %c0_0 = arith.constant 0 : index
    %0 = vector.load %arg1[%c0, %c0_0] : memref<8x3584xf32, #tpu.memory_space<vmem>>, vector<8x3584xf32>
    %c0_1 = arith.constant 0 : index
    %c0_2 = arith.constant 0 : index
    %1 = vector.load %arg2[%c0_1, %c0_2] : memref<3584x128xf32, #tpu.memory_space<vmem>>, vector<3584x128xf32>
    %cst = arith.constant dense<0.000000e+00> : vector<8x128xf32>
    %2 = tpu.matmul %0, %1, %cst {dimension_numbers = #tpu.dot_dimension_numbers<[1], [0], [0], [1], [0, 0, 1, 1], [], []>} : vector<8x3584xf32>, vector<3584x128xf32>, vector<8x128xf32> -> vector<8x128xf32>
    %c0_3 = arith.constant 0 : index
    %c0_4 = arith.constant 0 : index
    %3 = vector.load %arg3[%c0_3, %c0_4] : memref<1x128xf32, #tpu.memory_space<vmem>>, vector<1x128xf32>
    %4 = vector.broadcast %3 : vector<1x128xf32> to vector<8x128xf32>
    %5 = arith.addf %2, %4 : vector<8x128xf32>
    %c0_5 = arith.constant 0 : index
    %c0_6 = arith.constant 0 : index
    %6 = vector.load %arg4[%c0_5, %c0_6] : memref<8x128xf32, #tpu.memory_space<vmem>>, vector<8x128xf32>
    tpu.vector_store %arg4[%c0_5, %c0_6], %5 {strides = array<i32>} : memref<8x128xf32, #tpu.memory_space<vmem>>, vector<8x128xf32>,
    return
  }
  func.func @transform_0(%arg0: i32) -> (i32, i32) {
    %c0_i32 = arith.constant 0 : i32
    %c0_i32_0 = arith.constant 0 : i32
    return %arg0, %c0_i32 : i32, i32
  }
  func.func @transform_1(%arg0: i32) -> (i32, i32) {
    %c0_i32 = arith.constant 0 : i32
    %c0_i32_0 = arith.constant 0 : i32
    %c0_i32_1 = arith.constant 0 : i32
    return %c0_i32, %c0_i32_0 : i32, i32
  }
  func.func @transform_2(%arg0: i32) -> (i32, i32) {
    %c0_i32 = arith.constant 0 : i32
    %c0_i32_0 = arith.constant 0 : i32
    %c0_i32_1 = arith.constant 0 : i32
    return %c0_i32, %c0_i32_0 : i32, i32
  }
  func.func @transform_3(%arg0: i32) -> (i32, i32) {
    %c0_i32 = arith.constant 0 : i32
    %c0_i32_0 = arith.constant 0 : i32
    return %arg0, %c0_i32 : i32, i32
  }
}

</mosaic_0001>

<llo_original>
// kernel: cnn_forward.3
$region0: #{cnn_forward.3}
  #allocation0 [shape = 'u32[]', space=smem, size = 0x4, offset = 0x4, fixed_abs, tag = 'smem constant byte address 0x4 - core index']
  #allocation1 [shape = 'u32[144,128]{1,0:T(1,128)}', space=vmem, size = 0x12000, scoped, tag = 'internal scratch']
  %s0 = inlined_call_operand.vmem [shape: f32[8,3584], index: 0, kind: input, shape index: {}]
  %s1 = inlined_call_operand.vmem [shape: f32[3584,128], index: 1, kind: input, shape index: {}]
  %s2 = inlined_call_operand.vmem [shape: f32[1,128], index: 2, kind: input, shape index: {}]
  %s3 = inlined_call_operand.vmem [shape: f32[8,128], index: 3, kind: output, shape index: {}]
  %s4 = sld [smem:[#allocation0]]
  $region22: #{cnn_forward.3} parent=0
    _
  %s6 = ssub.s32 1, %s4
  %s7 = scalar_select 0, %s6, %s4
  // Predicated region
  $region2: #{cnn_forward.3} parent=0 // pred_check
    _
  $region3: #{cnn_forward.3} parent=0 // pred_check_branch
    %9 = sbr.rel (0) target = $region5
  $region4: #{cnn_forward.3} parent=0 // pred_region
    _
  $region5: #{cnn_forward.3} parent=0 // pred_fallthru
    _
  // Predicated region
  $region6: #{cnn_forward.3} parent=0 // pred_check
    _
  $region7: #{cnn_forward.3} parent=0 // pred_check_branch
    %11 = sbr.rel (0) target = $region9
  $region8: #{cnn_forward.3} parent=0 // pred_region
    _
  $region9: #{cnn_forward.3} parent=0 // pred_fallthru
    _
  // Predicated region
  $region10: #{cnn_forward.3} parent=0 // pred_check
    _
  $region11: #{cnn_forward.3} parent=0 // pred_check_branch
    %13 = sbr.rel (0) target = $region13
  $region12: #{cnn_forward.3} parent=0 // pred_region
    _
  $region13: #{cnn_forward.3} parent=0 // pred_fallthru
    _
  %v14 = vld [vmem:[%s0] sm:$0xff]
  %v15 = vld [vmem:[%s0 + $0x8] sm:$0xff]
  %v16 = vld [vmem:[%s0 + $0x10] sm:$0xff]
  %v17 = vld [vmem:[%s0 + $0x18] sm:$0xff]
  %v18 = vld [vmem:[%s0 + $0x20] sm:$0xff]
  %v19 = vld [vmem:[%s0 + $0x28] sm:$0xff]
  %v20 = vld [vmem:[%s0 + $0x30] sm:$0xff]
  %v21 = vld [vmem:[%s0 + $0x38] sm:$0xff]
  %v22 = vld [vmem:[%s0 + $0x40] sm:$0xff]
  %v23 = vld [vmem:[%s0 + $0x48] sm:$0xff]
  %v24 = vld [vmem:[%s0 + $0x50] sm:$0xff]
  %v25 = vld [vmem:[%s0 + $0x58] sm:$0xff]
  %v26 = vld [vmem:[%s0 + $0x60] sm:$0xff]
  %v27 = vld [vmem:[%s0 + $0x68] sm:$0xff]
  %v28 = vld [vmem:[%s0 + $0x70] sm:$0xff]
  %v29 = vld [vmem:[%s0 + $0x78] sm:$0xff]
  %v30 = vld [vmem:[%s0 + $0x80] sm:$0xff]
  %v31 = vld [vmem:[%s0 + $0x88] sm:$0xff]
  %v32 = vld [vmem:[%s0 + $0x90] sm:$0xff]
  %v33 = vld [vmem:[%s0 + $0x98] sm:$0xff]
  %v34 = vld [vmem:[%s0 + $0xa0] sm:$0xff]
  %v35 = vld [vmem:[%s0 + $0xa8] sm:$0xff]
  %v36 = vld [vmem:[%s0 + $0xb0] sm:$0xff]
  %v37 = vld [vmem:[%s0 + $0xb8] sm:$0xff]
  %v38 = vld [vmem:[%s0 + $0xc0] sm:$0xff]
  %v39 = vld [vmem:[%s0 + $0xc8] sm:$0xff]
  %v40 = vld [vmem:[%s0 + $0xd0] sm:$0xff]
  %v41 = vld [vmem:[%s0 + $0xd8] sm:$0xff]
  %v42 = vld [vmem:[%s1] sm:$0xff]
  %v43 = vld [vmem:[%s1 + $0x8] sm:$0xff]
  %v44 = vld [vmem:[%s1 + $0x10] sm:$0xff]
  %v45 = vld [vmem:[%s1 + $0x18] sm:$0xff]
  %v46 = vld [vmem:[%s1 + $0x20] sm:$0xff]
  %v47 = vld [vmem:[%s1 + $0x28] sm:$0xff]
  %v48 = vld [vmem:[%s1 + $0x30] sm:$0xff]
  %v49 = vld [vmem:[%s1 + $0x38] sm:$0xff]
  %v50 = vld [vmem:[%s1 + $0x40] sm:$0xff]
  %v51 = vld [vmem:[%s1 + $0x48] sm:$0xff]
  %v52 = vld [vmem:[%s1 + $0x50] sm:$0xff]
  %v53 = vld [vmem:[%s1 + $0x58] sm:$0xff]
  %v54 = vld [vmem:[%s1 + $0x60] sm:$0xff]
  %v55 = vld [vmem:[%s1 + $0x68] sm:$0xff]
  %v56 = vld [vmem:[%s1 + $0x70] sm:$0xff]
  %v57 = vld [vmem:[%s1 + $0x78] sm:$0xff]
  %v58 = vld [vmem:[%s1 + $0x80] sm:$0xff]
  %v59 = vld [vmem:[%s1 + $0x88] sm:$0xff]
  %v60 = vld [vmem:[%s1 + $0x90] sm:$0xff]
  %v61 = vld [vmem:[%s1 + $0x98] sm:$0xff]
  %v62 = vld [vmem:[%s1 + $0xa0] sm:$0xff]
  %v63 = vld [vmem:[%s1 + $0xa8] sm:$0xff]
  %v64 = vld [vmem:[%s1 + $0xb0] sm:$0xff]
  %v65 = vld [vmem:[%s1 + $0xb8] sm:$0xff]
  %v66 = vld [vmem:[%s1 + $0xc0] sm:$0xff]
  %v67 = vld [vmem:[%s1 + $0xc8] sm:$0xff]
  %v68 = vld [vmem:[%s1 + $0xd0] sm:$0xff]
  %v69 = vld [vmem:[%s1 + $0xd8] sm:$0xff]
  %v70 = vld [vmem:[%s1 + $0xe0] sm:$0xff]
  %v71 = vld [vmem:[%s1 + $0xe8] sm:$0xff]
  %v72 = vld [vmem:[%s1 + $0xf0] sm:$0xff]
  %v73 = vld [vmem:[%s1 + $0xf8] sm:$0xff]
  %v74 = vld [vmem:[%s1 + $0x100] sm:$0xff]
  %v75 = vld [vmem:[%s1 + $0x108] sm:$0xff]
  %v76 = vld [vmem:[%s1 + $0x110] sm:$0xff]
  %v77 = vld [vmem:[%s1 + $0x118] sm:$0xff]
  %v78 = vld [vmem:[%s1 + $0x120] sm:$0xff]
  %v79 = vld [vmem:[%s1 + $0x128] sm:$0xff]
  %v80 = vld [vmem:[%s1 + $0x130] sm:$0xff]
  %v81 = vld [vmem:[%s1 + $0x138] sm:$0xff]
  %v82 = vld [vmem:[%s1 + $0x140] sm:$0xff]
  %v83 = vld [vmem:[%s1 + $0x148] sm:$0xff]
  %v84 = vld [vmem:[%s1 + $0x150] sm:$0xff]
  %v85 = vld [vmem:[%s1 + $0x158] sm:$0xff]
  %v86 = vld [vmem:[%s1 + $0x160] sm:$0xff]
  %v87 = vld [vmem:[%s1 + $0x168] sm:$0xff]
  %v88 = vld [vmem:[%s1 + $0x170] sm:$0xff]
  %v89 = vld [vmem:[%s1 + $0x178] sm:$0xff]
  %v90 = vld [vmem:[%s1 + $0x180] sm:$0xff]
  %v91 = vld [vmem:[%s1 + $0x188] sm:$0xff]
  %v92 = vld [vmem:[%s1 + $0x190] sm:$0xff]
  %v93 = vld [vmem:[%s1 + $0x198] sm:$0xff]
  %v94 = vld [vmem:[%s1 + $0x1a0] sm:$0xff]
  %v95 = vld [vmem:[%s1 + $0x1a8] sm:$0xff]
  %v96 = vld [vmem:[%s1 + $0x1b0] sm:$0xff]
  %v97 = vld [vmem:[%s1 + $0x1b8] sm:$0xff]
  %v98 = vld [vmem:[%s1 + $0x1c0] sm:$0xff]
  %v99 = vld [vmem:[%s1 + $0x1c8] sm:$0xff]
  %v100 = vld [vmem:[%s1 + $0x1d0] sm:$0xff]
  %v101 = vld [vmem:[%s1 + $0x1d8] sm:$0xff]
  %v102 = vld [vmem:[%s1 + $0x1e0] sm:$0xff]
  %v103 = vld [vmem:[%s1 + $0x1e8] sm:$0xff]
  %v104 = vld [vmem:[%s1 + $0x1f0] sm:$0xff]
  %v105 = vld [vmem:[%s1 + $0x1f8] sm:$0xff]
  %v106 = vld [vmem:[%s1 + $0x200] sm:$0xff]
  %v107 = vld [vmem:[%s1 + $0x208] sm:$0xff]
  %v108 = vld [vmem:[%s1 + $0x210] sm:$0xff]
  %v109 = vld [vmem:[%s1 + $0x218] sm:$0xff]
  %v110 = vld [vmem:[%s1 + $0x220] sm:$0xff]
  %v111 = vld [vmem:[%s1 + $0x228] sm:$0xff]
  %v112 = vld [vmem:[%s1 + $0x230] sm:$0xff]
  %v113 = vld [vmem:[%s1 + $0x238] sm:$0xff]
  %v114 = vld [vmem:[%s1 + $0x240] sm:$0xff]
  %v115 = vld [vmem:[%s1 + $0x248] sm:$0xff]
  %v116 = vld [vmem:[%s1 + $0x250] sm:$0xff]
  %v117 = vld [vmem:[%s1 + $0x258] sm:$0xff]
  %v118 = vld [vmem:[%s1 + $0x260] sm:$0xff]
  %v119 = vld [vmem:[%s1 + $0x268] sm:$0xff]
  %v120 = vld [vmem:[%s1 + $0x270] sm:$0xff]
  %v121 = vld [vmem:[%s1 + $0x278] sm:$0xff]
  %v122 = vld [vmem:[%s1 + $0x280] sm:$0xff]
  %v123 = vld [vmem:[%s1 + $0x288] sm:$0xff]
  %v124 = vld [vmem:[%s1 + $0x290] sm:$0xff]
  %v125 = vld [vmem:[%s1 + $0x298] sm:$0xff]
  %v126 = vld [vmem:[%s1 + $0x2a0] sm:$0xff]
  %v127 = vld [vmem:[%s1 + $0x2a8] sm:$0xff]
  %v128 = vld [vmem:[%s1 + $0x2b0] sm:$0xff]
  %v129 = vld [vmem:[%s1 + $0x2b8] sm:$0xff]
  %v130 = vld [vmem:[%s1 + $0x2c0] sm:$0xff]
  %v131 = vld [vmem:[%s1 + $0x2c8] sm:$0xff]
  %v132 = vld [vmem:[%s1 + $0x2d0] sm:$0xff]
  %v133 = vld [vmem:[%s1 + $0x2d8] sm:$0xff]
  %v134 = vld [vmem:[%s1 + $0x2e0] sm:$0xff]
  %v135 = vld [vmem:[%s1 + $0x2e8] sm:$0xff]
  %v136 = vld [vmem:[%s1 + $0x2f0] sm:$0xff]
  %v137 = vld [vmem:[%s1 + $0x2f8] sm:$0xff]
  %v138 = vld [vmem:[%s1 + $0x300] sm:$0xff]
  %v139 = vld [vmem:[%s1 + $0x308] sm:$0xff]
  %v140 = vld [vmem:[%s1 + $0x310] sm:$0xff]
  %v141 = vld [vmem:[%s1 + $0x318] sm:$0xff]
  %v142 = vld [vmem:[%s1 + $0x320] sm:$0xff]
  %v143 = vld [vmem:[%s1 + $0x328] sm:$0xff]
  %v144 = vld [vmem:[%s1 + $0x330] sm:$0xff]
  %v145 = vld [vmem:[%s1 + $0x338] sm:$0xff]
  %v146 = vld [vmem:[%s1 + $0x340] sm:$0xff]
  %v147 = vld [vmem:[%s1 + $0x348] sm:$0xff]
  %v148 = vld [vmem:[%s1 + $0x350] sm:$0xff]
  %v149 = vld [vmem:[%s1 + $0x358] sm:$0xff]
  %v150 = vld [vmem:[%s1 + $0x360] sm:$0xff]
  %v151 = vld [vmem:[%s1 + $0x368] sm:$0xff]
  %v152 = vld [vmem:[%s1 + $0x370] sm:$0xff]
  %v153 = vld [vmem:[%s1 + $0x378] sm:$0xff]
  %v154 = vld [vmem:[%s1 + $0x380] sm:$0xff]
  %v155 = vld [vmem:[%s1 + $0x388] sm:$0xff]
  %v156 = vld [vmem:[%s1 + $0x390] sm:$0xff]
  %v157 = vld [vmem:[%s1 + $0x398] sm:$0xff]
  %v158 = vld [vmem:[%s1 + $0x3a0] sm:$0xff]
  %v159 = vld [vmem:[%s1 + $0x3a8] sm:$0xff]
  %v160 = vld [vmem:[%s1 + $0x3b0] sm:$0xff]
  %v161 = vld [vmem:[%s1 + $0x3b8] sm:$0xff]
  %v162 = vld [vmem:[%s1 + $0x3c0] sm:$0xff]
  %v163 = vld [vmem:[%s1 + $0x3c8] sm:$0xff]
  %v164 = vld [vmem:[%s1 + $0x3d0] sm:$0xff]
  %v165 = vld [vmem:[%s1 + $0x3d8] sm:$0xff]
  %v166 = vld [vmem:[%s1 + $0x3e0] sm:$0xff]
  %v167 = vld [vmem:[%s1 + $0x3e8] sm:$0xff]
  %v168 = vld [vmem:[%s1 + $0x3f0] sm:$0xff]
  %v169 = vld [vmem:[%s1 + $0x3f8] sm:$0xff]
  %v170 = vld [vmem:[%s1 + $0x400] sm:$0xff]
  %v171 = vld [vmem:[%s1 + $0x408] sm:$0xff]
  %v172 = vld [vmem:[%s1 + $0x410] sm:$0xff]
  %v173 = vld [vmem:[%s1 + $0x418] sm:$0xff]
  %v174 = vld [vmem:[%s1 + $0x420] sm:$0xff]
  %v175 = vld [vmem:[%s1 + $0x428] sm:$0xff]
  %v176 = vld [vmem:[%s1 + $0x430] sm:$0xff]
  %v177 = vld [vmem:[%s1 + $0x438] sm:$0xff]
  %v178 = vld [vmem:[%s1 + $0x440] sm:$0xff]
  %v179 = vld [vmem:[%s1 + $0x448] sm:$0xff]
  %v180 = vld [vmem:[%s1 + $0x450] sm:$0xff]
  %v181 = vld [vmem:[%s1 + $0x458] sm:$0xff]
  %v182 = vld [vmem:[%s1 + $0x460] sm:$0xff]
  %v183 = vld [vmem:[%s1 + $0x468] sm:$0xff]
  %v184 = vld [vmem:[%s1 + $0x470] sm:$0xff]
  %v185 = vld [vmem:[%s1 + $0x478] sm:$0xff]
  %v186 = vld [vmem:[%s1 + $0x480] sm:$0xff]
  %v187 = vld [vmem:[%s1 + $0x488] sm:$0xff]
  %v188 = vld [vmem:[%s1 + $0x490] sm:$0xff]
  %v189 = vld [vmem:[%s1 + $0x498] sm:$0xff]
  %v190 = vld [vmem:[%s1 + $0x4a0] sm:$0xff]
  %v191 = vld [vmem:[%s1 + $0x4a8] sm:$0xff]
  %v192 = vld [vmem:[%s1 + $0x4b0] sm:$0xff]
  %v193 = vld [vmem:[%s1 + $0x4b8] sm:$0xff]
  %v194 = vld [vmem:[%s1 + $0x4c0] sm:$0xff]
  %v195 = vld [vmem:[%s1 + $0x4c8] sm:$0xff]
  %v196 = vld [vmem:[%s1 + $0x4d0] sm:$0xff]
  %v197 = vld [vmem:[%s1 + $0x4d8] sm:$0xff]
  %v198 = vld [vmem:[%s1 + $0x4e0] sm:$0xff]
  %v199 = vld [vmem:[%s1 + $0x4e8] sm:$0xff]
  %v200 = vld [vmem:[%s1 + $0x4f0] sm:$0xff]
  %v201 = vld [vmem:[%s1 + $0x4f8] sm:$0xff]
  %v202 = vld [vmem:[%s1 + $0x500] sm:$0xff]
  %v203 = vld [vmem:[%s1 + $0x508] sm:$0xff]
  %v204 = vld [vmem:[%s1 + $0x510] sm:$0xff]
  %v205 = vld [vmem:[%s1 + $0x518] sm:$0xff]
  %v206 = vld [vmem:[%s1 + $0x520] sm:$0xff]
  %v207 = vld [vmem:[%s1 + $0x528] sm:$0xff]
  %v208 = vld [vmem:[%s1 + $0x530] sm:$0xff]
  %v209 = vld [vmem:[%s1 + $0x538] sm:$0xff]
  %v210 = vld [vmem:[%s1 + $0x540] sm:$0xff]
  %v211 = vld [vmem:[%s1 + $0x548] sm:$0xff]
  %v212 = vld [vmem:[%s1 + $0x550] sm:$0xff]
  %v213 = vld [vmem:[%s1 + $0x558] sm:$0xff]
  %v214 = vld [vmem:[%s1 + $0x560] sm:$0xff]
  %v215 = vld [vmem:[%s1 + $0x568] sm:$0xff]
  %v216 = vld [vmem:[%s1 + $0x570] sm:$0xff]
  %v217 = vld [vmem:[%s1 + $0x578] sm:$0xff]
  %v218 = vld [vmem:[%s1 + $0x580] sm:$0xff]
  %v219 = vld [vmem:[%s1 + $0x588] sm:$0xff]
  %v220 = vld [vmem:[%s1 + $0x590] sm:$0xff]
  %v221 = vld [vmem:[%s1 + $0x598] sm:$0xff]
  %v222 = vld [vmem:[%s1 + $0x5a0] sm:$0xff]
  %v223 = vld [vmem:[%s1 + $0x5a8] sm:$0xff]
  %v224 = vld [vmem:[%s1 + $0x5b0] sm:$0xff]
  %v225 = vld [vmem:[%s1 + $0x5b8] sm:$0xff]
  %v226 = vld [vmem:[%s1 + $0x5c0] sm:$0xff]
  %v227 = vld [vmem:[%s1 + $0x5c8] sm:$0xff]
  %v228 = vld [vmem:[%s1 + $0x5d0] sm:$0xff]
  %v229 = vld [vmem:[%s1 + $0x5d8] sm:$0xff]
  %v230 = vld [vmem:[%s1 + $0x5e0] sm:$0xff]
  %v231 = vld [vmem:[%s1 + $0x5e8] sm:$0xff]
  %v232 = vld [vmem:[%s1 + $0x5f0] sm:$0xff]
  %v233 = vld [vmem:[%s1 + $0x5f8] sm:$0xff]
  %v234 = vld [vmem:[%s1 + $0x600] sm:$0xff]
  %v235 = vld [vmem:[%s1 + $0x608] sm:$0xff]
  %v236 = vld [vmem:[%s1 + $0x610] sm:$0xff]
  %v237 = vld [vmem:[%s1 + $0x618] sm:$0xff]
  %v238 = vld [vmem:[%s1 + $0x620] sm:$0xff]
  %v239 = vld [vmem:[%s1 + $0x628] sm:$0xff]
  %v240 = vld [vmem:[%s1 + $0x630] sm:$0xff]
  %v241 = vld [vmem:[%s1 + $0x638] sm:$0xff]
  %v242 = vld [vmem:[%s1 + $0x640] sm:$0xff]
  %v243 = vld [vmem:[%s1 + $0x648] sm:$0xff]
  %v244 = vld [vmem:[%s1 + $0x650] sm:$0xff]
  %v245 = vld [vmem:[%s1 + $0x658] sm:$0xff]
  %v246 = vld [vmem:[%s1 + $0x660] sm:$0xff]
  %v247 = vld [vmem:[%s1 + $0x668] sm:$0xff]
  %v248 = vld [vmem:[%s1 + $0x670] sm:$0xff]
  %v249 = vld [vmem:[%s1 + $0x678] sm:$0xff]
  %v250 = vld [vmem:[%s1 + $0x680] sm:$0xff]
  %v251 = vld [vmem:[%s1 + $0x688] sm:$0xff]
  %v252 = vld [vmem:[%s1 + $0x690] sm:$0xff]
  %v253 = vld [vmem:[%s1 + $0x698] sm:$0xff]
  %v254 = vld [vmem:[%s1 + $0x6a0] sm:$0xff]
  %v255 = vld [vmem:[%s1 + $0x6a8] sm:$0xff]
  %v256 = vld [vmem:[%s1 + $0x6b0] sm:$0xff]
  %v257 = vld [vmem:[%s1 + $0x6b8] sm:$0xff]
  %v258 = vld [vmem:[%s1 + $0x6c0] sm:$0xff]
  %v259 = vld [vmem:[%s1 + $0x6c8] sm:$0xff]
  %v260 = vld [vmem:[%s1 + $0x6d0] sm:$0xff]
  %v261 = vld [vmem:[%s1 + $0x6d8] sm:$0xff]
  %v262 = vld [vmem:[%s1 + $0x6e0] sm:$0xff]
  %v263 = vld [vmem:[%s1 + $0x6e8] sm:$0xff]
  %v264 = vld [vmem:[%s1 + $0x6f0] sm:$0xff]
  %v265 = vld [vmem:[%s1 + $0x6f8] sm:$0xff]
  %v266 = vld [vmem:[%s1 + $0x700] sm:$0xff]
  %v267 = vld [vmem:[%s1 + $0x708] sm:$0xff]
  %v268 = vld [vmem:[%s1 + $0x710] sm:$0xff]
  %v269 = vld [vmem:[%s1 + $0x718] sm:$0xff]
  %v270 = vld [vmem:[%s1 + $0x720] sm:$0xff]
  %v271 = vld [vmem:[%s1 + $0x728] sm:$0xff]
  %v272 = vld [vmem:[%s1 + $0x730] sm:$0xff]
  %v273 = vld [vmem:[%s1 + $0x738] sm:$0xff]
  %v274 = vld [vmem:[%s1 + $0x740] sm:$0xff]
  %v275 = vld [vmem:[%s1 + $0x748] sm:$0xff]
  %v276 = vld [vmem:[%s1 + $0x750] sm:$0xff]
  %v277 = vld [vmem:[%s1 + $0x758] sm:$0xff]
  %v278 = vld [vmem:[%s1 + $0x760] sm:$0xff]
  %v279 = vld [vmem:[%s1 + $0x768] sm:$0xff]
  %v280 = vld [vmem:[%s1 + $0x770] sm:$0xff]
  %v281 = vld [vmem:[%s1 + $0x778] sm:$0xff]
  %v282 = vld [vmem:[%s1 + $0x780] sm:$0xff]
  %v283 = vld [vmem:[%s1 + $0x788] sm:$0xff]
  %v284 = vld [vmem:[%s1 + $0x790] sm:$0xff]
  %v285 = vld [vmem:[%s1 + $0x798] sm:$0xff]
  %v286 = vld [vmem:[%s1 + $0x7a0] sm:$0xff]
  %v287 = vld [vmem:[%s1 + $0x7a8] sm:$0xff]
  %v288 = vld [vmem:[%s1 + $0x7b0] sm:$0xff]
  %v289 = vld [vmem:[%s1 + $0x7b8] sm:$0xff]
  %v290 = vld [vmem:[%s1 + $0x7c0] sm:$0xff]
  %v291 = vld [vmem:[%s1 + $0x7c8] sm:$0xff]
  %v292 = vld [vmem:[%s1 + $0x7d0] sm:$0xff]
  %v293 = vld [vmem:[%s1 + $0x7d8] sm:$0xff]
  %v294 = vld [vmem:[%s1 + $0x7e0] sm:$0xff]
  %v295 = vld [vmem:[%s1 + $0x7e8] sm:$0xff]
  %v296 = vld [vmem:[%s1 + $0x7f0] sm:$0xff]
  %v297 = vld [vmem:[%s1 + $0x7f8] sm:$0xff]
  %v298 = vld [vmem:[%s1 + $0x800] sm:$0xff]
  %v299 = vld [vmem:[%s1 + $0x808] sm:$0xff]
  %v300 = vld [vmem:[%s1 + $0x810] sm:$0xff]
  %v301 = vld [vmem:[%s1 + $0x818] sm:$0xff]
  %v302 = vld [vmem:[%s1 + $0x820] sm:$0xff]
  %v303 = vld [vmem:[%s1 + $0x828] sm:$0xff]
  %v304 = vld [vmem:[%s1 + $0x830] sm:$0xff]
  %v305 = vld [vmem:[%s1 + $0x838] sm:$0xff]
  %v306 = vld [vmem:[%s1 + $0x840] sm:$0xff]
  %v307 = vld [vmem:[%s1 + $0x848] sm:$0xff]
  %v308 = vld [vmem:[%s1 + $0x850] sm:$0xff]
  %v309 = vld [vmem:[%s1 + $0x858] sm:$0xff]
  %v310 = vld [vmem:[%s1 + $0x860] sm:$0xff]
  %v311 = vld [vmem:[%s1 + $0x868] sm:$0xff]
  %v312 = vld [vmem:[%s1 + $0x870] sm:$0xff]
  %v313 = vld [vmem:[%s1 + $0x878] sm:$0xff]
  %v314 = vld [vmem:[%s1 + $0x880] sm:$0xff]
  %v315 = vld [vmem:[%s1 + $0x888] sm:$0xff]
  %v316 = vld [vmem:[%s1 + $0x890] sm:$0xff]
  %v317 = vld [vmem:[%s1 + $0x898] sm:$0xff]
  %v318 = vld [vmem:[%s1 + $0x8a0] sm:$0xff]
  %v319 = vld [vmem:[%s1 + $0x8a8] sm:$0xff]
  %v320 = vld [vmem:[%s1 + $0x8b0] sm:$0xff]
  %v321 = vld [vmem:[%s1 + $0x8b8] sm:$0xff]
  %v322 = vld [vmem:[%s1 + $0x8c0] sm:$0xff]
  %v323 = vld [vmem:[%s1 + $0x8c8] sm:$0xff]
  %v324 = vld [vmem:[%s1 + $0x8d0] sm:$0xff]
  %v325 = vld [vmem:[%s1 + $0x8d8] sm:$0xff]
  %v326 = vld [vmem:[%s1 + $0x8e0] sm:$0xff]
  %v327 = vld [vmem:[%s1 + $0x8e8] sm:$0xff]
  %v328 = vld [vmem:[%s1 + $0x8f0] sm:$0xff]
  %v329 = vld [vmem:[%s1 + $0x8f8] sm:$0xff]
  %v330 = vld [vmem:[%s1 + $0x900] sm:$0xff]
  %v331 = vld [vmem:[%s1 + $0x908] sm:$0xff]
  %v332 = vld [vmem:[%s1 + $0x910] sm:$0xff]
  %v333 = vld [vmem:[%s1 + $0x918] sm:$0xff]
  %v334 = vld [vmem:[%s1 + $0x920] sm:$0xff]
  %v335 = vld [vmem:[%s1 + $0x928] sm:$0xff]
  %v336 = vld [vmem:[%s1 + $0x930] sm:$0xff]
  %v337 = vld [vmem:[%s1 + $0x938] sm:$0xff]
  %v338 = vld [vmem:[%s1 + $0x940] sm:$0xff]
  %v339 = vld [vmem:[%s1 + $0x948] sm:$0xff]
  %v340 = vld [vmem:[%s1 + $0x950] sm:$0xff]
  %v341 = vld [vmem:[%s1 + $0x958] sm:$0xff]
  %v342 = vld [vmem:[%s1 + $0x960] sm:$0xff]
  %v343 = vld [vmem:[%s1 + $0x968] sm:$0xff]
  %v344 = vld [vmem:[%s1 + $0x970] sm:$0xff]
  %v345 = vld [vmem:[%s1 + $0x978] sm:$0xff]
  %v346 = vld [vmem:[%s1 + $0x980] sm:$0xff]
  %v347 = vld [vmem:[%s1 + $0x988] sm:$0xff]
  %v348 = vld [vmem:[%s1 + $0x990] sm:$0xff]
  %v349 = vld [vmem:[%s1 + $0x998] sm:$0xff]
  %v350 = vld [vmem:[%s1 + $0x9a0] sm:$0xff]
  %v351 = vld [vmem:[%s1 + $0x9a8] sm:$0xff]
  %v352 = vld [vmem:[%s1 + $0x9b0] sm:$0xff]
  %v353 = vld [vmem:[%s1 + $0x9b8] sm:$0xff]
  %v354 = vld [vmem:[%s1 + $0x9c0] sm:$0xff]
  %v355 = vld [vmem:[%s1 + $0x9c8] sm:$0xff]
  %v356 = vld [vmem:[%s1 + $0x9d0] sm:$0xff]
  %v357 = vld [vmem:[%s1 + $0x9d8] sm:$0xff]
  %v358 = vld [vmem:[%s1 + $0x9e0] sm:$0xff]
  %v359 = vld [vmem:[%s1 + $0x9e8] sm:$0xff]
  %v360 = vld [vmem:[%s1 + $0x9f0] sm:$0xff]
  %v361 = vld [vmem:[%s1 + $0x9f8] sm:$0xff]
  %v362 = vld [vmem:[%s1 + $0xa00] sm:$0xff]
  %v363 = vld [vmem:[%s1 + $0xa08] sm:$0xff]
  %v364 = vld [vmem:[%s1 + $0xa10] sm:$0xff]
  %v365 = vld [vmem:[%s1 + $0xa18] sm:$0xff]
  %v366 = vld [vmem:[%s1 + $0xa20] sm:$0xff]
  %v367 = vld [vmem:[%s1 + $0xa28] sm:$0xff]
  %v368 = vld [vmem:[%s1 + $0xa30] sm:$0xff]
  %v369 = vld [vmem:[%s1 + $0xa38] sm:$0xff]
  %v370 = vld [vmem:[%s1 + $0xa40] sm:$0xff]
  %v371 = vld [vmem:[%s1 + $0xa48] sm:$0xff]
  %v372 = vld [vmem:[%s1 + $0xa50] sm:$0xff]
  %v373 = vld [vmem:[%s1 + $0xa58] sm:$0xff]
  %v374 = vld [vmem:[%s1 + $0xa60] sm:$0xff]
  %v375 = vld [vmem:[%s1 + $0xa68] sm:$0xff]
  %v376 = vld [vmem:[%s1 + $0xa70] sm:$0xff]
  %v377 = vld [vmem:[%s1 + $0xa78] sm:$0xff]
  %v378 = vld [vmem:[%s1 + $0xa80] sm:$0xff]
  %v379 = vld [vmem:[%s1 + $0xa88] sm:$0xff]
  %v380 = vld [vmem:[%s1 + $0xa90] sm:$0xff]
  %v381 = vld [vmem:[%s1 + $0xa98] sm:$0xff]
  %v382 = vld [vmem:[%s1 + $0xaa0] sm:$0xff]
  %v383 = vld [vmem:[%s1 + $0xaa8] sm:$0xff]
  %v384 = vld [vmem:[%s1 + $0xab0] sm:$0xff]
  %v385 = vld [vmem:[%s1 + $0xab8] sm:$0xff]
  %v386 = vld [vmem:[%s1 + $0xac0] sm:$0xff]
  %v387 = vld [vmem:[%s1 + $0xac8] sm:$0xff]
  %v388 = vld [vmem:[%s1 + $0xad0] sm:$0xff]
  %v389 = vld [vmem:[%s1 + $0xad8] sm:$0xff]
  %v390 = vld [vmem:[%s1 + $0xae0] sm:$0xff]
  %v391 = vld [vmem:[%s1 + $0xae8] sm:$0xff]
  %v392 = vld [vmem:[%s1 + $0xaf0] sm:$0xff]
  %v393 = vld [vmem:[%s1 + $0xaf8] sm:$0xff]
  %v394 = vld [vmem:[%s1 + $0xb00] sm:$0xff]
  %v395 = vld [vmem:[%s1 + $0xb08] sm:$0xff]
  %v396 = vld [vmem:[%s1 + $0xb10] sm:$0xff]
  %v397 = vld [vmem:[%s1 + $0xb18] sm:$0xff]
  %v398 = vld [vmem:[%s1 + $0xb20] sm:$0xff]
  %v399 = vld [vmem:[%s1 + $0xb28] sm:$0xff]
  %v400 = vld [vmem:[%s1 + $0xb30] sm:$0xff]
  %v401 = vld [vmem:[%s1 + $0xb38] sm:$0xff]
  %v402 = vld [vmem:[%s1 + $0xb40] sm:$0xff]
  %v403 = vld [vmem:[%s1 + $0xb48] sm:$0xff]
  %v404 = vld [vmem:[%s1 + $0xb50] sm:$0xff]
  %v405 = vld [vmem:[%s1 + $0xb58] sm:$0xff]
  %v406 = vld [vmem:[%s1 + $0xb60] sm:$0xff]
  %v407 = vld [vmem:[%s1 + $0xb68] sm:$0xff]
  %v408 = vld [vmem:[%s1 + $0xb70] sm:$0xff]
  %v409 = vld [vmem:[%s1 + $0xb78] sm:$0xff]
  %v410 = vld [vmem:[%s1 + $0xb80] sm:$0xff]
  %v411 = vld [vmem:[%s1 + $0xb88] sm:$0xff]
  %v412 = vld [vmem:[%s1 + $0xb90] sm:$0xff]
  %v413 = vld [vmem:[%s1 + $0xb98] sm:$0xff]
  %v414 = vld [vmem:[%s1 + $0xba0] sm:$0xff]
  %v415 = vld [vmem:[%s1 + $0xba8] sm:$0xff]
  %v416 = vld [vmem:[%s1 + $0xbb0] sm:$0xff]
  %v417 = vld [vmem:[%s1 + $0xbb8] sm:$0xff]
  %v418 = vld [vmem:[%s1 + $0xbc0] sm:$0xff]
  %v419 = vld [vmem:[%s1 + $0xbc8] sm:$0xff]
  %v420 = vld [vmem:[%s1 + $0xbd0] sm:$0xff]
  %v421 = vld [vmem:[%s1 + $0xbd8] sm:$0xff]
  %v422 = vld [vmem:[%s1 + $0xbe0] sm:$0xff]
  %v423 = vld [vmem:[%s1 + $0xbe8] sm:$0xff]
  %v424 = vld [vmem:[%s1 + $0xbf0] sm:$0xff]
  %v425 = vld [vmem:[%s1 + $0xbf8] sm:$0xff]
  %v426 = vld [vmem:[%s1 + $0xc00] sm:$0xff]
  %v427 = vld [vmem:[%s1 + $0xc08] sm:$0xff]
  %v428 = vld [vmem:[%s1 + $0xc10] sm:$0xff]
  %v429 = vld [vmem:[%s1 + $0xc18] sm:$0xff]
  %v430 = vld [vmem:[%s1 + $0xc20] sm:$0xff]
  %v431 = vld [vmem:[%s1 + $0xc28] sm:$0xff]
  %v432 = vld [vmem:[%s1 + $0xc30] sm:$0xff]
  %v433 = vld [vmem:[%s1 + $0xc38] sm:$0xff]
  %v434 = vld [vmem:[%s1 + $0xc40] sm:$0xff]
  %v435 = vld [vmem:[%s1 + $0xc48] sm:$0xff]
  %v436 = vld [vmem:[%s1 + $0xc50] sm:$0xff]
  %v437 = vld [vmem:[%s1 + $0xc58] sm:$0xff]
  %v438 = vld [vmem:[%s1 + $0xc60] sm:$0xff]
  %v439 = vld [vmem:[%s1 + $0xc68] sm:$0xff]
  %v440 = vld [vmem:[%s1 + $0xc70] sm:$0xff]
  %v441 = vld [vmem:[%s1 + $0xc78] sm:$0xff]
  %v442 = vld [vmem:[%s1 + $0xc80] sm:$0xff]
  %v443 = vld [vmem:[%s1 + $0xc88] sm:$0xff]
  %v444 = vld [vmem:[%s1 + $0xc90] sm:$0xff]
  %v445 = vld [vmem:[%s1 + $0xc98] sm:$0xff]
  %v446 = vld [vmem:[%s1 + $0xca0] sm:$0xff]
  %v447 = vld [vmem:[%s1 + $0xca8] sm:$0xff]
  %v448 = vld [vmem:[%s1 + $0xcb0] sm:$0xff]
  %v449 = vld [vmem:[%s1 + $0xcb8] sm:$0xff]
  %v450 = vld [vmem:[%s1 + $0xcc0] sm:$0xff]
  %v451 = vld [vmem:[%s1 + $0xcc8] sm:$0xff]
  %v452 = vld [vmem:[%s1 + $0xcd0] sm:$0xff]
  %v453 = vld [vmem:[%s1 + $0xcd8] sm:$0xff]
  %v454 = vld [vmem:[%s1 + $0xce0] sm:$0xff]
  %v455 = vld [vmem:[%s1 + $0xce8] sm:$0xff]
  %v456 = vld [vmem:[%s1 + $0xcf0] sm:$0xff]
  %v457 = vld [vmem:[%s1 + $0xcf8] sm:$0xff]
  %v458 = vld [vmem:[%s1 + $0xd00] sm:$0xff]
  %v459 = vld [vmem:[%s1 + $0xd08] sm:$0xff]
  %v460 = vld [vmem:[%s1 + $0xd10] sm:$0xff]
  %v461 = vld [vmem:[%s1 + $0xd18] sm:$0xff]
  %v462 = vld [vmem:[%s1 + $0xd20] sm:$0xff]
  %v463 = vld [vmem:[%s1 + $0xd28] sm:$0xff]
  %v464 = vld [vmem:[%s1 + $0xd30] sm:$0xff]
  %v465 = vld [vmem:[%s1 + $0xd38] sm:$0xff]
  %v466 = vld [vmem:[%s1 + $0xd40] sm:$0xff]
  %v467 = vld [vmem:[%s1 + $0xd48] sm:$0xff]
  %v468 = vld [vmem:[%s1 + $0xd50] sm:$0xff]
  %v469 = vld [vmem:[%s1 + $0xd58] sm:$0xff]
  %v470 = vld [vmem:[%s1 + $0xd60] sm:$0xff]
  %v471 = vld [vmem:[%s1 + $0xd68] sm:$0xff]
  %v472 = vld [vmem:[%s1 + $0xd70] sm:$0xff]
  %v473 = vld [vmem:[%s1 + $0xd78] sm:$0xff]
  %v474 = vld [vmem:[%s1 + $0xd80] sm:$0xff]
  %v475 = vld [vmem:[%s1 + $0xd88] sm:$0xff]
  %v476 = vld [vmem:[%s1 + $0xd90] sm:$0xff]
  %v477 = vld [vmem:[%s1 + $0xd98] sm:$0xff]
  %v478 = vld [vmem:[%s1 + $0xda0] sm:$0xff]
  %v479 = vld [vmem:[%s1 + $0xda8] sm:$0xff]
  %v480 = vld [vmem:[%s1 + $0xdb0] sm:$0xff]
  %v481 = vld [vmem:[%s1 + $0xdb8] sm:$0xff]
  %v482 = vld [vmem:[%s1 + $0xdc0] sm:$0xff]
  %v483 = vld [vmem:[%s1 + $0xdc8] sm:$0xff]
  %v484 = vld [vmem:[%s1 + $0xdd0] sm:$0xff]
  %v485 = vld [vmem:[%s1 + $0xdd8] sm:$0xff]
  %v486 = vld [vmem:[%s1 + $0xde0] sm:$0xff]
  %v487 = vld [vmem:[%s1 + $0xde8] sm:$0xff]
  %v488 = vld [vmem:[%s1 + $0xdf0] sm:$0xff]
  %v489 = vld [vmem:[%s1 + $0xdf8] sm:$0xff]
  %v490 = vld [vmem:[%s2] sm:$0x1]
  %v492 = vlaneseq
  %v493 = vshrl.u32 %v492, 7
  %v494 = vsub.s32 0, %v493
  %v495 = vrot.slane %v490, %v494
  %497 = vmatprep.subr.mxu0 0.0
  %498 = vmatpush1.msra.mxu0 %v42
  %499 = vmatprep.subr.mxu0 0.0
  %500 = vmatpush1.msra.mxu0 %v43
  %501 = vmatprep.subr.mxu0 0.0
  %502 = vmatpush1.msra.mxu0 %v44
  %503 = vmatprep.subr.mxu0 0.0
  %504 = vmatpush1.msra.mxu0 %v45
  %505 = vmatprep.subr.mxu0 0.0
  %506 = vmatpush1.msra.mxu0 %v46
  %507 = vmatprep.subr.mxu0 0.0
  %508 = vmatpush1.msra.mxu0 %v47
  %509 = vmatprep.subr.mxu0 0.0
  %510 = vmatpush1.msra.mxu0 %v48
  %511 = vmatprep.subr.mxu0 0.0
  %512 = vmatpush1.msra.mxu0 %v49
  %513 = vmatprep.subr.mxu0 0.0
  %514 = vmatpush1.msra.mxu0 %v50
  %515 = vmatprep.subr.mxu0 0.0
  %516 = vmatpush1.msra.mxu0 %v51
  %517 = vmatprep.subr.mxu0 0.0
  %518 = vmatpush1.msra.mxu0 %v52
  %519 = vmatprep.subr.mxu0 0.0
  %520 = vmatpush1.msra.mxu0 %v53
  %521 = vmatprep.subr.mxu0 0.0
  %522 = vmatpush1.msra.mxu0 %v54
  %523 = vmatprep.subr.mxu0 0.0
  %524 = vmatpush1.msra.mxu0 %v55
  %525 = vmatprep.subr.mxu0 0.0
  %526 = vmatpush1.msra.mxu0 %v56
  %527 = vmatprep.subr.mxu0 0.0
  %528 = vmatpush1.msra.mxu0 %v57
  %529 = vmatprep.subr.mxu0 0.0
  %530 = vmatpush1.msra.mxu0 %v58
  %531 = vmatprep.subr.mxu0 0.0
  %532 = vmatpush1.msra.mxu0 %v59
  %533 = vmatprep.subr.mxu0 0.0
  %534 = vmatpush1.msra.mxu0 %v60
  %535 = vmatprep.subr.mxu0 0.0
  %536 = vmatpush1.msra.mxu0 %v61
  %537 = vmatprep.subr.mxu0 0.0
  %538 = vmatpush1.msra.mxu0 %v62
  %539 = vmatprep.subr.mxu0 0.0
  %540 = vmatpush1.msra.mxu0 %v63
  %541 = vmatprep.subr.mxu0 0.0
  %542 = vmatpush1.msra.mxu0 %v64
  %543 = vmatprep.subr.mxu0 0.0
  %544 = vmatpush1.msra.mxu0 %v65
  %545 = vmatprep.subr.mxu0 0.0
  %546 = vmatpush1.msra.mxu0 %v66
  %547 = vmatprep.subr.mxu0 0.0
  %548 = vmatpush1.msra.mxu0 %v67
  %549 = vmatprep.subr.mxu0 0.0
  %550 = vmatpush1.msra.mxu0 %v68
  %551 = vmatprep.subr.mxu0 0.0
  %552 = vmatpush1.msra.mxu0 %v69
  %553 = vmatprep.subr.mxu0 0.0
  %554 = vmatpush1.msra.mxu0 %v70
  %555 = vmatprep.subr.mxu0 0.0
  %556 = vmatpush1.msra.mxu0 %v71
  %557 = vmatprep.subr.mxu0 0.0
  %558 = vmatpush1.msra.mxu0 %v72
  %559 = vmatprep.subr.mxu0 0.0
  %560 = vmatpush1.msra.mxu0 %v73
  %561 = vmatprep.mubr.f32.mxu0 %v15
  %562 = vmatmul.mubr.f32.gmra.mrb[0].mxu0 %v14
  %v563 = vpop.f32.mrb[0].mxu0
  %v564 = vadd.f32 %v495, %v563
  %v565 = vpop.f32.mrb[0].mxu0
  %566 = vdwg.mxu0
  %567 = vmatprep.subr.mxu0 0.0
  %568 = vmatpush1.msra.mxu0 %v74
  %569 = vmatprep.subr.mxu0 0.0
  %570 = vmatpush1.msra.mxu0 %v75
  %571 = vmatprep.subr.mxu0 0.0
  %572 = vmatpush1.msra.mxu0 %v76
  %573 = vmatprep.subr.mxu0 0.0
  %574 = vmatpush1.msra.mxu0 %v77
  %575 = vmatprep.subr.mxu0 0.0
  %576 = vmatpush1.msra.mxu0 %v78
  %577 = vmatprep.subr.mxu0 0.0
  %578 = vmatpush1.msra.mxu0 %v79
  %579 = vmatprep.subr.mxu0 0.0
  %580 = vmatpush1.msra.mxu0 %v80
  %581 = vmatprep.subr.mxu0 0.0
  %582 = vmatpush1.msra.mxu0 %v81
  %583 = vmatprep.subr.mxu0 0.0
  %584 = vmatpush1.msra.mxu0 %v82
  %585 = vmatprep.subr.mxu0 0.0
  %586 = vmatpush1.msra.mxu0 %v83
  %587 = vmatprep.subr.mxu0 0.0
  %588 = vmatpush1.msra.mxu0 %v84
  %589 = vmatprep.subr.mxu0 0.0
  %590 = vmatpush1.msra.mxu0 %v85
  %591 = vmatprep.subr.mxu0 0.0
  %592 = vmatpush1.msra.mxu0 %v86
  %593 = vmatprep.subr.mxu0 0.0
  %594 = vmatpush1.msra.mxu0 %v87
  %595 = vmatprep.subr.mxu0 0.0
  %596 = vmatpush1.msra.mxu0 %v88
  %597 = vmatprep.subr.mxu0 0.0
  %598 = vmatpush1.msra.mxu0 %v89
  %599 = vmatprep.subr.mxu0 0.0
  %600 = vmatpush1.msra.mxu0 %v90
  %601 = vmatprep.subr.mxu0 0.0
  %602 = vmatpush1.msra.mxu0 %v91
  %603 = vmatprep.subr.mxu0 0.0
  %604 = vmatpush1.msra.mxu0 %v92
  %605 = vmatprep.subr.mxu0 0.0
  %606 = vmatpush1.msra.mxu0 %v93
  %607 = vmatprep.subr.mxu0 0.0
  %608 = vmatpush1.msra.mxu0 %v94
  %609 = vmatprep.subr.mxu0 0.0
  %610 = vmatpush1.msra.mxu0 %v95
  %611 = vmatprep.subr.mxu0 0.0
  %612 = vmatpush1.msra.mxu0 %v96
  %613 = vmatprep.subr.mxu0 0.0
  %614 = vmatpush1.msra.mxu0 %v97
  %615 = vmatprep.subr.mxu0 0.0
  %616 = vmatpush1.msra.mxu0 %v98
  %617 = vmatprep.subr.mxu0 0.0
  %618 = vmatpush1.msra.mxu0 %v99
  %619 = vmatprep.subr.mxu0 0.0
  %620 = vmatpush1.msra.mxu0 %v100
  %621 = vmatprep.subr.mxu0 0.0
  %622 = vmatpush1.msra.mxu0 %v101
  %623 = vmatprep.subr.mxu0 0.0
  %624 = vmatpush1.msra.mxu0 %v102
  %625 = vmatprep.subr.mxu0 0.0
  %626 = vmatpush1.msra.mxu0 %v103
  %627 = vmatprep.subr.mxu0 0.0
  %628 = vmatpush1.msra.mxu0 %v104
  %629 = vmatprep.subr.mxu0 0.0
  %630 = vmatpush1.msra.mxu0 %v105
  %631 = vmatprep.mubr.f32.mxu0 %v17
  %632 = vmatmul.mubr.f32.gmra.mrb[0].mxu0 %v16
  %v633 = vpop.f32.mrb[0].mxu0
  %v634 = vadd.f32 %v564, %v633
  %v635 = vpop.f32.mrb[0].mxu0
  %636 = vdwg.mxu0
  %637 = vmatprep.subr.mxu0 0.0
  %638 = vmatpush1.msra.mxu0 %v106
  %639 = vmatprep.subr.mxu0 0.0
  %640 = vmatpush1.msra.mxu0 %v107
  %641 = vmatprep.subr.mxu0 0.0
  %642 = vmatpush1.msra.mxu0 %v108
  %643 = vmatprep.subr.mxu0 0.0
  %644 = vmatpush1.msra.mxu0 %v109
  %645 = vmatprep.subr.mxu0 0.0
  %646 = vmatpush1.msra.mxu0 %v110
  %647 = vmatprep.subr.mxu0 0.0
  %648 = vmatpush1.msra.mxu0 %v111
  %649 = vmatprep.subr.mxu0 0.0
  %650 = vmatpush1.msra.mxu0 %v112
  %651 = vmatprep.subr.mxu0 0.0
  %652 = vmatpush1.msra.mxu0 %v113
  %653 = vmatprep.subr.mxu0 0.0
  %654 = vmatpush1.msra.mxu0 %v114
  %655 = vmatprep.subr.mxu0 0.0
  %656 = vmatpush1.msra.mxu0 %v115
  %657 = vmatprep.subr.mxu0 0.0
  %658 = vmatpush1.msra.mxu0 %v116
  %659 = vmatprep.subr.mxu0 0.0
  %660 = vmatpush1.msra.mxu0 %v117
  %661 = vmatprep.subr.mxu0 0.0
  %662 = vmatpush1.msra.mxu0 %v118
  %663 = vmatprep.subr.mxu0 0.0
  %664 = vmatpush1.msra.mxu0 %v119
  %665 = vmatprep.subr.mxu0 0.0
  %666 = vmatpush1.msra.mxu0 %v120
  %667 = vmatprep.subr.mxu0 0.0
  %668 = vmatpush1.msra.mxu0 %v121
  %669 = vmatprep.subr.mxu0 0.0
  %670 = vmatpush1.msra.mxu0 %v122
  %671 = vmatprep.subr.mxu0 0.0
  %672 = vmatpush1.msra.mxu0 %v123
  %673 = vmatprep.subr.mxu0 0.0
  %674 = vmatpush1.msra.mxu0 %v124
  %675 = vmatprep.subr.mxu0 0.0
  %676 = vmatpush1.msra.mxu0 %v125
  %677 = vmatprep.subr.mxu0 0.0
  %678 = vmatpush1.msra.mxu0 %v126
  %679 = vmatprep.subr.mxu0 0.0
  %680 = vmatpush1.msra.mxu0 %v127
  %681 = vmatprep.subr.mxu0 0.0
  %682 = vmatpush1.msra.mxu0 %v128
  %683 = vmatprep.subr.mxu0 0.0
  %684 = vmatpush1.msra.mxu0 %v129
  %685 = vmatprep.subr.mxu0 0.0
  %686 = vmatpush1.msra.mxu0 %v130
  %687 = vmatprep.subr.mxu0 0.0
  %688 = vmatpush1.msra.mxu0 %v131
  %689 = vmatprep.subr.mxu0 0.0
  %690 = vmatpush1.msra.mxu0 %v132
  %691 = vmatprep.subr.mxu0 0.0
  %692 = vmatpush1.msra.mxu0 %v133
  %693 = vmatprep.subr.mxu0 0.0
  %694 = vmatpush1.msra.mxu0 %v134
  %695 = vmatprep.subr.mxu0 0.0
  %696 = vmatpush1.msra.mxu0 %v135
  %697 = vmatprep.subr.mxu0 0.0
  %698 = vmatpush1.msra.mxu0 %v136
  %699 = vmatprep.subr.mxu0 0.0
  %700 = vmatpush1.msra.mxu0 %v137
  %701 = vmatprep.mubr.f32.mxu0 %v19
  %702 = vmatmul.mubr.f32.gmra.mrb[0].mxu0 %v18
  %v703 = vpop.f32.mrb[0].mxu0
  %v704 = vadd.f32 %v634, %v703
  %v705 = vpop.f32.mrb[0].mxu0
  %706 = vdwg.mxu0
  %707 = vmatprep.subr.mxu0 0.0
  %708 = vmatpush1.msra.mxu0 %v138
  %709 = vmatprep.subr.mxu0 0.0
  %710 = vmatpush1.msra.mxu0 %v139
  %711 = vmatprep.subr.mxu0 0.0
  %712 = vmatpush1.msra.mxu0 %v140
  %713 = vmatprep.subr.mxu0 0.0
  %714 = vmatpush1.msra.mxu0 %v141
  %715 = vmatprep.subr.mxu0 0.0
  %716 = vmatpush1.msra.mxu0 %v142
  %717 = vmatprep.subr.mxu0 0.0
  %718 = vmatpush1.msra.mxu0 %v143
  %719 = vmatprep.subr.mxu0 0.0
  %720 = vmatpush1.msra.mxu0 %v144
  %721 = vmatprep.subr.mxu0 0.0
  %722 = vmatpush1.msra.mxu0 %v145
  %723 = vmatprep.subr.mxu0 0.0
  %724 = vmatpush1.msra.mxu0 %v146
  %725 = vmatprep.subr.mxu0 0.0
  %726 = vmatpush1.msra.mxu0 %v147
  %727 = vmatprep.subr.mxu0 0.0
  %728 = vmatpush1.msra.mxu0 %v148
  %729 = vmatprep.subr.mxu0 0.0
  %730 = vmatpush1.msra.mxu0 %v149
  %731 = vmatprep.subr.mxu0 0.0
  %732 = vmatpush1.msra.mxu0 %v150
  %733 = vmatprep.subr.mxu0 0.0
  %734 = vmatpush1.msra.mxu0 %v151
  %735 = vmatprep.subr.mxu0 0.0
  %736 = vmatpush1.msra.mxu0 %v152
  %737 = vmatprep.subr.mxu0 0.0
  %738 = vmatpush1.msra.mxu0 %v153
  %739 = vmatprep.subr.mxu0 0.0
  %740 = vmatpush1.msra.mxu0 %v154
  %741 = vmatprep.subr.mxu0 0.0
  %742 = vmatpush1.msra.mxu0 %v155
  %743 = vmatprep.subr.mxu0 0.0
  %744 = vmatpush1.msra.mxu0 %v156
  %745 = vmatprep.subr.mxu0 0.0
  %746 = vmatpush1.msra.mxu0 %v157
  %747 = vmatprep.subr.mxu0 0.0
  %748 = vmatpush1.msra.mxu0 %v158
  %749 = vmatprep.subr.mxu0 0.0
  %750 = vmatpush1.msra.mxu0 %v159
  %751 = vmatprep.subr.mxu0 0.0
  %752 = vmatpush1.msra.mxu0 %v160
  %753 = vmatprep.subr.mxu0 0.0
  %754 = vmatpush1.msra.mxu0 %v161
  %755 = vmatprep.subr.mxu0 0.0
  %756 = vmatpush1.msra.mxu0 %v162
  %757 = vmatprep.subr.mxu0 0.0
  %758 = vmatpush1.msra.mxu0 %v163
  %759 = vmatprep.subr.mxu0 0.0
  %760 = vmatpush1.msra.mxu0 %v164
  %761 = vmatprep.subr.mxu0 0.0
  %762 = vmatpush1.msra.mxu0 %v165
  %763 = vmatprep.subr.mxu0 0.0
  %764 = vmatpush1.msra.mxu0 %v166
  %765 = vmatprep.subr.mxu0 0.0
  %766 = vmatpush1.msra.mxu0 %v167
  %767 = vmatprep.subr.mxu0 0.0
  %768 = vmatpush1.msra.mxu0 %v168
  %769 = vmatprep.subr.mxu0 0.0
  %770 = vmatpush1.msra.mxu0 %v169
  %771 = vmatprep.mubr.f32.mxu0 %v21
  %772 = vmatmul.mubr.f32.gmra.mrb[0].mxu0 %v20
  %v773 = vpop.f32.mrb[0].mxu0
  %v774 = vadd.f32 %v704, %v773
  %v775 = vpop.f32.mrb[0].mxu0
  %776 = vdwg.mxu0
  %777 = vmatprep.subr.mxu0 0.0
  %778 = vmatpush1.msra.mxu0 %v170
  %779 = vmatprep.subr.mxu0 0.0
  %780 = vmatpush1.msra.mxu0 %v171
  %781 = vmatprep.subr.mxu0 0.0
  %782 = vmatpush1.msra.mxu0 %v172
  %783 = vmatprep.subr.mxu0 0.0
  %784 = vmatpush1.msra.mxu0 %v173
  %785 = vmatprep.subr.mxu0 0.0
  %786 = vmatpush1.msra.mxu0 %v174
  %787 = vmatprep.subr.mxu0 0.0
  %788 = vmatpush1.msra.mxu0 %v175
  %789 = vmatprep.subr.mxu0 0.0
  %790 = vmatpush1.msra.mxu0 %v176
  %791 = vmatprep.subr.mxu0 0.0
  %792 = vmatpush1.msra.mxu0 %v177
  %793 = vmatprep.subr.mxu0 0.0
  %794 = vmatpush1.msra.mxu0 %v178
  %795 = vmatprep.subr.mxu0 0.0
  %796 = vmatpush1.msra.mxu0 %v179
  %797 = vmatprep.subr.mxu0 0.0
  %798 = vmatpush1.msra.mxu0 %v180
  %799 = vmatprep.subr.mxu0 0.0
  %800 = vmatpush1.msra.mxu0 %v181
  %801 = vmatprep.subr.mxu0 0.0
  %802 = vmatpush1.msra.mxu0 %v182
  %803 = vmatprep.subr.mxu0 0.0
  %804 = vmatpush1.msra.mxu0 %v183
  %805 = vmatprep.subr.mxu0 0.0
  %806 = vmatpush1.msra.mxu0 %v184
  %807 = vmatprep.subr.mxu0 0.0
  %808 = vmatpush1.msra.mxu0 %v185
  %809 = vmatprep.subr.mxu0 0.0
  %810 = vmatpush1.msra.mxu0 %v186
  %811 = vmatprep.subr.mxu0 0.0
  %812 = vmatpush1.msra.mxu0 %v187
  %813 = vmatprep.subr.mxu0 0.0
  %814 = vmatpush1.msra.mxu0 %v188
  %815 = vmatprep.subr.mxu0 0.0
  %816 = vmatpush1.msra.mxu0 %v189
  %817 = vmatprep.subr.mxu0 0.0
  %818 = vmatpush1.msra.mxu0 %v190
  %819 = vmatprep.subr.mxu0 0.0
  %820 = vmatpush1.msra.mxu0 %v191
  %821 = vmatprep.subr.mxu0 0.0
  %822 = vmatpush1.msra.mxu0 %v192
  %823 = vmatprep.subr.mxu0 0.0
  %824 = vmatpush1.msra.mxu0 %v193
  %825 = vmatprep.subr.mxu0 0.0
  %826 = vmatpush1.msra.mxu0 %v194
  %827 = vmatprep.subr.mxu0 0.0
  %828 = vmatpush1.msra.mxu0 %v195
  %829 = vmatprep.subr.mxu0 0.0
  %830 = vmatpush1.msra.mxu0 %v196
  %831 = vmatprep.subr.mxu0 0.0
  %832 = vmatpush1.msra.mxu0 %v197
  %833 = vmatprep.subr.mxu0 0.0
  %834 = vmatpush1.msra.mxu0 %v198
  %835 = vmatprep.subr.mxu0 0.0
  %836 = vmatpush1.msra.mxu0 %v199
  %837 = vmatprep.subr.mxu0 0.0
  %838 = vmatpush1.msra.mxu0 %v200
  %839 = vmatprep.subr.mxu0 0.0
  %840 = vmatpush1.msra.mxu0 %v201
  %841 = vmatprep.mubr.f32.mxu0 %v23
  %842 = vmatmul.mubr.f32.gmra.mrb[0].mxu0 %v22
  %v843 = vpop.f32.mrb[0].mxu0
  %v844 = vadd.f32 %v774, %v843
  %v845 = vpop.f32.mrb[0].mxu0
  %846 = vdwg.mxu0
  %847 = vmatprep.subr.mxu0 0.0
  %848 = vmatpush1.msra.mxu0 %v202
  %849 = vmatprep.subr.mxu0 0.0
  %850 = vmatpush1.msra.mxu0 %v203
  %851 = vmatprep.subr.mxu0 0.0
  %852 = vmatpush1.msra.mxu0 %v204
  %853 = vmatprep.subr.mxu0 0.0
  %854 = vmatpush1.msra.mxu0 %v205
  %855 = vmatprep.subr.mxu0 0.0
  %856 = vmatpush1.msra.mxu0 %v206
  %857 = vmatprep.subr.mxu0 0.0
  %858 = vmatpush1.msra.mxu0 %v207
  %859 = vmatprep.subr.mxu0 0.0
  %860 = vmatpush1.msra.mxu0 %v208
  %861 = vmatprep.subr.mxu0 0.0
  %862 = vmatpush1.msra.mxu0 %v209
  %863 = vmatprep.subr.mxu0 0.0
  %864 = vmatpush1.msra.mxu0 %v210
  %865 = vmatprep.subr.mxu0 0.0
  %866 = vmatpush1.msra.mxu0 %v211
  %867 = vmatprep.subr.mxu0 0.0
  %868 = vmatpush1.msra.mxu0 %v212
  %869 = vmatprep.subr.mxu0 0.0
  %870 = vmatpush1.msra.mxu0 %v213
  %871 = vmatprep.subr.mxu0 0.0
  %872 = vmatpush1.msra.mxu0 %v214
  %873 = vmatprep.subr.mxu0 0.0
  %874 = vmatpush1.msra.mxu0 %v215
  %875 = vmatprep.subr.mxu0 0.0
  %876 = vmatpush1.msra.mxu0 %v216
  %877 = vmatprep.subr.mxu0 0.0
  %878 = vmatpush1.msra.mxu0 %v217
  %879 = vmatprep.subr.mxu0 0.0
  %880 = vmatpush1.msra.mxu0 %v218
  %881 = vmatprep.subr.mxu0 0.0
  %882 = vmatpush1.msra.mxu0 %v219
  %883 = vmatprep.subr.mxu0 0.0
  %884 = vmatpush1.msra.mxu0 %v220
  %885 = vmatprep.subr.mxu0 0.0
  %886 = vmatpush1.msra.mxu0 %v221
  %887 = vmatprep.subr.mxu0 0.0
  %888 = vmatpush1.msra.mxu0 %v222
  %889 = vmatprep.subr.mxu0 0.0
  %890 = vmatpush1.msra.mxu0 %v223
  %891 = vmatprep.subr.mxu0 0.0
  %892 = vmatpush1.msra.mxu0 %v224
  %893 = vmatprep.subr.mxu0 0.0
  %894 = vmatpush1.msra.mxu0 %v225
  %895 = vmatprep.subr.mxu0 0.0
  %896 = vmatpush1.msra.mxu0 %v226
  %897 = vmatprep.subr.mxu0 0.0
  %898 = vmatpush1.msra.mxu0 %v227
  %899 = vmatprep.subr.mxu0 0.0
  %900 = vmatpush1.msra.mxu0 %v228
  %901 = vmatprep.subr.mxu0 0.0
  %902 = vmatpush1.msra.mxu0 %v229
  %903 = vmatprep.subr.mxu0 0.0
  %904 = vmatpush1.msra.mxu0 %v230
  %905 = vmatprep.subr.mxu0 0.0
  %906 = vmatpush1.msra.mxu0 %v231
  %907 = vmatprep.subr.mxu0 0.0
  %908 = vmatpush1.msra.mxu0 %v232
  %909 = vmatprep.subr.mxu0 0.0
  %910 = vmatpush1.msra.mxu0 %v233
  %911 = vmatprep.mubr.f32.mxu0 %v25
  %912 = vmatmul.mubr.f32.gmra.mrb[0].mxu0 %v24
  %v913 = vpop.f32.mrb[0].mxu0
  %v914 = vadd.f32 %v844, %v913
  %v915 = vpop.f32.mrb[0].mxu0
  %916 = vdwg.mxu0
  %917 = vmatprep.subr.mxu0 0.0
  %918 = vmatpush1.msra.mxu0 %v234
  %919 = vmatprep.subr.mxu0 0.0
  %920 = vmatpush1.msra.mxu0 %v235
  %921 = vmatprep.subr.mxu0 0.0
  %922 = vmatpush1.msra.mxu0 %v236
  %923 = vmatprep.subr.mxu0 0.0
  %924 = vmatpush1.msra.mxu0 %v237
  %925 = vmatprep.subr.mxu0 0.0
  %926 = vmatpush1.msra.mxu0 %v238
  %927 = vmatprep.subr.mxu0 0.0
  %928 = vmatpush1.msra.mxu0 %v239
  %929 = vmatprep.subr.mxu0 0.0
  %930 = vmatpush1.msra.mxu0 %v240
  %931 = vmatprep.subr.mxu0 0.0
  %932 = vmatpush1.msra.mxu0 %v241
  %933 = vmatprep.subr.mxu0 0.0
  %934 = vmatpush1.msra.mxu0 %v242
  %935 = vmatprep.subr.mxu0 0.0
  %936 = vmatpush1.msra.mxu0 %v243
  %937 = vmatprep.subr.mxu0 0.0
  %938 = vmatpush1.msra.mxu0 %v244
  %939 = vmatprep.subr.mxu0 0.0
  %940 = vmatpush1.msra.mxu0 %v245
  %941 = vmatprep.subr.mxu0 0.0
  %942 = vmatpush1.msra.mxu0 %v246
  %943 = vmatprep.subr.mxu0 0.0
  %944 = vmatpush1.msra.mxu0 %v247
  %945 = vmatprep.subr.mxu0 0.0
  %946 = vmatpush1.msra.mxu0 %v248
  %947 = vmatprep.subr.mxu0 0.0
  %948 = vmatpush1.msra.mxu0 %v249
  %949 = vmatprep.subr.mxu0 0.0
  %950 = vmatpush1.msra.mxu0 %v250
  %951 = vmatprep.subr.mxu0 0.0
  %952 = vmatpush1.msra.mxu0 %v251
  %953 = vmatprep.subr.mxu0 0.0
  %954 = vmatpush1.msra.mxu0 %v252
  %955 = vmatprep.subr.mxu0 0.0
  %956 = vmatpush1.msra.mxu0 %v253
  %957 = vmatprep.subr.mxu0 0.0
  %958 = vmatpush1.msra.mxu0 %v254
  %959 = vmatprep.subr.mxu0 0.0
  %960 = vmatpush1.msra.mxu0 %v255
  %961 = vmatprep.subr.mxu0 0.0
  %962 = vmatpush1.msra.mxu0 %v256
  %963 = vmatprep.subr.mxu0 0.0
  %964 = vmatpush1.msra.mxu0 %v257
  %965 = vmatprep.subr.mxu0 0.0
  %966 = vmatpush1.msra.mxu0 %v258
  %967 = vmatprep.subr.mxu0 0.0
  %968 = vmatpush1.msra.mxu0 %v259
  %969 = vmatprep.subr.mxu0 0.0
  %970 = vmatpush1.msra.mxu0 %v260
  %971 = vmatprep.subr.mxu0 0.0
  %972 = vmatpush1.msra.mxu0 %v261
  %973 = vmatprep.subr.mxu0 0.0
  %974 = vmatpush1.msra.mxu0 %v262
  %975 = vmatprep.subr.mxu0 0.0
  %976 = vmatpush1.msra.mxu0 %v263
  %977 = vmatprep.subr.mxu0 0.0
  %978 = vmatpush1.msra.mxu0 %v264
  %979 = vmatprep.subr.mxu0 0.0
  %980 = vmatpush1.msra.mxu0 %v265
  %981 = vmatprep.mubr.f32.mxu0 %v27
  %982 = vmatmul.mubr.f32.gmra.mrb[0].mxu0 %v26
  %v983 = vpop.f32.mrb[0].mxu0
  %v984 = vadd.f32 %v914, %v983
  %v985 = vpop.f32.mrb[0].mxu0
  %986 = vdwg.mxu0
  %987 = vmatprep.subr.mxu0 0.0
  %988 = vmatpush1.msra.mxu0 %v266
  %989 = vmatprep.subr.mxu0 0.0
  %990 = vmatpush1.msra.mxu0 %v267
  %991 = vmatprep.subr.mxu0 0.0
  %992 = vmatpush1.msra.mxu0 %v268
  %993 = vmatprep.subr.mxu0 0.0
  %994 = vmatpush1.msra.mxu0 %v269
  %995 = vmatprep.subr.mxu0 0.0
  %996 = vmatpush1.msra.mxu0 %v270
  %997 = vmatprep.subr.mxu0 0.0
  %998 = vmatpush1.msra.mxu0 %v271
  %999 = vmatprep.subr.mxu0 0.0
  %1000 = vmatpush1.msra.mxu0 %v272
  %1001 = vmatprep.subr.mxu0 0.0
  %1002 = vmatpush1.msra.mxu0 %v273
  %1003 = vmatprep.subr.mxu0 0.0
  %1004 = vmatpush1.msra.mxu0 %v274
  %1005 = vmatprep.subr.mxu0 0.0
  %1006 = vmatpush1.msra.mxu0 %v275
  %1007 = vmatprep.subr.mxu0 0.0
  %1008 = vmatpush1.msra.mxu0 %v276
  %1009 = vmatprep.subr.mxu0 0.0
  %1010 = vmatpush1.msra.mxu0 %v277
  %1011 = vmatprep.subr.mxu0 0.0
  %1012 = vmatpush1.msra.mxu0 %v278
  %1013 = vmatprep.subr.mxu0 0.0
  %1014 = vmatpush1.msra.mxu0 %v279
  %1015 = vmatprep.subr.mxu0 0.0
  %1016 = vmatpush1.msra.mxu0 %v280
  %1017 = vmatprep.subr.mxu0 0.0
  %1018 = vmatpush1.msra.mxu0 %v281
  %1019 = vmatprep.subr.mxu0 0.0
  %1020 = vmatpush1.msra.mxu0 %v282
  %1021 = vmatprep.subr.mxu0 0.0
  %1022 = vmatpush1.msra.mxu0 %v283
  %1023 = vmatprep.subr.mxu0 0.0
  %1024 = vmatpush1.msra.mxu0 %v284
  %1025 = vmatprep.subr.mxu0 0.0
  %1026 = vmatpush1.msra.mxu0 %v285
  %1027 = vmatprep.subr.mxu0 0.0
  %1028 = vmatpush1.msra.mxu0 %v286
  %1029 = vmatprep.subr.mxu0 0.0
  %1030 = vmatpush1.msra.mxu0 %v287
  %1031 = vmatprep.subr.mxu0 0.0
  %1032 = vmatpush1.msra.mxu0 %v288
  %1033 = vmatprep.subr.mxu0 0.0
  %1034 = vmatpush1.msra.mxu0 %v289
  %1035 = vmatprep.subr.mxu0 0.0
  %1036 = vmatpush1.msra.mxu0 %v290
  %1037 = vmatprep.subr.mxu0 0.0
  %1038 = vmatpush1.msra.mxu0 %v291
  %1039 = vmatprep.subr.mxu0 0.0
  %1040 = vmatpush1.msra.mxu0 %v292
  %1041 = vmatprep.subr.mxu0 0.0
  %1042 = vmatpush1.msra.mxu0 %v293
  %1043 = vmatprep.subr.mxu0 0.0
  %1044 = vmatpush1.msra.mxu0 %v294
  %1045 = vmatprep.subr.mxu0 0.0
  %1046 = vmatpush1.msra.mxu0 %v295
  %1047 = vmatprep.subr.mxu0 0.0
  %1048 = vmatpush1.msra.mxu0 %v296
  %1049 = vmatprep.subr.mxu0 0.0
  %1050 = vmatpush1.msra.mxu0 %v297
  %1051 = vmatprep.mubr.f32.mxu0 %v29
  %1052 = vmatmul.mubr.f32.gmra.mrb[0].mxu0 %v28
  %v1053 = vpop.f32.mrb[0].mxu0
  %v1054 = vadd.f32 %v984, %v1053
  %v1055 = vpop.f32.mrb[0].mxu0
  %1056 = vdwg.mxu0
  %1057 = vmatprep.subr.mxu0 0.0
  %1058 = vmatpush1.msra.mxu0 %v298
  %1059 = vmatprep.subr.mxu0 0.0
  %1060 = vmatpush1.msra.mxu0 %v299
  %1061 = vmatprep.subr.mxu0 0.0
  %1062 = vmatpush1.msra.mxu0 %v300
  %1063 = vmatprep.subr.mxu0 0.0
  %1064 = vmatpush1.msra.mxu0 %v301
  %1065 = vmatprep.subr.mxu0 0.0
  %1066 = vmatpush1.msra.mxu0 %v302
  %1067 = vmatprep.subr.mxu0 0.0
  %1068 = vmatpush1.msra.mxu0 %v303
  %1069 = vmatprep.subr.mxu0 0.0
  %1070 = vmatpush1.msra.mxu0 %v304
  %1071 = vmatprep.subr.mxu0 0.0
  %1072 = vmatpush1.msra.mxu0 %v305
  %1073 = vmatprep.subr.mxu0 0.0
  %1074 = vmatpush1.msra.mxu0 %v306
  %1075 = vmatprep.subr.mxu0 0.0
  %1076 = vmatpush1.msra.mxu0 %v307
  %1077 = vmatprep.subr.mxu0 0.0
  %1078 = vmatpush1.msra.mxu0 %v308
  %1079 = vmatprep.subr.mxu0 0.0
  %1080 = vmatpush1.msra.mxu0 %v309
  %1081 = vmatprep.subr.mxu0 0.0
  %1082 = vmatpush1.msra.mxu0 %v310
  %1083 = vmatprep.subr.mxu0 0.0
  %1084 = vmatpush1.msra.mxu0 %v311
  %1085 = vmatprep.subr.mxu0 0.0
  %1086 = vmatpush1.msra.mxu0 %v312
  %1087 = vmatprep.subr.mxu0 0.0
  %1088 = vmatpush1.msra.mxu0 %v313
  %1089 = vmatprep.subr.mxu0 0.0
  %1090 = vmatpush1.msra.mxu0 %v314
  %1091 = vmatprep.subr.mxu0 0.0
  %1092 = vmatpush1.msra.mxu0 %v315
  %1093 = vmatprep.subr.mxu0 0.0
  %1094 = vmatpush1.msra.mxu0 %v316
  %1095 = vmatprep.subr.mxu0 0.0
  %1096 = vmatpush1.msra.mxu0 %v317
  %1097 = vmatprep.subr.mxu0 0.0
  %1098 = vmatpush1.msra.mxu0 %v318
  %1099 = vmatprep.subr.mxu0 0.0
  %1100 = vmatpush1.msra.mxu0 %v319
  %1101 = vmatprep.subr.mxu0 0.0
  %1102 = vmatpush1.msra.mxu0 %v320
  %1103 = vmatprep.subr.mxu0 0.0
  %1104 = vmatpush1.msra.mxu0 %v321
  %1105 = vmatprep.subr.mxu0 0.0
  %1106 = vmatpush1.msra.mxu0 %v322
  %1107 = vmatprep.subr.mxu0 0.0
  %1108 = vmatpush1.msra.mxu0 %v323
  %1109 = vmatprep.subr.mxu0 0.0
  %1110 = vmatpush1.msra.mxu0 %v324
  %1111 = vmatprep.subr.mxu0 0.0
  %1112 = vmatpush1.msra.mxu0 %v325
  %1113 = vmatprep.subr.mxu0 0.0
  %1114 = vmatpush1.msra.mxu0 %v326
  %1115 = vmatprep.subr.mxu0 0.0
  %1116 = vmatpush1.msra.mxu0 %v327
  %1117 = vmatprep.subr.mxu0 0.0
  %1118 = vmatpush1.msra.mxu0 %v328
  %1119 = vmatprep.subr.mxu0 0.0
  %1120 = vmatpush1.msra.mxu0 %v329
  %1121 = vmatprep.mubr.f32.mxu0 %v31
  %1122 = vmatmul.mubr.f32.gmra.mrb[0].mxu0 %v30
  %v1123 = vpop.f32.mrb[0].mxu0
  %v1124 = vadd.f32 %v1054, %v1123
  %v1125 = vpop.f32.mrb[0].mxu0
  %1126 = vdwg.mxu0
  %1127 = vmatprep.subr.mxu0 0.0
  %1128 = vmatpush1.msra.mxu0 %v330
  %1129 = vmatprep.subr.mxu0 0.0
  %1130 = vmatpush1.msra.mxu0 %v331
  %1131 = vmatprep.subr.mxu0 0.0
  %1132 = vmatpush1.msra.mxu0 %v332
  %1133 = vmatprep.subr.mxu0 0.0
  %1134 = vmatpush1.msra.mxu0 %v333
  %1135 = vmatprep.subr.mxu0 0.0
  %1136 = vmatpush1.msra.mxu0 %v334
  %1137 = vmatprep.subr.mxu0 0.0
  %1138 = vmatpush1.msra.mxu0 %v335
  %1139 = vmatprep.subr.mxu0 0.0
  %1140 = vmatpush1.msra.mxu0 %v336
  %1141 = vmatprep.subr.mxu0 0.0
  %1142 = vmatpush1.msra.mxu0 %v337
  %1143 = vmatprep.subr.mxu0 0.0
  %1144 = vmatpush1.msra.mxu0 %v338
  %1145 = vmatprep.subr.mxu0 0.0
  %1146 = vmatpush1.msra.mxu0 %v339
  %1147 = vmatprep.subr.mxu0 0.0
  %1148 = vmatpush1.msra.mxu0 %v340
  %1149 = vmatprep.subr.mxu0 0.0
  %1150 = vmatpush1.msra.mxu0 %v341
  %1151 = vmatprep.subr.mxu0 0.0
  %1152 = vmatpush1.msra.mxu0 %v342
  %1153 = vmatprep.subr.mxu0 0.0
  %1154 = vmatpush1.msra.mxu0 %v343
  %1155 = vmatprep.subr.mxu0 0.0
  %1156 = vmatpush1.msra.mxu0 %v344
  %1157 = vmatprep.subr.mxu0 0.0
  %1158 = vmatpush1.msra.mxu0 %v345
  %1159 = vmatprep.subr.mxu0 0.0
  %1160 = vmatpush1.msra.mxu0 %v346
  %1161 = vmatprep.subr.mxu0 0.0
  %1162 = vmatpush1.msra.mxu0 %v347
  %1163 = vmatprep.subr.mxu0 0.0
  %1164 = vmatpush1.msra.mxu0 %v348
  %1165 = vmatprep.subr.mxu0 0.0
  %1166 = vmatpush1.msra.mxu0 %v349
  %1167 = vmatprep.subr.mxu0 0.0
  %1168 = vmatpush1.msra.mxu0 %v350
  %1169 = vmatprep.subr.mxu0 0.0
  %1170 = vmatpush1.msra.mxu0 %v351
  %1171 = vmatprep.subr.mxu0 0.0
  %1172 = vmatpush1.msra.mxu0 %v352
  %1173 = vmatprep.subr.mxu0 0.0
  %1174 = vmatpush1.msra.mxu0 %v353
  %1175 = vmatprep.subr.mxu0 0.0
  %1176 = vmatpush1.msra.mxu0 %v354
  %1177 = vmatprep.subr.mxu0 0.0
  %1178 = vmatpush1.msra.mxu0 %v355
  %1179 = vmatprep.subr.mxu0 0.0
  %1180 = vmatpush1.msra.mxu0 %v356
  %1181 = vmatprep.subr.mxu0 0.0
  %1182 = vmatpush1.msra.mxu0 %v357
  %1183 = vmatprep.subr.mxu0 0.0
  %1184 = vmatpush1.msra.mxu0 %v358
  %1185 = vmatprep.subr.mxu0 0.0
  %1186 = vmatpush1.msra.mxu0 %v359
  %1187 = vmatprep.subr.mxu0 0.0
  %1188 = vmatpush1.msra.mxu0 %v360
  %1189 = vmatprep.subr.mxu0 0.0
  %1190 = vmatpush1.msra.mxu0 %v361
  %1191 = vmatprep.mubr.f32.mxu0 %v33
  %1192 = vmatmul.mubr.f32.gmra.mrb[0].mxu0 %v32
  %v1193 = vpop.f32.mrb[0].mxu0
  %v1194 = vadd.f32 %v1124, %v1193
  %v1195 = vpop.f32.mrb[0].mxu0
  %1196 = vdwg.mxu0
  %1197 = vmatprep.subr.mxu0 0.0
  %1198 = vmatpush1.msra.mxu0 %v362
  %1199 = vmatprep.subr.mxu0 0.0
  %1200 = vmatpush1.msra.mxu0 %v363
  %1201 = vmatprep.subr.mxu0 0.0
  %1202 = vmatpush1.msra.mxu0 %v364
  %1203 = vmatprep.subr.mxu0 0.0
  %1204 = vmatpush1.msra.mxu0 %v365
  %1205 = vmatprep.subr.mxu0 0.0
  %1206 = vmatpush1.msra.mxu0 %v366
  %1207 = vmatprep.subr.mxu0 0.0
  %1208 = vmatpush1.msra.mxu0 %v367
  %1209 = vmatprep.subr.mxu0 0.0
  %1210 = vmatpush1.msra.mxu0 %v368
  %1211 = vmatprep.subr.mxu0 0.0
  %1212 = vmatpush1.msra.mxu0 %v369
  %1213 = vmatprep.subr.mxu0 0.0
  %1214 = vmatpush1.msra.mxu0 %v370
  %1215 = vmatprep.subr.mxu0 0.0
  %1216 = vmatpush1.msra.mxu0 %v371
  %1217 = vmatprep.subr.mxu0 0.0
  %1218 = vmatpush1.msra.mxu0 %v372
  %1219 = vmatprep.subr.mxu0 0.0
  %1220 = vmatpush1.msra.mxu0 %v373
  %1221 = vmatprep.subr.mxu0 0.0
  %1222 = vmatpush1.msra.mxu0 %v374
  %1223 = vmatprep.subr.mxu0 0.0
  %1224 = vmatpush1.msra.mxu0 %v375
  %1225 = vmatprep.subr.mxu0 0.0
  %1226 = vmatpush1.msra.mxu0 %v376
  %1227 = vmatprep.subr.mxu0 0.0
  %1228 = vmatpush1.msra.mxu0 %v377
  %1229 = vmatprep.subr.mxu0 0.0
  %1230 = vmatpush1.msra.mxu0 %v378
  %1231 = vmatprep.subr.mxu0 0.0
  %1232 = vmatpush1.msra.mxu0 %v379
  %1233 = vmatprep.subr.mxu0 0.0
  %1234 = vmatpush1.msra.mxu0 %v380
  %1235 = vmatprep.subr.mxu0 0.0
  %1236 = vmatpush1.msra.mxu0 %v381
  %1237 = vmatprep.subr.mxu0 0.0
  %1238 = vmatpush1.msra.mxu0 %v382
  %1239 = vmatprep.subr.mxu0 0.0
  %1240 = vmatpush1.msra.mxu0 %v383
  %1241 = vmatprep.subr.mxu0 0.0
  %1242 = vmatpush1.msra.mxu0 %v384
  %1243 = vmatprep.subr.mxu0 0.0
  %1244 = vmatpush1.msra.mxu0 %v385
  %1245 = vmatprep.subr.mxu0 0.0
  %1246 = vmatpush1.msra.mxu0 %v386
  %1247 = vmatprep.subr.mxu0 0.0
  %1248 = vmatpush1.msra.mxu0 %v387
  %1249 = vmatprep.subr.mxu0 0.0
  %1250 = vmatpush1.msra.mxu0 %v388
  %1251 = vmatprep.subr.mxu0 0.0
  %1252 = vmatpush1.msra.mxu0 %v389
  %1253 = vmatprep.subr.mxu0 0.0
  %1254 = vmatpush1.msra.mxu0 %v390
  %1255 = vmatprep.subr.mxu0 0.0
  %1256 = vmatpush1.msra.mxu0 %v391
  %1257 = vmatprep.subr.mxu0 0.0
  %1258 = vmatpush1.msra.mxu0 %v392
  %1259 = vmatprep.subr.mxu0 0.0
  %1260 = vmatpush1.msra.mxu0 %v393
  %1261 = vmatprep.mubr.f32.mxu0 %v35
  %1262 = vmatmul.mubr.f32.gmra.mrb[0].mxu0 %v34
  %v1263 = vpop.f32.mrb[0].mxu0
  %v1264 = vadd.f32 %v1194, %v1263
  %v1265 = vpop.f32.mrb[0].mxu0
  %1266 = vdwg.mxu0
  %1267 = vmatprep.subr.mxu0 0.0
  %1268 = vmatpush1.msra.mxu0 %v394
  %1269 = vmatprep.subr.mxu0 0.0
  %1270 = vmatpush1.msra.mxu0 %v395
  %1271 = vmatprep.subr.mxu0 0.0
  %1272 = vmatpush1.msra.mxu0 %v396
  %1273 = vmatprep.subr.mxu0 0.0
  %1274 = vmatpush1.msra.mxu0 %v397
  %1275 = vmatprep.subr.mxu0 0.0
  %1276 = vmatpush1.msra.mxu0 %v398
  %1277 = vmatprep.subr.mxu0 0.0
  %1278 = vmatpush1.msra.mxu0 %v399
  %1279 = vmatprep.subr.mxu0 0.0
  %1280 = vmatpush1.msra.mxu0 %v400
  %1281 = vmatprep.subr.mxu0 0.0
  %1282 = vmatpush1.msra.mxu0 %v401
  %1283 = vmatprep.subr.mxu0 0.0
  %1284 = vmatpush1.msra.mxu0 %v402
  %1285 = vmatprep.subr.mxu0 0.0
  %1286 = vmatpush1.msra.mxu0 %v403
  %1287 = vmatprep.subr.mxu0 0.0
  %1288 = vmatpush1.msra.mxu0 %v404
  %1289 = vmatprep.subr.mxu0 0.0
  %1290 = vmatpush1.msra.mxu0 %v405
  %1291 = vmatprep.subr.mxu0 0.0
  %1292 = vmatpush1.msra.mxu0 %v406
  %1293 = vmatprep.subr.mxu0 0.0
  %1294 = vmatpush1.msra.mxu0 %v407
  %1295 = vmatprep.subr.mxu0 0.0
  %1296 = vmatpush1.msra.mxu0 %v408
  %1297 = vmatprep.subr.mxu0 0.0
  %1298 = vmatpush1.msra.mxu0 %v409
  %1299 = vmatprep.subr.mxu0 0.0
  %1300 = vmatpush1.msra.mxu0 %v410
  %1301 = vmatprep.subr.mxu0 0.0
  %1302 = vmatpush1.msra.mxu0 %v411
  %1303 = vmatprep.subr.mxu0 0.0
  %1304 = vmatpush1.msra.mxu0 %v412
  %1305 = vmatprep.subr.mxu0 0.0
  %1306 = vmatpush1.msra.mxu0 %v413
  %1307 = vmatprep.subr.mxu0 0.0
  %1308 = vmatpush1.msra.mxu0 %v414
  %1309 = vmatprep.subr.mxu0 0.0
  %1310 = vmatpush1.msra.mxu0 %v415
  %1311 = vmatprep.subr.mxu0 0.0
  %1312 = vmatpush1.msra.mxu0 %v416
  %1313 = vmatprep.subr.mxu0 0.0
  %1314 = vmatpush1.msra.mxu0 %v417
  %1315 = vmatprep.subr.mxu0 0.0
  %1316 = vmatpush1.msra.mxu0 %v418
  %1317 = vmatprep.subr.mxu0 0.0
  %1318 = vmatpush1.msra.mxu0 %v419
  %1319 = vmatprep.subr.mxu0 0.0
  %1320 = vmatpush1.msra.mxu0 %v420
  %1321 = vmatprep.subr.mxu0 0.0
  %1322 = vmatpush1.msra.mxu0 %v421
  %1323 = vmatprep.subr.mxu0 0.0
  %1324 = vmatpush1.msra.mxu0 %v422
  %1325 = vmatprep.subr.mxu0 0.0
  %1326 = vmatpush1.msra.mxu0 %v423
  %1327 = vmatprep.subr.mxu0 0.0
  %1328 = vmatpush1.msra.mxu0 %v424
  %1329 = vmatprep.subr.mxu0 0.0
  %1330 = vmatpush1.msra.mxu0 %v425
  %1331 = vmatprep.mubr.f32.mxu0 %v37
  %1332 = vmatmul.mubr.f32.gmra.mrb[0].mxu0 %v36
  %v1333 = vpop.f32.mrb[0].mxu0
  %v1334 = vadd.f32 %v1264, %v1333
  %v1335 = vpop.f32.mrb[0].mxu0
  %1336 = vdwg.mxu0
  %1337 = vmatprep.subr.mxu0 0.0
  %1338 = vmatpush1.msra.mxu0 %v426
  %1339 = vmatprep.subr.mxu0 0.0
  %1340 = vmatpush1.msra.mxu0 %v427
  %1341 = vmatprep.subr.mxu0 0.0
  %1342 = vmatpush1.msra.mxu0 %v428
  %1343 = vmatprep.subr.mxu0 0.0
  %1344 = vmatpush1.msra.mxu0 %v429
  %1345 = vmatprep.subr.mxu0 0.0
  %1346 = vmatpush1.msra.mxu0 %v430
  %1347 = vmatprep.subr.mxu0 0.0
  %1348 = vmatpush1.msra.mxu0 %v431
  %1349 = vmatprep.subr.mxu0 0.0
  %1350 = vmatpush1.msra.mxu0 %v432
  %1351 = vmatprep.subr.mxu0 0.0
  %1352 = vmatpush1.msra.mxu0 %v433
  %1353 = vmatprep.subr.mxu0 0.0
  %1354 = vmatpush1.msra.mxu0 %v434
  %1355 = vmatprep.subr.mxu0 0.0
  %1356 = vmatpush1.msra.mxu0 %v435
  %1357 = vmatprep.subr.mxu0 0.0
  %1358 = vmatpush1.msra.mxu0 %v436
  %1359 = vmatprep.subr.mxu0 0.0
  %1360 = vmatpush1.msra.mxu0 %v437
  %1361 = vmatprep.subr.mxu0 0.0
  %1362 = vmatpush1.msra.mxu0 %v438
  %1363 = vmatprep.subr.mxu0 0.0
  %1364 = vmatpush1.msra.mxu0 %v439
  %1365 = vmatprep.subr.mxu0 0.0
  %1366 = vmatpush1.msra.mxu0 %v440
  %1367 = vmatprep.subr.mxu0 0.0
  %1368 = vmatpush1.msra.mxu0 %v441
  %1369 = vmatprep.subr.mxu0 0.0
  %1370 = vmatpush1.msra.mxu0 %v442
  %1371 = vmatprep.subr.mxu0 0.0
  %1372 = vmatpush1.msra.mxu0 %v443
  %1373 = vmatprep.subr.mxu0 0.0
  %1374 = vmatpush1.msra.mxu0 %v444
  %1375 = vmatprep.subr.mxu0 0.0
  %1376 = vmatpush1.msra.mxu0 %v445
  %1377 = vmatprep.subr.mxu0 0.0
  %1378 = vmatpush1.msra.mxu0 %v446
  %1379 = vmatprep.subr.mxu0 0.0
  %1380 = vmatpush1.msra.mxu0 %v447
  %1381 = vmatprep.subr.mxu0 0.0
  %1382 = vmatpush1.msra.mxu0 %v448
  %1383 = vmatprep.subr.mxu0 0.0
  %1384 = vmatpush1.msra.mxu0 %v449
  %1385 = vmatprep.subr.mxu0 0.0
  %1386 = vmatpush1.msra.mxu0 %v450
  %1387 = vmatprep.subr.mxu0 0.0
  %1388 = vmatpush1.msra.mxu0 %v451
  %1389 = vmatprep.subr.mxu0 0.0
  %1390 = vmatpush1.msra.mxu0 %v452
  %1391 = vmatprep.subr.mxu0 0.0
  %1392 = vmatpush1.msra.mxu0 %v453
  %1393 = vmatprep.subr.mxu0 0.0
  %1394 = vmatpush1.msra.mxu0 %v454
  %1395 = vmatprep.subr.mxu0 0.0
  %1396 = vmatpush1.msra.mxu0 %v455
  %1397 = vmatprep.subr.mxu0 0.0
  %1398 = vmatpush1.msra.mxu0 %v456
  %1399 = vmatprep.subr.mxu0 0.0
  %1400 = vmatpush1.msra.mxu0 %v457
  %1401 = vmatprep.mubr.f32.mxu0 %v39
  %1402 = vmatmul.mubr.f32.gmra.mrb[0].mxu0 %v38
  %v1403 = vpop.f32.mrb[0].mxu0
  %v1404 = vadd.f32 %v1334, %v1403
  %v1405 = vpop.f32.mrb[0].mxu0
  %1406 = vdwg.mxu0
  %1407 = vmatprep.subr.mxu0 0.0
  %1408 = vmatpush1.msra.mxu0 %v458
  %1409 = vmatprep.subr.mxu0 0.0
  %1410 = vmatpush1.msra.mxu0 %v459
  %1411 = vmatprep.subr.mxu0 0.0
  %1412 = vmatpush1.msra.mxu0 %v460
  %1413 = vmatprep.subr.mxu0 0.0
  %1414 = vmatpush1.msra.mxu0 %v461
  %1415 = vmatprep.subr.mxu0 0.0
  %1416 = vmatpush1.msra.mxu0 %v462
  %1417 = vmatprep.subr.mxu0 0.0
  %1418 = vmatpush1.msra.mxu0 %v463
  %1419 = vmatprep.subr.mxu0 0.0
  %1420 = vmatpush1.msra.mxu0 %v464
  %1421 = vmatprep.subr.mxu0 0.0
  %1422 = vmatpush1.msra.mxu0 %v465
  %1423 = vmatprep.subr.mxu0 0.0
  %1424 = vmatpush1.msra.mxu0 %v466
  %1425 = vmatprep.subr.mxu0 0.0
  %1426 = vmatpush1.msra.mxu0 %v467
  %1427 = vmatprep.subr.mxu0 0.0
  %1428 = vmatpush1.msra.mxu0 %v468
  %1429 = vmatprep.subr.mxu0 0.0
  %1430 = vmatpush1.msra.mxu0 %v469
  %1431 = vmatprep.subr.mxu0 0.0
  %1432 = vmatpush1.msra.mxu0 %v470
  %1433 = vmatprep.subr.mxu0 0.0
  %1434 = vmatpush1.msra.mxu0 %v471
  %1435 = vmatprep.subr.mxu0 0.0
  %1436 = vmatpush1.msra.mxu0 %v472
  %1437 = vmatprep.subr.mxu0 0.0
  %1438 = vmatpush1.msra.mxu0 %v473
  %1439 = vmatprep.subr.mxu0 0.0
  %1440 = vmatpush1.msra.mxu0 %v474
  %1441 = vmatprep.subr.mxu0 0.0
  %1442 = vmatpush1.msra.mxu0 %v475
  %1443 = vmatprep.subr.mxu0 0.0
  %1444 = vmatpush1.msra.mxu0 %v476
  %1445 = vmatprep.subr.mxu0 0.0
  %1446 = vmatpush1.msra.mxu0 %v477
  %1447 = vmatprep.subr.mxu0 0.0
  %1448 = vmatpush1.msra.mxu0 %v478
  %1449 = vmatprep.subr.mxu0 0.0
  %1450 = vmatpush1.msra.mxu0 %v479
  %1451 = vmatprep.subr.mxu0 0.0
  %1452 = vmatpush1.msra.mxu0 %v480
  %1453 = vmatprep.subr.mxu0 0.0
  %1454 = vmatpush1.msra.mxu0 %v481
  %1455 = vmatprep.subr.mxu0 0.0
  %1456 = vmatpush1.msra.mxu0 %v482
  %1457 = vmatprep.subr.mxu0 0.0
  %1458 = vmatpush1.msra.mxu0 %v483
  %1459 = vmatprep.subr.mxu0 0.0
  %1460 = vmatpush1.msra.mxu0 %v484
  %1461 = vmatprep.subr.mxu0 0.0
  %1462 = vmatpush1.msra.mxu0 %v485
  %1463 = vmatprep.subr.mxu0 0.0
  %1464 = vmatpush1.msra.mxu0 %v486
  %1465 = vmatprep.subr.mxu0 0.0
  %1466 = vmatpush1.msra.mxu0 %v487
  %1467 = vmatprep.subr.mxu0 0.0
  %1468 = vmatpush1.msra.mxu0 %v488
  %1469 = vmatprep.subr.mxu0 0.0
  %1470 = vmatpush1.msra.mxu0 %v489
  %1471 = vmatprep.mubr.f32.mxu0 %v41
  %1472 = vmatmul.mubr.f32.gmra.mrb[0].mxu0 %v40
  %v1473 = vpop.f32.mrb[0].mxu0
  %v1474 = vadd.f32 %v1404, %v1473
  %v1475 = vpop.f32.mrb[0].mxu0
  %1476 = vdwg.mxu0
  %1477 = vst [vmem:[%s3] sm:$0xff] %v1474
  // Predicated region
  $region14: #{cnn_forward.3} parent=0 // pred_check
    _
  $region15: #{cnn_forward.3} parent=0 // pred_check_branch
    %1479 = sbr.rel (0) target = $region17
  $region16: #{cnn_forward.3} parent=0 // pred_region
    _
  $region17: #{cnn_forward.3} parent=0 // pred_fallthru
    _
  // Predicated region
  $region18: #{cnn_forward.3} parent=0 // pred_check
    _
  $region19: #{cnn_forward.3} parent=0 // pred_check_branch
    %1481 = sbr.rel (0) target = $region21
  $region20: #{cnn_forward.3} parent=0 // pred_region
    _
  $region21: #{cnn_forward.3} parent=0 // pred_fallthru
    _

// kernel: cnn_forward.2
$region0: #{cnn_forward.2}
  #allocation0 [shape = 'u32[]', space=smem, size = 0x4, offset = 0x4, fixed_abs, tag = 'smem constant byte address 0x4 - core index']
  #allocation1 [shape = 'u32[144,128]{1,0:T(1,128)}', space=vmem, size = 0x12000, scoped, tag = 'internal scratch']
  #allocation2 [shape = 'f32[1,4,72,32]{3,2,1,0:T(8,128)}', space=vmem, size = 0x24000, scoped, tag = 'scratch operand']
  %s0 = inlined_call_operand.vmem [shape: f32[4,2,288,9], index: 0, kind: input, shape index: {}]
  %s1 = inlined_call_operand.vmem [shape: f32[288,1], index: 1, kind: input, shape index: {}]
  %s2 = inlined_call_operand.vmem [shape: f32[9,32], index: 2, kind: input, shape index: {}]
  %s3 = inlined_call_operand.vmem [shape: f32[1,32], index: 3, kind: input, shape index: {}]
  %s4 = inlined_call_operand.vmem [shape: f32[288,64], index: 4, kind: input, shape index: {}]
  %s5 = inlined_call_operand.vmem [shape: f32[1,64], index: 5, kind: input, shape index: {}]
  %s6 = inlined_call_operand.vmem [shape: f32[2,56,64], index: 6, kind: output, shape index: {}]
  %s7 = sld [smem:[#allocation0]]
  $region95: #{cnn_forward.2} parent=0
    _
  %s9 = ssub.s32 1, %s7
  %s10 = scalar_select 0, %s9, %s7
  $region1: #{cnn_forward.2} parent=0
    #allocation3 [shape = 'u8[1179648]{0}', space=vmem, size = 0x120000, scoped, tag = 'input window, operand 0']
    loop: start=0, step=1, limit=4
    $region2: #{cnn_forward.2} parent=1 // loop_pre_header
      _
    $region3: #{cnn_forward.2} parent=1 // loop_header
      %s12 = sphi 0, %s16
      %p13 = scmp.ge.s32.totalorder %s12, 4
      %s22 = sphi 0, %s24
      %s25 = sphi 0, %s22
      %s26 = sphi 0, %s25
      %s42 = sphi 0, %s26
      %s46 = sphi 0, %s46
      %s48 = sphi 0, %s46
      %s49 = sphi 0, %s48
      %s63 = sphi 0, %s49
      %s67 = sphi 0, %s67
      %s69 = sphi 0, %s67
      %s70 = sphi 0, %s69
      %s84 = sphi 0, %s70
      %s88 = sphi 0, %s88
      %s90 = sphi 0, %s88
      %s91 = sphi 0, %s90
      %s105 = sphi 0, %s91
      %s109 = sphi 0, %s109
      %s111 = sphi 0, %s109
      %s112 = sphi 0, %s111
      %s126 = sphi 0, %s112
      %s130 = sphi 0, %s130
      %s132 = sphi 0, %s130
      %s133 = sphi 0, %s132
      %s147 = sphi 0, %s133
      %s153 = sphi 0, %s155
      %s156 = sphi 0, %s153
      %s157 = sphi 0, %s156
      %s173 = sphi 0, %s157
    $region4: #{cnn_forward.2} parent=1 // loop_header_branch
      %15 = sbr.rel (%p13) target = $region8
    $region5: #{cnn_forward.2} parent=1 // loop_body
      %s17 = ssub.s32 %s12, 1
      %s18 = ssub.s32 %s12, 2
      %s19 = sadd.s32 %s12, 1
      %s20 = ssub.s32 %s12, %s19
      %p21 = scmp.eq.s32.totalorder %s20, 0
      %s23 = sadd.s32 %s22, 1
      %s24 = scalar_select %p21, %s22, %s23
      %p27 = pneg %p21
      %p28 = scmp.eq.s32.totalorder %s12, 1
      %p29 = por %p27, %p28
      %p30 = scmp.ne.s32.totalorder %s22, %s25
      %p31 = scmp.eq.s32.totalorder %s12, 0
      %p32 = por %p30, %p31
      %p33 = scmp.ne.s32.totalorder %s22, %s25
      %p34 = scmp.eq.s32.totalorder %s17, 1
      %p35 = por %p33, %p34
      %p36 = scmp.ne.s32.totalorder %s25, %s26
      %p37 = scmp.eq.s32.totalorder %s17, 0
      %p38 = por %p36, %p37
      %p39 = scmp.ne.s32.totalorder %s25, %s26
      %p40 = scmp.eq.s32.totalorder %s18, 1
      %p41 = por %p39, %p40
      %p43 = scmp.ne.s32.totalorder %s26, %s42
      %p44 = scmp.eq.s32.totalorder %s18, 0
      %p45 = por %p43, %p44
      %s47 = sadd.s32 %s46, 1
      %p50 = scmp.eq.s32.totalorder %s12, 1
      %p51 = scmp.ne.s32.totalorder %s46, %s48
      %p52 = scmp.eq.s32.totalorder %s12, 0
      %p53 = por %p51, %p52
      %p54 = scmp.ne.s32.totalorder %s46, %s48
      %p55 = scmp.eq.s32.totalorder %s17, 1
      %p56 = por %p54, %p55
      %p57 = scmp.ne.s32.totalorder %s48, %s49
      %p58 = scmp.eq.s32.totalorder %s17, 0
      %p59 = por %p57, %p58
      %p60 = scmp.ne.s32.totalorder %s48, %s49
      %p61 = scmp.eq.s32.totalorder %s18, 1
      %p62 = por %p60, %p61
      %p64 = scmp.ne.s32.totalorder %s49, %s63
      %p65 = scmp.eq.s32.totalorder %s18, 0
      %p66 = por %p64, %p65
      %s68 = sadd.s32 %s67, 1
      %p71 = scmp.eq.s32.totalorder %s12, 1
      %p72 = scmp.ne.s32.totalorder %s67, %s69
      %p73 = scmp.eq.s32.totalorder %s12, 0
      %p74 = por %p72, %p73
      %p75 = scmp.ne.s32.totalorder %s67, %s69
      %p76 = scmp.eq.s32.totalorder %s17, 1
      %p77 = por %p75, %p76
      %p78 = scmp.ne.s32.totalorder %s69, %s70
      %p79 = scmp.eq.s32.totalorder %s17, 0
      %p80 = por %p78, %p79
      %p81 = scmp.ne.s32.totalorder %s69, %s70
      %p82 = scmp.eq.s32.totalorder %s18, 1
      %p83 = por %p81, %p82
      %p85 = scmp.ne.s32.totalorder %s70, %s84
      %p86 = scmp.eq.s32.totalorder %s18, 0
      %p87 = por %p85, %p86
      %s89 = sadd.s32 %s88, 1
      %p92 = scmp.eq.s32.totalorder %s12, 1
      %p93 = scmp.ne.s32.totalorder %s88, %s90
      %p94 = scmp.eq.s32.totalorder %s12, 0
      %p95 = por %p93, %p94
      %p96 = scmp.ne.s32.totalorder %s88, %s90
      %p97 = scmp.eq.s32.totalorder %s17, 1
      %p98 = por %p96, %p97
      %p99 = scmp.ne.s32.totalorder %s90, %s91
      %p100 = scmp.eq.s32.totalorder %s17, 0
      %p101 = por %p99, %p100
      %p102 = scmp.ne.s32.totalorder %s90, %s91
      %p103 = scmp.eq.s32.totalorder %s18, 1
      %p104 = por %p102, %p103
      %p106 = scmp.ne.s32.totalorder %s91, %s105
      %p107 = scmp.eq.s32.totalorder %s18, 0
      %p108 = por %p106, %p107
      %s110 = sadd.s32 %s109, 1
      %p113 = scmp.eq.s32.totalorder %s12, 1
      %p114 = scmp.ne.s32.totalorder %s109, %s111
      %p115 = scmp.eq.s32.totalorder %s12, 0
      %p116 = por %p114, %p115
      %p117 = scmp.ne.s32.totalorder %s109, %s111
      %p118 = scmp.eq.s32.totalorder %s17, 1
      %p119 = por %p117, %p118
      %p120 = scmp.ne.s32.totalorder %s111, %s112
      %p121 = scmp.eq.s32.totalorder %s17, 0
      %p122 = por %p120, %p121
      %p123 = scmp.ne.s32.totalorder %s111, %s112
      %p124 = scmp.eq.s32.totalorder %s18, 1
      %p125 = por %p123, %p124
      %p127 = scmp.ne.s32.totalorder %s112, %s126
      %p128 = scmp.eq.s32.totalorder %s18, 0
      %p129 = por %p127, %p128
      %s131 = sadd.s32 %s130, 1
      %p134 = scmp.eq.s32.totalorder %s12, 1
      %p135 = scmp.ne.s32.totalorder %s130, %s132
      %p136 = scmp.eq.s32.totalorder %s12, 0
      %p137 = por %p135, %p136
      %p138 = scmp.ne.s32.totalorder %s130, %s132
      %p139 = scmp.eq.s32.totalorder %s17, 1
      %p140 = por %p138, %p139
      %p141 = scmp.ne.s32.totalorder %s132, %s133
      %p142 = scmp.eq.s32.totalorder %s17, 0
      %p143 = por %p141, %p142
      %p144 = scmp.ne.s32.totalorder %s132, %s133
      %p145 = scmp.eq.s32.totalorder %s18, 1
      %p146 = por %p144, %p145
      %p148 = scmp.ne.s32.totalorder %s133, %s147
      %p149 = scmp.eq.s32.totalorder %s18, 0
      %p150 = por %p148, %p149
      %s151 = ssub.s32 %s12, %s19
      %p152 = scmp.eq.s32.totalorder %s151, 0
      %s154 = sadd.s32 %s153, 1
      %s155 = scalar_select %p152, %s153, %s154
      %p158 = pneg %p152
      %p159 = scmp.eq.s32.totalorder %s12, 1
      %p160 = por %p158, %p159
      %p161 = scmp.ne.s32.totalorder %s153, %s156
      %p162 = scmp.eq.s32.totalorder %s12, 0
      %p163 = por %p161, %p162
      %p164 = scmp.ne.s32.totalorder %s153, %s156
      %p165 = scmp.eq.s32.totalorder %s17, 1
      %p166 = por %p164, %p165
      %p167 = scmp.ne.s32.totalorder %s156, %s157
      %p168 = scmp.eq.s32.totalorder %s17, 0
      %p169 = por %p167, %p168
      %p170 = scmp.ne.s32.totalorder %s156, %s157
      %p171 = scmp.eq.s32.totalorder %s18, 1
      %p172 = por %p170, %p171
      %p174 = scmp.ne.s32.totalorder %s157, %s173
      %p175 = scmp.eq.s32.totalorder %s18, 0
      %p176 = por %p174, %p175
      %p177 = scmp.le.s32.totalorder 1, %s12
      %p178 = scmp.lt.s32.totalorder %s12, 3
      %p179 = pnand %p177, %p178
      %p180 = pneg %p179
      // Predicated region
      $region9: #{cnn_forward.2} parent=5 // pred_check
        _
      $region10: #{cnn_forward.2} parent=5 // pred_check_branch
        %182 = sbr.rel (%p179) target = $region12
      $region11: #{cnn_forward.2} parent=5 // pred_region
        %s183 = ssub.s32 %s12, 1
        // Predicated region
        $region13: #{cnn_forward.2} parent=11 // pred_check
          %p184 = pneg %p59
        $region14: #{cnn_forward.2} parent=11 // pred_check_branch
          %186 = sbr.rel (%p184) target = $region16
        $region15: #{cnn_forward.2} parent=11 // pred_region
          _
        $region16: #{cnn_forward.2} parent=11 // pred_fallthru
          _
        // Predicated region
        $region17: #{cnn_forward.2} parent=11 // pred_check
          %p187 = pneg %p80
        $region18: #{cnn_forward.2} parent=11 // pred_check_branch
          %189 = sbr.rel (%p187) target = $region20
        $region19: #{cnn_forward.2} parent=11 // pred_region
          _
        $region20: #{cnn_forward.2} parent=11 // pred_fallthru
          _
        // Predicated region
        $region21: #{cnn_forward.2} parent=11 // pred_check
          %p190 = pneg %p101
        $region22: #{cnn_forward.2} parent=11 // pred_check_branch
          %192 = sbr.rel (%p190) target = $region24
        $region23: #{cnn_forward.2} parent=11 // pred_region
          _
        $region24: #{cnn_forward.2} parent=11 // pred_fallthru
          _
        // Predicated region
        $region25: #{cnn_forward.2} parent=11 // pred_check
          %p193 = pneg %p122
        $region26: #{cnn_forward.2} parent=11 // pred_check_branch
          %195 = sbr.rel (%p193) target = $region28
        $region27: #{cnn_forward.2} parent=11 // pred_region
          _
        $region28: #{cnn_forward.2} parent=11 // pred_fallthru
          _
        // Predicated region
        $region29: #{cnn_forward.2} parent=11 // pred_check
          %p196 = pneg %p143
        $region30: #{cnn_forward.2} parent=11 // pred_check_branch
          %198 = sbr.rel (%p196) target = $region32
        $region31: #{cnn_forward.2} parent=11 // pred_region
          _
        $region32: #{cnn_forward.2} parent=11 // pred_fallthru
          _
      $region12: #{cnn_forward.2} parent=5 // pred_fallthru
        _
      %p199 = scmp.lt.s32.totalorder %s12, 2
      // Predicated region
      $region33: #{cnn_forward.2} parent=5 // pred_check
        %p200 = pneg %p199
      $region34: #{cnn_forward.2} parent=5 // pred_check_branch
        %202 = sbr.rel (%p200) target = $region36
      $region35: #{cnn_forward.2} parent=5 // pred_region
        // Predicated region
        $region37: #{cnn_forward.2} parent=35 // pred_check
          %p203 = pneg %p32
        $region38: #{cnn_forward.2} parent=35 // pred_check_branch
          %205 = sbr.rel (%p203) target = $region40
        $region39: #{cnn_forward.2} parent=35 // pred_region
          %s206 = sand.u32 %s22, 1
          %s207 = sand.u32 %s22, 1
          %s208 = smul.addr %s207, 1152
          %s209 = scalar_lea.vmem [#allocation3], %s208
          %s210 = smul.addr %s12, 36
          %s211 = smul.addr %s210, 8
          %s212 = scalar_lea.vmem %s0, %s211
          // Predicated region
          $region41: #{cnn_forward.2} parent=39 // pred_check
            _
          $region42: #{cnn_forward.2} parent=39 // pred_check_branch
            %214 = sbr.rel (0) target = $region44
          $region43: #{cnn_forward.2} parent=39 // pred_region
            // Predicated region
            $region45: #{cnn_forward.2} parent=43 // pred_check
              _
            $region46: #{cnn_forward.2} parent=43 // pred_check_branch
              %216 = sbr.rel (0) target = $region48
            $region47: #{cnn_forward.2} parent=43 // pred_region
              // Predicated region
              $region60: #{cnn_forward.2} parent=47 // pred_check
                _
              $region61: #{cnn_forward.2} parent=47 // pred_check_branch
                %517 = sbr.rel (0) target = $region63
              $region62: #{cnn_forward.2} parent=47 // pred_region
                loop: start=0, step=1, limit=1
                $region64: #{cnn_forward.2} parent=62 // loop_pre_header
                  _
                $region65: #{cnn_forward.2} parent=62 // loop_header
                  %s519 = sphi 0, %s523
                  %p520 = scmp.ge.s32.totalorder %s519, 1
                  %s524 = sphi %s212, %s212
                  %s525 = sphi %s209, %s209
                $region66: #{cnn_forward.2} parent=62 // loop_header_branch
                  %522 = sbr.rel (%p520) target = $region70
                $region67: #{cnn_forward.2} parent=62 // loop_body
                  %v526 = vld [vmem:[%s524] sm:$0xff]
                  %527 = vst [vmem:[%s525] sm:$0xff] %v526
                  %v528 = vld [vmem:[%s524 + $0x8] sm:$0xff]
                  %529 = vst [vmem:[%s525 + $0x8] sm:$0xff] %v528
                  %v530 = vld [vmem:[%s524 + $0x10] sm:$0xff]
                  %531 = vst [vmem:[%s525 + $0x10] sm:$0xff] %v530
                  %v532 = vld [vmem:[%s524 + $0x18] sm:$0xff]
                  %533 = vst [vmem:[%s525 + $0x18] sm:$0xff] %v532
                  %v534 = vld [vmem:[%s524 + $0x20] sm:$0xff]
                  %535 = vst [vmem:[%s525 + $0x20] sm:$0xff] %v534
                  %v536 = vld [vmem:[%s524 + $0x28] sm:$0xff]
                  %537 = vst [vmem:[%s525 + $0x28] sm:$0xff] %v536
                  %v538 = vld [vmem:[%s524 + $0x30] sm:$0xff]
                  %539 = vst [vmem:[%s525 + $0x30] sm:$0xff] %v538
                  %v540 = vld [vmem:[%s524 + $0x38] sm:$0xff]
                  %541 = vst [vmem:[%s525 + $0x38] sm:$0xff] %v540
                  %v542 = vld [vmem:[%s524 + $0x40] sm:$0xff]
                  %543 = vst [vmem:[%s525 + $0x40] sm:$0xff] %v542
                  %v544 = vld [vmem:[%s524 + $0x48] sm:$0xff]
                  %545 = vst [vmem:[%s525 + $0x48] sm:$0xff] %v544
                  %v546 = vld [vmem:[%s524 + $0x50] sm:$0xff]
                  %547 = vst [vmem:[%s525 + $0x50] sm:$0xff] %v546
                  %v548 = vld [vmem:[%s524 + $0x58] sm:$0xff]
                  %549 = vst [vmem:[%s525 + $0x58] sm:$0xff] %v548
                  %v550 = vld [vmem:[%s524 + $0x60] sm:$0xff]
                  %551 = vst [vmem:[%s525 + $0x60] sm:$0xff] %v550
                  %v552 = vld [vmem:[%s524 + $0x68] sm:$0xff]
                  %553 = vst [vmem:[%s525 + $0x68] sm:$0xff] %v552
                  %v554 = vld [vmem:[%s524 + $0x70] sm:$0xff]
                  %555 = vst [vmem:[%s525 + $0x70] sm:$0xff] %v554
                  %v556 = vld [vmem:[%s524 + $0x78] sm:$0xff]
                  %557 = vst [vmem:[%s525 + $0x78] sm:$0xff] %v556
                  %v558 = vld [vmem:[%s524 + $0x80] sm:$0xff]
                  %559 = vst [vmem:[%s525 + $0x80] sm:$0xff] %v558
                  %v560 = vld [vmem:[%s524 + $0x88] sm:$0xff]
                  %561 = vst [vmem:[%s525 + $0x88] sm:$0xff] %v560
                  %v562 = vld [vmem:[%s524 + $0x90] sm:$0xff]
                  %563 = vst [vmem:[%s525 + $0x90] sm:$0xff] %v562
                  %v564 = vld [vmem:[%s524 + $0x98] sm:$0xff]
                  %565 = vst [vmem:[%s525 + $0x98] sm:$0xff] %v564
                  %v566 = vld [vmem:[%s524 + $0xa0] sm:$0xff]
                  %567 = vst [vmem:[%s525 + $0xa0] sm:$0xff] %v566
                  %v568 = vld [vmem:[%s524 + $0xa8] sm:$0xff]
                  %569 = vst [vmem:[%s525 + $0xa8] sm:$0xff] %v568
                  %v570 = vld [vmem:[%s524 + $0xb0] sm:$0xff]
                  %571 = vst [vmem:[%s525 + $0xb0] sm:$0xff] %v570
                  %v572 = vld [vmem:[%s524 + $0xb8] sm:$0xff]
                  %573 = vst [vmem:[%s525 + $0xb8] sm:$0xff] %v572
                  %v574 = vld [vmem:[%s524 + $0xc0] sm:$0xff]
                  %575 = vst [vmem:[%s525 + $0xc0] sm:$0xff] %v574
                  %v576 = vld [vmem:[%s524 + $0xc8] sm:$0xff]
                  %577 = vst [vmem:[%s525 + $0xc8] sm:$0xff] %v576
                  %v578 = vld [vmem:[%s524 + $0xd0] sm:$0xff]
                  %579 = vst [vmem:[%s525 + $0xd0] sm:$0xff] %v578
                  %v580 = vld [vmem:[%s524 + $0xd8] sm:$0xff]
                  %581 = vst [vmem:[%s525 + $0xd8] sm:$0xff] %v580
                  %v582 = vld [vmem:[%s524 + $0xe0] sm:$0xff]
                  %583 = vst [vmem:[%s525 + $0xe0] sm:$0xff] %v582
                  %v584 = vld [vmem:[%s524 + $0xe8] sm:$0xff]
                  %585 = vst [vmem:[%s525 + $0xe8] sm:$0xff] %v584
                  %v586 = vld [vmem:[%s524 + $0xf0] sm:$0xff]
                  %587 = vst [vmem:[%s525 + $0xf0] sm:$0xff] %v586
                  %v588 = vld [vmem:[%s524 + $0xf8] sm:$0xff]
                  %589 = vst [vmem:[%s525 + $0xf8] sm:$0xff] %v588
                  %v590 = vld [vmem:[%s524 + $0x100] sm:$0xff]
                  %591 = vst [vmem:[%s525 + $0x100] sm:$0xff] %v590
                  %v592 = vld [vmem:[%s524 + $0x108] sm:$0xff]
                  %593 = vst [vmem:[%s525 + $0x108] sm:$0xff] %v592
                  %v594 = vld [vmem:[%s524 + $0x110] sm:$0xff]
                  %595 = vst [vmem:[%s525 + $0x110] sm:$0xff] %v594
                  %v596 = vld [vmem:[%s524 + $0x118] sm:$0xff]
                  %597 = vst [vmem:[%s525 + $0x118] sm:$0xff] %v596
                  %v598 = vld [vmem:[%s524 + $0x240] sm:$0xff]
                  %599 = vst [vmem:[%s525 + $0x120] sm:$0xff] %v598
                  %v600 = vld [vmem:[%s524 + $0x248] sm:$0xff]
                  %601 = vst [vmem:[%s525 + $0x128] sm:$0xff] %v600
                  %v602 = vld [vmem:[%s524 + $0x250] sm:$0xff]
                  %603 = vst [vmem:[%s525 + $0x130] sm:$0xff] %v602
                  %v604 = vld [vmem:[%s524 + $0x258] sm:$0xff]
                  %605 = vst [vmem:[%s525 + $0x138] sm:$0xff] %v604
                  %v606 = vld [vmem:[%s524 + $0x260] sm:$0xff]
                  %607 = vst [vmem:[%s525 + $0x140] sm:$0xff] %v606
                  %v608 = vld [vmem:[%s524 + $0x268] sm:$0xff]
                  %609 = vst [vmem:[%s525 + $0x148] sm:$0xff] %v608
                  %v610 = vld [vmem:[%s524 + $0x270] sm:$0xff]
                  %611 = vst [vmem:[%s525 + $0x150] sm:$0xff] %v610
                  %v612 = vld [vmem:[%s524 + $0x278] sm:$0xff]
                  %613 = vst [vmem:[%s525 + $0x158] sm:$0xff] %v612
                  %v614 = vld [vmem:[%s524 + $0x280] sm:$0xff]
                  %615 = vst [vmem:[%s525 + $0x160] sm:$0xff] %v614
                  %v616 = vld [vmem:[%s524 + $0x288] sm:$0xff]
                  %617 = vst [vmem:[%s525 + $0x168] sm:$0xff] %v616
                  %v618 = vld [vmem:[%s524 + $0x290] sm:$0xff]
                  %619 = vst [vmem:[%s525 + $0x170] sm:$0xff] %v618
                  %v620 = vld [vmem:[%s524 + $0x298] sm:$0xff]
                  %621 = vst [vmem:[%s525 + $0x178] sm:$0xff] %v620
                  %v622 = vld [vmem:[%s524 + $0x2a0] sm:$0xff]
                  %623 = vst [vmem:[%s525 + $0x180] sm:$0xff] %v622
                  %v624 = vld [vmem:[%s524 + $0x2a8] sm:$0xff]
                  %625 = vst [vmem:[%s525 + $0x188] sm:$0xff] %v624
                  %v626 = vld [vmem:[%s524 + $0x2b0] sm:$0xff]
                  %627 = vst [vmem:[%s525 + $0x190] sm:$0xff] %v626
                  %v628 = vld [vmem:[%s524 + $0x2b8] sm:$0xff]
                  %629 = vst [vmem:[%s525 + $0x198] sm:$0xff] %v628
                  %v630 = vld [vmem:[%s524 + $0x2c0] sm:$0xff]
                  %631 = vst [vmem:[%s525 + $0x1a0] sm:$0xff] %v630
                  %v632 = vld [vmem:[%s524 + $0x2c8] sm:$0xff]
                  %633 = vst [vmem:[%s525 + $0x1a8] sm:$0xff] %v632
                  %v634 = vld [vmem:[%s524 + $0x2d0] sm:$0xff]
                  %635 = vst [vmem:[%s525 + $0x1b0] sm:$0xff] %v634
                  %v636 = vld [vmem:[%s524 + $0x2d8] sm:$0xff]
                  %637 = vst [vmem:[%s525 + $0x1b8] sm:$0xff] %v636
                  %v638 = vld [vmem:[%s524 + $0x2e0] sm:$0xff]
                  %639 = vst [vmem:[%s525 + $0x1c0] sm:$0xff] %v638
                  %v640 = vld [vmem:[%s524 + $0x2e8] sm:$0xff]
                  %641 = vst [vmem:[%s525 + $0x1c8] sm:$0xff] %v640
                  %v642 = vld [vmem:[%s524 + $0x2f0] sm:$0xff]
                  %643 = vst [vmem:[%s525 + $0x1d0] sm:$0xff] %v642
                  %v644 = vld [vmem:[%s524 + $0x2f8] sm:$0xff]
                  %645 = vst [vmem:[%s525 + $0x1d8] sm:$0xff] %v644
                  %v646 = vld [vmem:[%s524 + $0x300] sm:$0xff]
                  %647 = vst [vmem:[%s525 + $0x1e0] sm:$0xff] %v646
                  %v648 = vld [vmem:[%s524 + $0x308] sm:$0xff]
                  %649 = vst [vmem:[%s525 + $0x1e8] sm:$0xff] %v648
                  %v650 = vld [vmem:[%s524 + $0x310] sm:$0xff]
                  %651 = vst [vmem:[%s525 + $0x1f0] sm:$0xff] %v650
                  %v652 = vld [vmem:[%s524 + $0x318] sm:$0xff]
                  %653 = vst [vmem:[%s525 + $0x1f8] sm:$0xff] %v652
                  %v654 = vld [vmem:[%s524 + $0x320] sm:$0xff]
                  %655 = vst [vmem:[%s525 + $0x200] sm:$0xff] %v654
                  %v656 = vld [vmem:[%s524 + $0x328] sm:$0xff]
                  %657 = vst [vmem:[%s525 + $0x208] sm:$0xff] %v656
                  %v658 = vld [vmem:[%s524 + $0x330] sm:$0xff]
                  %659 = vst [vmem:[%s525 + $0x210] sm:$0xff] %v658
                  %v660 = vld [vmem:[%s524 + $0x338] sm:$0xff]
                  %661 = vst [vmem:[%s525 + $0x218] sm:$0xff] %v660
                  %v662 = vld [vmem:[%s524 + $0x340] sm:$0xff]
                  %663 = vst [vmem:[%s525 + $0x220] sm:$0xff] %v662
                  %v664 = vld [vmem:[%s524 + $0x348] sm:$0xff]
                  %665 = vst [vmem:[%s525 + $0x228] sm:$0xff] %v664
                  %v666 = vld [vmem:[%s524 + $0x350] sm:$0xff]
                  %667 = vst [vmem:[%s525 + $0x230] sm:$0xff] %v666
                  %v668 = vld [vmem:[%s524 + $0x358] sm:$0xff]
                  %669 = vst [vmem:[%s525 + $0x238] sm:$0xff] %v668
                  %v670 = vld [vmem:[%s524 + $0x480] sm:$0xff]
                  %671 = vst [vmem:[%s525 + $0x240] sm:$0xff] %v670
                  %v672 = vld [vmem:[%s524 + $0x488] sm:$0xff]
                  %673 = vst [vmem:[%s525 + $0x248] sm:$0xff] %v672
                  %v674 = vld [vmem:[%s524 + $0x490] sm:$0xff]
                  %675 = vst [vmem:[%s525 + $0x250] sm:$0xff] %v674
                  %v676 = vld [vmem:[%s524 + $0x498] sm:$0xff]
                  %677 = vst [vmem:[%s525 + $0x258] sm:$0xff] %v676
                  %v678 = vld [vmem:[%s524 + $0x4a0] sm:$0xff]
                  %679 = vst [vmem:[%s525 + $0x260] sm:$0xff] %v678
                  %v680 = vld [vmem:[%s524 + $0x4a8] sm:$0xff]
                  %681 = vst [vmem:[%s525 + $0x268] sm:$0xff] %v680
                  %v682 = vld [vmem:[%s524 + $0x4b0] sm:$0xff]
                  %683 = vst [vmem:[%s525 + $0x270] sm:$0xff] %v682
                  %v684 = vld [vmem:[%s524 + $0x4b8] sm:$0xff]
                  %685 = vst [vmem:[%s525 + $0x278] sm:$0xff] %v684
                  %v686 = vld [vmem:[%s524 + $0x4c0] sm:$0xff]
                  %687 = vst [vmem:[%s525 + $0x280] sm:$0xff] %v686
                  %v688 = vld [vmem:[%s524 + $0x4c8] sm:$0xff]
                  %689 = vst [vmem:[%s525 + $0x288] sm:$0xff] %v688
                  %v690 = vld [vmem:[%s524 + $0x4d0] sm:$0xff]
                  %691 = vst [vmem:[%s525 + $0x290] sm:$0xff] %v690
                  %v692 = vld [vmem:[%s524 + $0x4d8] sm:$0xff]
                  %693 = vst [vmem:[%s525 + $0x298] sm:$0xff] %v692
                  %v694 = vld [vmem:[%s524 + $0x4e0] sm:$0xff]
                  %695 = vst [vmem:[%s525 + $0x2a0] sm:$0xff] %v694
                  %v696 = vld [vmem:[%s524 + $0x4e8] sm:$0xff]
                  %697 = vst [vmem:[%s525 + $0x2a8] sm:$0xff] %v696
                  %v698 = vld [vmem:[%s524 + $0x4f0] sm:$0xff]
                  %699 = vst [vmem:[%s525 + $0x2b0] sm:$0xff] %v698
                  %v700 = vld [vmem:[%s524 + $0x4f8] sm:$0xff]
                  %701 = vst [vmem:[%s525 + $0x2b8] sm:$0xff] %v700
                  %v702 = vld [vmem:[%s524 + $0x500] sm:$0xff]
                  %703 = vst [vmem:[%s525 + $0x2c0] sm:$0xff] %v702
                  %v704 = vld [vmem:[%s524 + $0x508] sm:$0xff]
                  %705 = vst [vmem:[%s525 + $0x2c8] sm:$0xff] %v704
                  %v706 = vld [vmem:[%s524 + $0x510] sm:$0xff]
                  %707 = vst [vmem:[%s525 + $0x2d0] sm:$0xff] %v706
                  %v708 = vld [vmem:[%s524 + $0x518] sm:$0xff]
                  %709 = vst [vmem:[%s525 + $0x2d8] sm:$0xff] %v708
                  %v710 = vld [vmem:[%s524 + $0x520] sm:$0xff]
                  %711 = vst [vmem:[%s525 + $0x2e0] sm:$0xff] %v710
                  %v712 = vld [vmem:[%s524 + $0x528] sm:$0xff]
                  %713 = vst [vmem:[%s525 + $0x2e8] sm:$0xff] %v712
                  %v714 = vld [vmem:[%s524 + $0x530] sm:$0xff]
                  %715 = vst [vmem:[%s525 + $0x2f0] sm:$0xff] %v714
                  %v716 = vld [vmem:[%s524 + $0x538] sm:$0xff]
                  %717 = vst [vmem:[%s525 + $0x2f8] sm:$0xff] %v716
                  %v718 = vld [vmem:[%s524 + $0x540] sm:$0xff]
                  %719 = vst [vmem:[%s525 + $0x300] sm:$0xff] %v718
                  %v720 = vld [vmem:[%s524 + $0x548] sm:$0xff]
                  %721 = vst [vmem:[%s525 + $0x308] sm:$0xff] %v720
                  %v722 = vld [vmem:[%s524 + $0x550] sm:$0xff]
                  %723 = vst [vmem:[%s525 + $0x310] sm:$0xff] %v722
                  %v724 = vld [vmem:[%s524 + $0x558] sm:$0xff]
                  %725 = vst [vmem:[%s525 + $0x318] sm:$0xff] %v724
                  %v726 = vld [vmem:[%s524 + $0x560] sm:$0xff]
                  %727 = vst [vmem:[%s525 + $0x320] sm:$0xff] %v726
                  %v728 = vld [vmem:[%s524 + $0x568] sm:$0xff]
                  %729 = vst [vmem:[%s525 + $0x328] sm:$0xff] %v728
                  %v730 = vld [vmem:[%s524 + $0x570] sm:$0xff]
                  %731 = vst [vmem:[%s525 + $0x330] sm:$0xff] %v730
                  %v732 = vld [vmem:[%s524 + $0x578] sm:$0xff]
                  %733 = vst [vmem:[%s525 + $0x338] sm:$0xff] %v732
                  %v734 = vld [vmem:[%s524 + $0x580] sm:$0xff]
                  %735 = vst [vmem:[%s525 + $0x340] sm:$0xff] %v734
                  %v736 = vld [vmem:[%s524 + $0x588] sm:$0xff]
                  %737 = vst [vmem:[%s525 + $0x348] sm:$0xff] %v736
                  %v738 = vld [vmem:[%s524 + $0x590] sm:$0xff]
                  %739 = vst [vmem:[%s525 + $0x350] sm:$0xff] %v738
                  %v740 = vld [vmem:[%s524 + $0x598] sm:$0xff]
                  %741 = vst [vmem:[%s525 + $0x358] sm:$0xff] %v740
                  %v742 = vld [vmem:[%s524 + $0x6c0] sm:$0xff]
                  %743 = vst [vmem:[%s525 + $0x360] sm:$0xff] %v742
                  %v744 = vld [vmem:[%s524 + $0x6c8] sm:$0xff]
                  %745 = vst [vmem:[%s525 + $0x368] sm:$0xff] %v744
                  %v746 = vld [vmem:[%s524 + $0x6d0] sm:$0xff]
                  %747 = vst [vmem:[%s525 + $0x370] sm:$0xff] %v746
                  %v748 = vld [vmem:[%s524 + $0x6d8] sm:$0xff]
                  %749 = vst [vmem:[%s525 + $0x378] sm:$0xff] %v748
                  %v750 = vld [vmem:[%s524 + $0x6e0] sm:$0xff]
                  %751 = vst [vmem:[%s525 + $0x380] sm:$0xff] %v750
                  %v752 = vld [vmem:[%s524 + $0x6e8] sm:$0xff]
                  %753 = vst [vmem:[%s525 + $0x388] sm:$0xff] %v752
                  %v754 = vld [vmem:[%s524 + $0x6f0] sm:$0xff]
                  %755 = vst [vmem:[%s525 + $0x390] sm:$0xff] %v754
                  %v756 = vld [vmem:[%s524 + $0x6f8] sm:$0xff]
                  %757 = vst [vmem:[%s525 + $0x398] sm:$0xff] %v756
                  %v758 = vld [vmem:[%s524 + $0x700] sm:$0xff]
                  %759 = vst [vmem:[%s525 + $0x3a0] sm:$0xff] %v758
                  %v760 = vld [vmem:[%s524 + $0x708] sm:$0xff]
                  %761 = vst [vmem:[%s525 + $0x3a8] sm:$0xff] %v760
                  %v762 = vld [vmem:[%s524 + $0x710] sm:$0xff]
                  %763 = vst [vmem:[%s525 + $0x3b0] sm:$0xff] %v762
                  %v764 = vld [vmem:[%s524 + $0x718] sm:$0xff]
                  %765 = vst [vmem:[%s525 + $0x3b8] sm:$0xff] %v764
                  %v766 = vld [vmem:[%s524 + $0x720] sm:$0xff]
                  %767 = vst [vmem:[%s525 + $0x3c0] sm:$0xff] %v766
                  %v768 = vld [vmem:[%s524 + $0x728] sm:$0xff]
                  %769 = vst [vmem:[%s525 + $0x3c8] sm:$0xff] %v768
                  %v770 = vld [vmem:[%s524 + $0x730] sm:$0xff]
                  %771 = vst [vmem:[%s525 + $0x3d0] sm:$0xff] %v770
                  %v772 = vld [vmem:[%s524 + $0x738] sm:$0xff]
                  %773 = vst [vmem:[%s525 + $0x3d8] sm:$0xff] %v772
                  %v774 = vld [vmem:[%s524 + $0x740] sm:$0xff]
                  %775 = vst [vmem:[%s525 + $0x3e0] sm:$0xff] %v774
                  %v776 = vld [vmem:[%s524 + $0x748] sm:$0xff]
                  %777 = vst [vmem:[%s525 + $0x3e8] sm:$0xff] %v776
                  %v778 = vld [vmem:[%s524 + $0x750] sm:$0xff]
                  %779 = vst [vmem:[%s525 + $0x3f0] sm:$0xff] %v778
                  %v780 = vld [vmem:[%s524 + $0x758] sm:$0xff]
                  %781 = vst [vmem:[%s525 + $0x3f8] sm:$0xff] %v780
                  %v782 = vld [vmem:[%s524 + $0x760] sm:$0xff]
                  %783 = vst [vmem:[%s525 + $0x400] sm:$0xff] %v782
                  %v784 = vld [vmem:[%s524 + $0x768] sm:$0xff]
                  %785 = vst [vmem:[%s525 + $0x408] sm:$0xff] %v784
                  %v786 = vld [vmem:[%s524 + $0x770] sm:$0xff]
                  %787 = vst [vmem:[%s525 + $0x410] sm:$0xff] %v786
                  %v788 = vld [vmem:[%s524 + $0x778] sm:$0xff]
                  %789 = vst [vmem:[%s525 + $0x418] sm:$0xff] %v788
                  %v790 = vld [vmem:[%s524 + $0x780] sm:$0xff]
                  %791 = vst [vmem:[%s525 + $0x420] sm:$0xff] %v790
                  %v792 = vld [vmem:[%s524 + $0x788] sm:$0xff]
                  %793 = vst [vmem:[%s525 + $0x428] sm:$0xff] %v792
                  %v794 = vld [vmem:[%s524 + $0x790] sm:$0xff]
                  %795 = vst [vmem:[%s525 + $0x430] sm:$0xff] %v794
                  %v796 = vld [vmem:[%s524 + $0x798] sm:$0xff]
                  %797 = vst [vmem:[%s525 + $0x438] sm:$0xff] %v796
                  %v798 = vld [vmem:[%s524 + $0x7a0] sm:$0xff]
                  %799 = vst [vmem:[%s525 + $0x440] sm:$0xff] %v798
                  %v800 = vld [vmem:[%s524 + $0x7a8] sm:$0xff]
                  %801 = vst [vmem:[%s525 + $0x448] sm:$0xff] %v800
                  %v802 = vld [vmem:[%s524 + $0x7b0] sm:$0xff]
                  %803 = vst [vmem:[%s525 + $0x450] sm:$0xff] %v802
                  %v804 = vld [vmem:[%s524 + $0x7b8] sm:$0xff]
                  %805 = vst [vmem:[%s525 + $0x458] sm:$0xff] %v804
                  %v806 = vld [vmem:[%s524 + $0x7c0] sm:$0xff]
                  %807 = vst [vmem:[%s525 + $0x460] sm:$0xff] %v806
                  %v808 = vld [vmem:[%s524 + $0x7c8] sm:$0xff]
                  %809 = vst [vmem:[%s525 + $0x468] sm:$0xff] %v808
                  %v810 = vld [vmem:[%s524 + $0x7d0] sm:$0xff]
                  %811 = vst [vmem:[%s525 + $0x470] sm:$0xff] %v810
                  %v812 = vld [vmem:[%s524 + $0x7d8] sm:$0xff]
                  %813 = vst [vmem:[%s525 + $0x478] sm:$0xff] %v812
                $region68: #{cnn_forward.2} parent=62 // loop_footer
                  %s523 = sadd.s32 1, %s519
                $region69: #{cnn_forward.2} parent=62 // loop_footer_branch
                  %518 = sbr.rel target = $region65
                $region70: #{cnn_forward.2} parent=62 // loop_exit
                  _
              $region63: #{cnn_forward.2} parent=47 // pred_fallthru
                _
              // Predicated region
              $region71: #{cnn_forward.2} parent=47 // pred_check
                _
              $region72: #{cnn_forward.2} parent=47 // pred_check_branch
                %815 = sbr.rel target = $region74
              $region73: #{cnn_forward.2} parent=47 // pred_region
                _
              $region74: #{cnn_forward.2} parent=47 // pred_fallthru
                _
            $region48: #{cnn_forward.2} parent=43 // pred_fallthru
              _
            // Predicated region
            $region49: #{cnn_forward.2} parent=43 // pred_check
              _
            $region50: #{cnn_forward.2} parent=43 // pred_check_branch
              %218 = sbr.rel target = $region52
            $region51: #{cnn_forward.2} parent=43 // pred_region
              loop: start=0, step=1, limit=1
              $region53: #{cnn_forward.2} parent=51 // loop_pre_header
                _
              $region54: #{cnn_forward.2} parent=51 // loop_header
                %s221 = sphi 0, %s225
                %p222 = scmp.ge.s32.totalorder %s221, 1
                %s226 = sphi %s212, %s212
                %s227 = sphi %s209, %s209
              $region55: #{cnn_forward.2} parent=51 // loop_header_branch
                %224 = sbr.rel (%p222) target = $region59
              $region56: #{cnn_forward.2} parent=51 // loop_body
                %v228 = vld [vmem:[%s226] sm:$0xff]
                %229 = vst [vmem:[%s227] sm:$0xff] %v228
                %v230 = vld [vmem:[%s226 + $0x8] sm:$0xff]
                %231 = vst [vmem:[%s227 + $0x8] sm:$0xff] %v230
                %v232 = vld [vmem:[%s226 + $0x10] sm:$0xff]
                %233 = vst [vmem:[%s227 + $0x10] sm:$0xff] %v232
                %v234 = vld [vmem:[%s226 + $0x18] sm:$0xff]
                %235 = vst [vmem:[%s227 + $0x18] sm:$0xff] %v234
                %v236 = vld [vmem:[%s226 + $0x20] sm:$0xff]
                %237 = vst [vmem:[%s227 + $0x20] sm:$0xff] %v236
                %v238 = vld [vmem:[%s226 + $0x28] sm:$0xff]
                %239 = vst [vmem:[%s227 + $0x28] sm:$0xff] %v238
                %v240 = vld [vmem:[%s226 + $0x30] sm:$0xff]
                %241 = vst [vmem:[%s227 + $0x30] sm:$0xff] %v240
                %v242 = vld [vmem:[%s226 + $0x38] sm:$0xff]
                %243 = vst [vmem:[%s227 + $0x38] sm:$0xff] %v242
                %v244 = vld [vmem:[%s226 + $0x40] sm:$0xff]
                %245 = vst [vmem:[%s227 + $0x40] sm:$0xff] %v244
                %v246 = vld [vmem:[%s226 + $0x48] sm:$0xff]
                %247 = vst [vmem:[%s227 + $0x48] sm:$0xff] %v246
                %v248 = vld [vmem:[%s226 + $0x50] sm:$0xff]
                %249 = vst [vmem:[%s227 + $0x50] sm:$0xff] %v248
                %v250 = vld [vmem:[%s226 + $0x58] sm:$0xff]
                %251 = vst [vmem:[%s227 + $0x58] sm:$0xff] %v250
                %v252 = vld [vmem:[%s226 + $0x60] sm:$0xff]
                %253 = vst [vmem:[%s227 + $0x60] sm:$0xff] %v252
                %v254 = vld [vmem:[%s226 + $0x68] sm:$0xff]
                %255 = vst [vmem:[%s227 + $0x68] sm:$0xff] %v254
                %v256 = vld [vmem:[%s226 + $0x70] sm:$0xff]
                %257 = vst [vmem:[%s227 + $0x70] sm:$0xff] %v256
                %v258 = vld [vmem:[%s226 + $0x78] sm:$0xff]
                %259 = vst [vmem:[%s227 + $0x78] sm:$0xff] %v258
                %v260 = vld [vmem:[%s226 + $0x80] sm:$0xff]
                %261 = vst [vmem:[%s227 + $0x80] sm:$0xff] %v260
                %v262 = vld [vmem:[%s226 + $0x88] sm:$0xff]
                %263 = vst [vmem:[%s227 + $0x88] sm:$0xff] %v262
                %v264 = vld [vmem:[%s226 + $0x90] sm:$0xff]
                %265 = vst [vmem:[%s227 + $0x90] sm:$0xff] %v264
                %v266 = vld [vmem:[%s226 + $0x98] sm:$0xff]
                %267 = vst [vmem:[%s227 + $0x98] sm:$0xff] %v266
                %v268 = vld [vmem:[%s226 + $0xa0] sm:$0xff]
                %269 = vst [vmem:[%s227 + $0xa0] sm:$0xff] %v268
                %v270 = vld [vmem:[%s226 + $0xa8] sm:$0xff]
                %271 = vst [vmem:[%s227 + $0xa8] sm:$0xff] %v270
                %v272 = vld [vmem:[%s226 + $0xb0] sm:$0xff]
                %273 = vst [vmem:[%s227 + $0xb0] sm:$0xff] %v272
                %v274 = vld [vmem:[%s226 + $0xb8] sm:$0xff]
                %275 = vst [vmem:[%s227 + $0xb8] sm:$0xff] %v274
                %v276 = vld [vmem:[%s226 + $0xc0] sm:$0xff]
                %277 = vst [vmem:[%s227 + $0xc0] sm:$0xff] %v276
                %v278 = vld [vmem:[%s226 + $0xc8] sm:$0xff]
                %279 = vst [vmem:[%s227 + $0xc8] sm:$0xff] %v278
                %v280 = vld [vmem:[%s226 + $0xd0] sm:$0xff]
                %281 = vst [vmem:[%s227 + $0xd0] sm:$0xff] %v280
                %v282 = vld [vmem:[%s226 + $0xd8] sm:$0xff]
                %283 = vst [vmem:[%s227 + $0xd8] sm:$0xff] %v282
                %v284 = vld [vmem:[%s226 + $0xe0] sm:$0xff]
                %285 = vst [vmem:[%s227 + $0xe0] sm:$0xff] %v284
                %v286 = vld [vmem:[%s226 + $0xe8] sm:$0xff]
                %287 = vst [vmem:[%s227 + $0xe8] sm:$0xff] %v286
                %v288 = vld [vmem:[%s226 + $0xf0] sm:$0xff]
                %289 = vst [vmem:[%s227 + $0xf0] sm:$0xff] %v288
                %v290 = vld [vmem:[%s226 + $0xf8] sm:$0xff]
                %291 = vst [vmem:[%s227 + $0xf8] sm:$0xff] %v290
                %v292 = vld [vmem:[%s226 + $0x100] sm:$0xff]
                %293 = vst [vmem:[%s227 + $0x100] sm:$0xff] %v292
                %v294 = vld [vmem:[%s226 + $0x108] sm:$0xff]
                %295 = vst [vmem:[%s227 + $0x108] sm:$0xff] %v294
                %v296 = vld [vmem:[%s226 + $0x110] sm:$0xff]
                %297 = vst [vmem:[%s227 + $0x110] sm:$0xff] %v296
                %v298 = vld [vmem:[%s226 + $0x118] sm:$0xff]
                %299 = vst [vmem:[%s227 + $0x118] sm:$0xff] %v298
                %v300 = vld [vmem:[%s226 + $0x240] sm:$0xff]
                %301 = vst [vmem:[%s227 + $0x120] sm:$0xff] %v300
                %v302 = vld [vmem:[%s226 + $0x248] sm:$0xff]
                %303 = vst [vmem:[%s227 + $0x128] sm:$0xff] %v302
                %v304 = vld [vmem:[%s226 + $0x250] sm:$0xff]
                %305 = vst [vmem:[%s227 + $0x130] sm:$0xff] %v304
                %v306 = vld [vmem:[%s226 + $0x258] sm:$0xff]
                %307 = vst [vmem:[%s227 + $0x138] sm:$0xff] %v306
                %v308 = vld [vmem:[%s226 + $0x260] sm:$0xff]
                %309 = vst [vmem:[%s227 + $0x140] sm:$0xff] %v308
                %v310 = vld [vmem:[%s226 + $0x268] sm:$0xff]
                %311 = vst [vmem:[%s227 + $0x148] sm:$0xff] %v310
                %v312 = vld [vmem:[%s226 + $0x270] sm:$0xff]
                %313 = vst [vmem:[%s227 + $0x150] sm:$0xff] %v312
                %v314 = vld [vmem:[%s226 + $0x278] sm:$0xff]
                %315 = vst [vmem:[%s227 + $0x158] sm:$0xff] %v314
                %v316 = vld [vmem:[%s226 + $0x280] sm:$0xff]
                %317 = vst [vmem:[%s227 + $0x160] sm:$0xff] %v316
                %v318 = vld [vmem:[%s226 + $0x288] sm:$0xff]
                %319 = vst [vmem:[%s227 + $0x168] sm:$0xff] %v318
                %v320 = vld [vmem:[%s226 + $0x290] sm:$0xff]
                %321 = vst [vmem:[%s227 + $0x170] sm:$0xff] %v320
                %v322 = vld [vmem:[%s226 + $0x298] sm:$0xff]
                %323 = vst [vmem:[%s227 + $0x178] sm:$0xff] %v322
                %v324 = vld [vmem:[%s226 + $0x2a0] sm:$0xff]
                %325 = vst [vmem:[%s227 + $0x180] sm:$0xff] %v324
                %v326 = vld [vmem:[%s226 + $0x2a8] sm:$0xff]
                %327 = vst [vmem:[%s227 + $0x188] sm:$0xff] %v326
                %v328 = vld [vmem:[%s226 + $0x2b0] sm:$0xff]
                %329 = vst [vmem:[%s227 + $0x190] sm:$0xff] %v328
                %v330 = vld [vmem:[%s226 + $0x2b8] sm:$0xff]
                %331 = vst [vmem:[%s227 + $0x198] sm:$0xff] %v330
                %v332 = vld [vmem:[%s226 + $0x2c0] sm:$0xff]
                %333 = vst [vmem:[%s227 + $0x1a0] sm:$0xff] %v332
                %v334 = vld [vmem:[%s226 + $0x2c8] sm:$0xff]
                %335 = vst [vmem:[%s227 + $0x1a8] sm:$0xff] %v334
                %v336 = vld [vmem:[%s226 + $0x2d0] sm:$0xff]
                %337 = vst [vmem:[%s227 + $0x1b0] sm:$0xff] %v336
                %v338 = vld [vmem:[%s226 + $0x2d8] sm:$0xff]
                %339 = vst [vmem:[%s227 + $0x1b8] sm:$0xff] %v338
                %v340 = vld [vmem:[%s226 + $0x2e0] sm:$0xff]
                %341 = vst [vmem:[%s227 + $0x1c0] sm:$0xff] %v340
                %v342 = vld [vmem:[%s226 + $0x2e8] sm:$0xff]
                %343 = vst [vmem:[%s227 + $0x1c8] sm:$0xff] %v342
                %v344 = vld [vmem:[%s226 + $0x2f0] sm:$0xff]
                %345 = vst [vmem:[%s227 + $0x1d0] sm:$0xff] %v344
                %v346 = vld [vmem:[%s226 + $0x2f8] sm:$0xff]
                %347 = vst [vmem:[%s227 + $0x1d8] sm:$0xff] %v346
                %v348 = vld [vmem:[%s226 + $0x300] sm:$0xff]
                %349 = vst [vmem:[%s227 + $0x1e0] sm:$0xff] %v348
                %v350 = vld [vmem:[%s226 + $0x308] sm:$0xff]
                %351 = vst [vmem:[%s227 + $0x1e8] sm:$0xff] %v350
                %v352 = vld [vmem:[%s226 + $0x310] sm:$0xff]
                %353 = vst [vmem:[%s227 + $0x1f0] sm:$0xff] %v352
                %v354 = vld [vmem:[%s226 + $0x318] sm:$0xff]
                %355 = vst [vmem:[%s227 + $0x1f8] sm:$0xff] %v354
                %v356 = vld [vmem:[%s226 + $0x320] sm:$0xff]
                %357 = vst [vmem:[%s227 + $0x200] sm:$0xff] %v356
                %v358 = vld [vmem:[%s226 + $0x328] sm:$0xff]
                %359 = vst [vmem:[%s227 + $0x208] sm:$0xff] %v358
                %v360 = vld [vmem:[%s226 + $0x330] sm:$0xff]
                %361 = vst [vmem:[%s227 + $0x210] sm:$0xff] %v360
                %v362 = vld [vmem:[%s226 + $0x338] sm:$0xff]
                %363 = vst [vmem:[%s227 + $0x218] sm:$0xff] %v362
                %v364 = vld [vmem:[%s226 + $0x340] sm:$0xff]
                %365 = vst [vmem:[%s227 + $0x220] sm:$0xff] %v364
                %v366 = vld [vmem:[%s226 + $0x348] sm:$0xff]
                %367 = vst [vmem:[%s227 + $0x228] sm:$0xff] %v366
                %v368 = vld [vmem:[%s226 + $0x350] sm:$0xff]
                %369 = vst [vmem:[%s227 + $0x230] sm:$0xff] %v368
                %v370 = vld [vmem:[%s226 + $0x358] sm:$0xff]
                %371 = vst [vmem:[%s227 + $0x238] sm:$0xff] %v370
                %v372 = vld [vmem:[%s226 + $0x480] sm:$0xff]
                %373 = vst [vmem:[%s227 + $0x240] sm:$0xff] %v372
                %v374 = vld [vmem:[%s226 + $0x488] sm:$0xff]
                %375 = vst [vmem:[%s227 + $0x248] sm:$0xff] %v374
                %v376 = vld [vmem:[%s226 + $0x490] sm:$0xff]
                %377 = vst [vmem:[%s227 + $0x250] sm:$0xff] %v376
                %v378 = vld [vmem:[%s226 + $0x498] sm:$0xff]
                %379 = vst [vmem:[%s227 + $0x258] sm:$0xff] %v378
                %v380 = vld [vmem:[%s226 + $0x4a0] sm:$0xff]
                %381 = vst [vmem:[%s227 + $0x260] sm:$0xff] %v380
                %v382 = vld [vmem:[%s226 + $0x4a8] sm:$0xff]
                %383 = vst [vmem:[%s227 + $0x268] sm:$0xff] %v382
                %v384 = vld [vmem:[%s226 + $0x4b0] sm:$0xff]
                %385 = vst [vmem:[%s227 + $0x270] sm:$0xff] %v384
                %v386 = vld [vmem:[%s226 + $0x4b8] sm:$0xff]
                %387 = vst [vmem:[%s227 + $0x278] sm:$0xff] %v386
                %v388 = vld [vmem:[%s226 + $0x4c0] sm:$0xff]
                %389 = vst [vmem:[%s227 + $0x280] sm:$0xff] %v388
                %v390 = vld [vmem:[%s226 + $0x4c8] sm:$0xff]
                %391 = vst [vmem:[%s227 + $0x288] sm:$0xff] %v390
                %v392 = vld [vmem:[%s226 + $0x4d0] sm:$0xff]
                %393 = vst [vmem:[%s227 + $0x290] sm:$0xff] %v392
                %v394 = vld [vmem:[%s226 + $0x4d8] sm:$0xff]
                %395 = vst [vmem:[%s227 + $0x298] sm:$0xff] %v394
                %v396 = vld [vmem:[%s226 + $0x4e0] sm:$0xff]
                %397 = vst [vmem:[%s227 + $0x2a0] sm:$0xff] %v396
                %v398 = vld [vmem:[%s226 + $0x4e8] sm:$0xff]
                %399 = vst [vmem:[%s227 + $0x2a8] sm:$0xff] %v398
                %v400 = vld [vmem:[%s226 + $0x4f0] sm:$0xff]
                %401 = vst [vmem:[%s227 + $0x2b0] sm:$0xff] %v400
                %v402 = vld [vmem:[%s226 + $0x4f8] sm:$0xff]
                %403 = vst [vmem:[%s227 + $0x2b8] sm:$0xff] %v402
                %v404 = vld [vmem:[%s226 + $0x500] sm:$0xff]
                %405 = vst [vmem:[%s227 + $0x2c0] sm:$0xff] %v404
                %v406 = vld [vmem:[%s226 + $0x508] sm:$0xff]
                %407 = vst [vmem:[%s227 + $0x2c8] sm:$0xff] %v406
                %v408 = vld [vmem:[%s226 + $0x510] sm:$0xff]
                %409 = vst [vmem:[%s227 + $0x2d0] sm:$0xff] %v408
                %v410 = vld [vmem:[%s226 + $0x518] sm:$0xff]
                %411 = vst [vmem:[%s227 + $0x2d8] sm:$0xff] %v410
                %v412 = vld [vmem:[%s226 + $0x520] sm:$0xff]
                %413 = vst [vmem:[%s227 + $0x2e0] sm:$0xff] %v412
                %v414 = vld [vmem:[%s226 + $0x528] sm:$0xff]
                %415 = vst [vmem:[%s227 + $0x2e8] sm:$0xff] %v414
                %v416 = vld [vmem:[%s226 + $0x530] sm:$0xff]
                %417 = vst [vmem:[%s227 + $0x2f0] sm:$0xff] %v416
                %v418 = vld [vmem:[%s226 + $0x538] sm:$0xff]
                %419 = vst [vmem:[%s227 + $0x2f8] sm:$0xff] %v418
                %v420 = vld [vmem:[%s226 + $0x540] sm:$0xff]
                %421 = vst [vmem:[%s227 + $0x300] sm:$0xff] %v420
                %v422 = vld [vmem:[%s226 + $0x548] sm:$0xff]
                %423 = vst [vmem:[%s227 + $0x308] sm:$0xff] %v422
                %v424 = vld [vmem:[%s226 + $0x550] sm:$0xff]
                %425 = vst [vmem:[%s227 + $0x310] sm:$0xff] %v424
                %v426 = vld [vmem:[%s226 + $0x558] sm:$0xff]
                %427 = vst [vmem:[%s227 + $0x318] sm:$0xff] %v426
                %v428 = vld [vmem:[%s226 + $0x560] sm:$0xff]
                %429 = vst [vmem:[%s227 + $0x320] sm:$0xff] %v428
                %v430 = vld [vmem:[%s226 + $0x568] sm:$0xff]
                %431 = vst [vmem:[%s227 + $0x328] sm:$0xff] %v430
                %v432 = vld [vmem:[%s226 + $0x570] sm:$0xff]
                %433 = vst [vmem:[%s227 + $0x330] sm:$0xff] %v432
                %v434 = vld [vmem:[%s226 + $0x578] sm:$0xff]
                %435 = vst [vmem:[%s227 + $0x338] sm:$0xff] %v434
                %v436 = vld [vmem:[%s226 + $0x580] sm:$0xff]
                %437 = vst [vmem:[%s227 + $0x340] sm:$0xff] %v436
                %v438 = vld [vmem:[%s226 + $0x588] sm:$0xff]
                %439 = vst [vmem:[%s227 + $0x348] sm:$0xff] %v438
                %v440 = vld [vmem:[%s226 + $0x590] sm:$0xff]
                %441 = vst [vmem:[%s227 + $0x350] sm:$0xff] %v440
                %v442 = vld [vmem:[%s226 + $0x598] sm:$0xff]
                %443 = vst [vmem:[%s227 + $0x358] sm:$0xff] %v442
                %v444 = vld [vmem:[%s226 + $0x6c0] sm:$0xff]
                %445 = vst [vmem:[%s227 + $0x360] sm:$0xff] %v444
                %v446 = vld [vmem:[%s226 + $0x6c8] sm:$0xff]
                %447 = vst [vmem:[%s227 + $0x368] sm:$0xff] %v446
                %v448 = vld [vmem:[%s226 + $0x6d0] sm:$0xff]
                %449 = vst [vmem:[%s227 + $0x370] sm:$0xff] %v448
                %v450 = vld [vmem:[%s226 + $0x6d8] sm:$0xff]
                %451 = vst [vmem:[%s227 + $0x378] sm:$0xff] %v450
                %v452 = vld [vmem:[%s226 + $0x6e0] sm:$0xff]
                %453 = vst [vmem:[%s227 + $0x380] sm:$0xff] %v452
                %v454 = vld [vmem:[%s226 + $0x6e8] sm:$0xff]
                %455 = vst [vmem:[%s227 + $0x388] sm:$0xff] %v454
                %v456 = vld [vmem:[%s226 + $0x6f0] sm:$0xff]
                %457 = vst [vmem:[%s227 + $0x390] sm:$0xff] %v456
                %v458 = vld [vmem:[%s226 + $0x6f8] sm:$0xff]
                %459 = vst [vmem:[%s227 + $0x398] sm:$0xff] %v458
                %v460 = vld [vmem:[%s226 + $0x700] sm:$0xff]
                %461 = vst [vmem:[%s227 + $0x3a0] sm:$0xff] %v460
                %v462 = vld [vmem:[%s226 + $0x708] sm:$0xff]
                %463 = vst [vmem:[%s227 + $0x3a8] sm:$0xff] %v462
                %v464 = vld [vmem:[%s226 + $0x710] sm:$0xff]
                %465 = vst [vmem:[%s227 + $0x3b0] sm:$0xff] %v464
                %v466 = vld [vmem:[%s226 + $0x718] sm:$0xff]
                %467 = vst [vmem:[%s227 + $0x3b8] sm:$0xff] %v466
                %v468 = vld [vmem:[%s226 + $0x720] sm:$0xff]
                %469 = vst [vmem:[%s227 + $0x3c0] sm:$0xff] %v468
                %v470 = vld [vmem:[%s226 + $0x728] sm:$0xff]
                %471 = vst [vmem:[%s227 + $0x3c8] sm:$0xff] %v470
                %v472 = vld [vmem:[%s226 + $0x730] sm:$0xff]
                %473 = vst [vmem:[%s227 + $0x3d0] sm:$0xff] %v472
                %v474 = vld [vmem:[%s226 + $0x738] sm:$0xff]
                %475 = vst [vmem:[%s227 + $0x3d8] sm:$0xff] %v474
                %v476 = vld [vmem:[%s226 + $0x740] sm:$0xff]
                %477 = vst [vmem:[%s227 + $0x3e0] sm:$0xff] %v476
                %v478 = vld [vmem:[%s226 + $0x748] sm:$0xff]
                %479 = vst [vmem:[%s227 + $0x3e8] sm:$0xff] %v478
                %v480 = vld [vmem:[%s226 + $0x750] sm:$0xff]
                %481 = vst [vmem:[%s227 + $0x3f0] sm:$0xff] %v480
                %v482 = vld [vmem:[%s226 + $0x758] sm:$0xff]
                %483 = vst [vmem:[%s227 + $0x3f8] sm:$0xff] %v482
                %v484 = vld [vmem:[%s226 + $0x760] sm:$0xff]
                %485 = vst [vmem:[%s227 + $0x400] sm:$0xff] %v484
                %v486 = vld [vmem:[%s226 + $0x768] sm:$0xff]
                %487 = vst [vmem:[%s227 + $0x408] sm:$0xff] %v486
                %v488 = vld [vmem:[%s226 + $0x770] sm:$0xff]
                %489 = vst [vmem:[%s227 + $0x410] sm:$0xff] %v488
                %v490 = vld [vmem:[%s226 + $0x778] sm:$0xff]
                %491 = vst [vmem:[%s227 + $0x418] sm:$0xff] %v490
                %v492 = vld [vmem:[%s226 + $0x780] sm:$0xff]
                %493 = vst [vmem:[%s227 + $0x420] sm:$0xff] %v492
                %v494 = vld [vmem:[%s226 + $0x788] sm:$0xff]
                %495 = vst [vmem:[%s227 + $0x428] sm:$0xff] %v494
                %v496 = vld [vmem:[%s226 + $0x790] sm:$0xff]
                %497 = vst [vmem:[%s227 + $0x430] sm:$0xff] %v496
                %v498 = vld [vmem:[%s226 + $0x798] sm:$0xff]
                %499 = vst [vmem:[%s227 + $0x438] sm:$0xff] %v498
                %v500 = vld [vmem:[%s226 + $0x7a0] sm:$0xff]
                %501 = vst [vmem:[%s227 + $0x440] sm:$0xff] %v500
                %v502 = vld [vmem:[%s226 + $0x7a8] sm:$0xff]
                %503 = vst [vmem:[%s227 + $0x448] sm:$0xff] %v502
                %v504 = vld [vmem:[%s226 + $0x7b0] sm:$0xff]
                %505 = vst [vmem:[%s227 + $0x450] sm:$0xff] %v504
                %v506 = vld [vmem:[%s226 + $0x7b8] sm:$0xff]
                %507 = vst [vmem:[%s227 + $0x458] sm:$0xff] %v506
                %v508 = vld [vmem:[%s226 + $0x7c0] sm:$0xff]
                %509 = vst [vmem:[%s227 + $0x460] sm:$0xff] %v508
                %v510 = vld [vmem:[%s226 + $0x7c8] sm:$0xff]
                %511 = vst [vmem:[%s227 + $0x468] sm:$0xff] %v510
                %v512 = vld [vmem:[%s226 + $0x7d0] sm:$0xff]
                %513 = vst [vmem:[%s227 + $0x470] sm:$0xff] %v512
                %v514 = vld [vmem:[%s226 + $0x7d8] sm:$0xff]
                %515 = vst [vmem:[%s227 + $0x478] sm:$0xff] %v514
              $region57: #{cnn_forward.2} parent=51 // loop_footer
                %s225 = sadd.s32 1, %s221
              $region58: #{cnn_forward.2} parent=51 // loop_footer_branch
                %220 = sbr.rel target = $region54
              $region59: #{cnn_forward.2} parent=51 // loop_exit
                _
            $region52: #{cnn_forward.2} parent=43 // pred_fallthru
              _
          $region44: #{cnn_forward.2} parent=39 // pred_fallthru
            _
          %816 = vnop
        $region40: #{cnn_forward.2} parent=35 // pred_fallthru
          _
      $region36: #{cnn_forward.2} parent=5 // pred_fallthru
        _
      %p817 = scmp.le.s32.totalorder 1, %s12
      %p818 = scmp.lt.s32.totalorder %s12, 3
      %p819 = pnand %p817, %p818
      %p820 = pneg %p819
      // Predicated region
      $region75: #{cnn_forward.2} parent=5 // pred_check
        _
      $region76: #{cnn_forward.2} parent=5 // pred_check_branch
        %822 = sbr.rel (%p819) target = $region78
      $region77: #{cnn_forward.2} parent=5 // pred_region
        %s823 = ssub.s32 %s12, 1
        %s824 = sand.u32 %s25, 1
        %s825 = sand.u32 %s25, 1
        %s826 = smul.addr %s825, 1152
        %s827 = scalar_lea.vmem [#allocation3], %s826
        // Predicated region
        $region79: #{cnn_forward.2} parent=77 // pred_check
          %p828 = pneg %p38
        $region80: #{cnn_forward.2} parent=77 // pred_check_branch
          %830 = sbr.rel (%p828) target = $region82
        $region81: #{cnn_forward.2} parent=77 // pred_region
          _
        $region82: #{cnn_forward.2} parent=77 // pred_fallthru
          _
        %s831 = sand.u32 %s25, 1
        %s832 = sand.u32 %s25, 1
        %s833 = smul.addr %s832, 1152
        %s834 = scalar_lea.vmem [#allocation3], %s833
        %p835 = pneg %p38
        %p836 = pneg %p35
        %p837 = pneg %p59
        %p838 = pneg %p56
        %p839 = pneg %p80
        %p840 = pneg %p77
        %p841 = pneg %p101
        %p842 = pneg %p98
        %p843 = pneg %p122
        %p844 = pneg %p119
        %p845 = pneg %p143
        %p846 = pneg %p140
        %p847 = pneg %p169
        %p848 = pneg %p166
        %p849 = scmp.lt.s32.totalorder %s17, 1
        %s850 = scalar_select %p849, %s17, 1
        %s851 = smul.addr %s850, 7
        %s852 = smul.addr %s851, 8
        %s853 = scalar_lea.vmem %s6, %s852
        %p854 = scmp.lt.s32.totalorder %s17, 1
        %s855 = scalar_select %p854, %s17, 1
        %s856 = smul.addr %s855, 7
        %s857 = smul.addr %s856, 8
        %s858 = scalar_lea.vmem %s6, %s857
        %v859 = vld [vmem:[%s827] sm:$0xff]
        %v860 = vld [vmem:[%s827 + $0x8] sm:$0xff]
        %v861 = vld [vmem:[%s827 + $0x10] sm:$0xff]
        %v862 = vld [vmem:[%s827 + $0x18] sm:$0xff]
        %v863 = vld [vmem:[%s827 + $0x20] sm:$0xff]
        %v864 = vld [vmem:[%s827 + $0x28] sm:$0xff]
        %v865 = vld [vmem:[%s827 + $0x30] sm:$0xff]
        %v866 = vld [vmem:[%s827 + $0x38] sm:$0xff]
        %v867 = vld [vmem:[%s827 + $0x40] sm:$0xff]
        %v868 = vld [vmem:[%s827 + $0x48] sm:$0xff]
        %v869 = vld [vmem:[%s827 + $0x50] sm:$0xff]
        %v870 = vld [vmem:[%s827 + $0x58] sm:$0xff]
        %v871 = vld [vmem:[%s827 + $0x60] sm:$0xff]
        %v872 = vld [vmem:[%s827 + $0x68] sm:$0xff]
        %v873 = vld [vmem:[%s827 + $0x70] sm:$0xff]
        %v874 = vld [vmem:[%s827 + $0x78] sm:$0xff]
        %v875 = vld [vmem:[%s827 + $0x80] sm:$0xff]
        %v876 = vld [vmem:[%s827 + $0x88] sm:$0xff]
        %v877 = vld [vmem:[%s827 + $0x90] sm:$0xff]
        %v878 = vld [vmem:[%s827 + $0x98] sm:$0xff]
        %v879 = vld [vmem:[%s827 + $0xa0] sm:$0xff]
        %v880 = vld [vmem:[%s827 + $0xa8] sm:$0xff]
        %v881 = vld [vmem:[%s827 + $0xb0] sm:$0xff]
        %v882 = vld [vmem:[%s827 + $0xb8] sm:$0xff]
        %v883 = vld [vmem:[%s827 + $0xc0] sm:$0xff]
        %v884 = vld [vmem:[%s827 + $0xc8] sm:$0xff]
        %v885 = vld [vmem:[%s827 + $0xd0] sm:$0xff]
        %v886 = vld [vmem:[%s827 + $0xd8] sm:$0xff]
        %v887 = vld [vmem:[%s827 + $0xe0] sm:$0xff]
        %v888 = vld [vmem:[%s827 + $0xe8] sm:$0xff]
        %v889 = vld [vmem:[%s827 + $0xf0] sm:$0xff]
        %v890 = vld [vmem:[%s827 + $0xf8] sm:$0xff]
        %v891 = vld [vmem:[%s827 + $0x100] sm:$0xff]
        %v892 = vld [vmem:[%s827 + $0x108] sm:$0xff]
        %v893 = vld [vmem:[%s827 + $0x110] sm:$0xff]
        %v894 = vld [vmem:[%s827 + $0x118] sm:$0xff]
        %v895 = vld [vmem:[%s827 + $0x120] sm:$0xff]
        %v896 = vld [vmem:[%s827 + $0x128] sm:$0xff]
        %v897 = vld [vmem:[%s827 + $0x130] sm:$0xff]
        %v898 = vld [vmem:[%s827 + $0x138] sm:$0xff]
        %v899 = vld [vmem:[%s827 + $0x140] sm:$0xff]
        %v900 = vld [vmem:[%s827 + $0x148] sm:$0xff]
        %v901 = vld [vmem:[%s827 + $0x150] sm:$0xff]
        %v902 = vld [vmem:[%s827 + $0x158] sm:$0xff]
        %v903 = vld [vmem:[%s827 + $0x160] sm:$0xff]
        %v904 = vld [vmem:[%s827 + $0x168] sm:$0xff]
        %v905 = vld [vmem:[%s827 + $0x170] sm:$0xff]
        %v906 = vld [vmem:[%s827 + $0x178] sm:$0xff]
        %v907 = vld [vmem:[%s827 + $0x180] sm:$0xff]
        %v908 = vld [vmem:[%s827 + $0x188] sm:$0xff]
        %v909 = vld [vmem:[%s827 + $0x190] sm:$0xff]
        %v910 = vld [vmem:[%s827 + $0x198] sm:$0xff]
        %v911 = vld [vmem:[%s827 + $0x1a0] sm:$0xff]
        %v912 = vld [vmem:[%s827 + $0x1a8] sm:$0xff]
        %v913 = vld [vmem:[%s827 + $0x1b0] sm:$0xff]
        %v914 = vld [vmem:[%s827 + $0x1b8] sm:$0xff]
        %v915 = vld [vmem:[%s827 + $0x1c0] sm:$0xff]
        %v916 = vld [vmem:[%s827 + $0x1c8] sm:$0xff]
        %v917 = vld [vmem:[%s827 + $0x1d0] sm:$0xff]
        %v918 = vld [vmem:[%s827 + $0x1d8] sm:$0xff]
        %v919 = vld [vmem:[%s827 + $0x1e0] sm:$0xff]
        %v920 = vld [vmem:[%s827 + $0x1e8] sm:$0xff]
        %v921 = vld [vmem:[%s827 + $0x1f0] sm:$0xff]
        %v922 = vld [vmem:[%s827 + $0x1f8] sm:$0xff]
        %v923 = vld [vmem:[%s827 + $0x200] sm:$0xff]
        %v924 = vld [vmem:[%s827 + $0x208] sm:$0xff]
        %v925 = vld [vmem:[%s827 + $0x210] sm:$0xff]
        %v926 = vld [vmem:[%s827 + $0x218] sm:$0xff]
        %v927 = vld [vmem:[%s827 + $0x220] sm:$0xff]
        %v928 = vld [vmem:[%s827 + $0x228] sm:$0xff]
        %v929 = vld [vmem:[%s827 + $0x230] sm:$0xff]
        %v930 = vld [vmem:[%s827 + $0x238] sm:$0xff]
        %v931 = vld [vmem:[%s827 + $0x240] sm:$0xff]
        %v932 = vld [vmem:[%s827 + $0x248] sm:$0xff]
        %v933 = vld [vmem:[%s827 + $0x250] sm:$0xff]
        %v934 = vld [vmem:[%s827 + $0x258] sm:$0xff]
        %v935 = vld [vmem:[%s827 + $0x260] sm:$0xff]
        %v936 = vld [vmem:[%s827 + $0x268] sm:$0xff]
        %v937 = vld [vmem:[%s827 + $0x270] sm:$0xff]
        %v938 = vld [vmem:[%s827 + $0x278] sm:$0xff]
        %v939 = vld [vmem:[%s827 + $0x280] sm:$0xff]
        %v940 = vld [vmem:[%s827 + $0x288] sm:$0xff]
        %v941 = vld [vmem:[%s827 + $0x290] sm:$0xff]
        %v942 = vld [vmem:[%s827 + $0x298] sm:$0xff]
        %v943 = vld [vmem:[%s827 + $0x2a0] sm:$0xff]
        %v944 = vld [vmem:[%s827 + $0x2a8] sm:$0xff]
        %v945 = vld [vmem:[%s827 + $0x2b0] sm:$0xff]
        %v946 = vld [vmem:[%s827 + $0x2b8] sm:$0xff]
        %v947 = vld [vmem:[%s827 + $0x2c0] sm:$0xff]
        %v948 = vld [vmem:[%s827 + $0x2c8] sm:$0xff]
        %v949 = vld [vmem:[%s827 + $0x2d0] sm:$0xff]
        %v950 = vld [vmem:[%s827 + $0x2d8] sm:$0xff]
        %v951 = vld [vmem:[%s827 + $0x2e0] sm:$0xff]
        %v952 = vld [vmem:[%s827 + $0x2e8] sm:$0xff]
        %v953 = vld [vmem:[%s827 + $0x2f0] sm:$0xff]
        %v954 = vld [vmem:[%s827 + $0x2f8] sm:$0xff]
        %v955 = vld [vmem:[%s827 + $0x300] sm:$0xff]
        %v956 = vld [vmem:[%s827 + $0x308] sm:$0xff]
        %v957 = vld [vmem:[%s827 + $0x310] sm:$0xff]
        %v958 = vld [vmem:[%s827 + $0x318] sm:$0xff]
        %v959 = vld [vmem:[%s827 + $0x320] sm:$0xff]
        %v960 = vld [vmem:[%s827 + $0x328] sm:$0xff]
        %v961 = vld [vmem:[%s827 + $0x330] sm:$0xff]
        %v962 = vld [vmem:[%s827 + $0x338] sm:$0xff]
        %v963 = vld [vmem:[%s827 + $0x340] sm:$0xff]
        %v964 = vld [vmem:[%s827 + $0x348] sm:$0xff]
        %v965 = vld [vmem:[%s827 + $0x350] sm:$0xff]
        %v966 = vld [vmem:[%s827 + $0x358] sm:$0xff]
        %v967 = vld [vmem:[%s827 + $0x360] sm:$0xff]
        %v968 = vld [vmem:[%s827 + $0x368] sm:$0xff]
        %v969 = vld [vmem:[%s827 + $0x370] sm:$0xff]
        %v970 = vld [vmem:[%s827 + $0x378] sm:$0xff]
        %v971 = vld [vmem:[%s827 + $0x380] sm:$0xff]
        %v972 = vld [vmem:[%s827 + $0x388] sm:$0xff]
        %v973 = vld [vmem:[%s827 + $0x390] sm:$0xff]
        %v974 = vld [vmem:[%s827 + $0x398] sm:$0xff]
        %v975 = vld [vmem:[%s827 + $0x3a0] sm:$0xff]
        %v976 = vld [vmem:[%s827 + $0x3a8] sm:$0xff]
        %v977 = vld [vmem:[%s827 + $0x3b0] sm:$0xff]
        %v978 = vld [vmem:[%s827 + $0x3b8] sm:$0xff]
        %v979 = vld [vmem:[%s827 + $0x3c0] sm:$0xff]
        %v980 = vld [vmem:[%s827 + $0x3c8] sm:$0xff]
        %v981 = vld [vmem:[%s827 + $0x3d0] sm:$0xff]
        %v982 = vld [vmem:[%s827 + $0x3d8] sm:$0xff]
        %v983 = vld [vmem:[%s827 + $0x3e0] sm:$0xff]
        %v984 = vld [vmem:[%s827 + $0x3e8] sm:$0xff]
        %v985 = vld [vmem:[%s827 + $0x3f0] sm:$0xff]
        %v986 = vld [vmem:[%s827 + $0x3f8] sm:$0xff]
        %v987 = vld [vmem:[%s827 + $0x400] sm:$0xff]
        %v988 = vld [vmem:[%s827 + $0x408] sm:$0xff]
        %v989 = vld [vmem:[%s827 + $0x410] sm:$0xff]
        %v990 = vld [vmem:[%s827 + $0x418] sm:$0xff]
        %v991 = vld [vmem:[%s827 + $0x420] sm:$0xff]
        %v992 = vld [vmem:[%s827 + $0x428] sm:$0xff]
        %v993 = vld [vmem:[%s827 + $0x430] sm:$0xff]
        %v994 = vld [vmem:[%s827 + $0x438] sm:$0xff]
        %v995 = vld [vmem:[%s827 + $0x440] sm:$0xff]
        %v996 = vld [vmem:[%s827 + $0x448] sm:$0xff]
        %v997 = vld [vmem:[%s827 + $0x450] sm:$0xff]
        %v998 = vld [vmem:[%s827 + $0x458] sm:$0xff]
        %v999 = vld [vmem:[%s827 + $0x460] sm:$0xff]
        %v1000 = vld [vmem:[%s827 + $0x468] sm:$0xff]
        %v1001 = vld [vmem:[%s827 + $0x470] sm:$0xff]
        %v1002 = vld [vmem:[%s827 + $0x478] sm:$0xff]
        %v1003 = vld [vmem:[%s2] sm:$0xff]
        %v1004 = vld [vmem:[%s2 + $0x8] sm:$0x1]
        %v1005 = vld [vmem:[%s3] sm:$0x1]
        %v1007 = vlaneseq
        %v1008 = vshrl.u32 %v1007, 7
        %v1009 = vsub.s32 0, %v1008
        %v1010 = vrot.slane %v1005, %v1009
        %vm1012 = vcmask 72704
        %v1014 = vsel %vm1012, %v859, 0
        %v1017 = vsel %vm1012, %v860, 0
        %v1020 = vsel %vm1012, %v861, 0
        %v1023 = vsel %vm1012, %v862, 0
        %v1026 = vsel %vm1012, %v863, 0
        %v1029 = vsel %vm1012, %v864, 0
        %v1032 = vsel %vm1012, %v865, 0
        %v1035 = vsel %vm1012, %v866, 0
        %v1038 = vsel %vm1012, %v867, 0
        %v1041 = vsel %vm1012, %v868, 0
        %v1044 = vsel %vm1012, %v869, 0
        %v1047 = vsel %vm1012, %v870, 0
        %v1050 = vsel %vm1012, %v871, 0
        %v1053 = vsel %vm1012, %v872, 0
        %v1056 = vsel %vm1012, %v873, 0
        %v1059 = vsel %vm1012, %v874, 0
        %v1062 = vsel %vm1012, %v875, 0
        %v1065 = vsel %vm1012, %v876, 0
        %v1068 = vsel %vm1012, %v877, 0
        %v1071 = vsel %vm1012, %v878, 0
        %v1074 = vsel %vm1012, %v879, 0
        %v1077 = vsel %vm1012, %v880, 0
        %v1080 = vsel %vm1012, %v881, 0
        %v1083 = vsel %vm1012, %v882, 0
        %v1086 = vsel %vm1012, %v883, 0
        %v1089 = vsel %vm1012, %v884, 0
        %v1092 = vsel %vm1012, %v885, 0
        %v1095 = vsel %vm1012, %v886, 0
        %v1098 = vsel %vm1012, %v887, 0
        %v1101 = vsel %vm1012, %v888, 0
        %v1104 = vsel %vm1012, %v889, 0
        %v1107 = vsel %vm1012, %v890, 0
        %v1110 = vsel %vm1012, %v891, 0
        %v1113 = vsel %vm1012, %v892, 0
        %v1116 = vsel %vm1012, %v893, 0
        %v1119 = vsel %vm1012, %v894, 0
        %v1122 = vsel %vm1012, %v895, 0
        %v1125 = vsel %vm1012, %v896, 0
        %v1128 = vsel %vm1012, %v897, 0
        %v1131 = vsel %vm1012, %v898, 0
        %v1134 = vsel %vm1012, %v899, 0
        %v1137 = vsel %vm1012, %v900, 0
        %v1140 = vsel %vm1012, %v901, 0
        %v1143 = vsel %vm1012, %v902, 0
        %v1146 = vsel %vm1012, %v903, 0
        %v1149 = vsel %vm1012, %v904, 0
        %v1152 = vsel %vm1012, %v905, 0
        %v1155 = vsel %vm1012, %v906, 0
        %v1158 = vsel %vm1012, %v907, 0
        %v1161 = vsel %vm1012, %v908, 0
        %v1164 = vsel %vm1012, %v909, 0
        %v1167 = vsel %vm1012, %v910, 0
        %v1170 = vsel %vm1012, %v911, 0
        %v1173 = vsel %vm1012, %v912, 0
        %v1176 = vsel %vm1012, %v913, 0
        %v1179 = vsel %vm1012, %v914, 0
        %v1182 = vsel %vm1012, %v915, 0
        %v1185 = vsel %vm1012, %v916, 0
        %v1188 = vsel %vm1012, %v917, 0
        %v1191 = vsel %vm1012, %v918, 0
        %v1194 = vsel %vm1012, %v919, 0
        %v1197 = vsel %vm1012, %v920, 0
        %v1200 = vsel %vm1012, %v921, 0
        %v1203 = vsel %vm1012, %v922, 0
        %v1206 = vsel %vm1012, %v923, 0
        %v1209 = vsel %vm1012, %v924, 0
        %v1212 = vsel %vm1012, %v925, 0
        %v1215 = vsel %vm1012, %v926, 0
        %v1218 = vsel %vm1012, %v927, 0
        %v1221 = vsel %vm1012, %v928, 0
        %v1224 = vsel %vm1012, %v929, 0
        %v1227 = vsel %vm1012, %v930, 0
        %v1230 = vsel %vm1012, %v931, 0
        %v1233 = vsel %vm1012, %v932, 0
        %v1236 = vsel %vm1012, %v933, 0
        %v1239 = vsel %vm1012, %v934, 0
        %v1242 = vsel %vm1012, %v935, 0
        %v1245 = vsel %vm1012, %v936, 0
        %v1248 = vsel %vm1012, %v937, 0
        %v1251 = vsel %vm1012, %v938, 0
        %v1254 = vsel %vm1012, %v939, 0
        %v1257 = vsel %vm1012, %v940, 0
        %v1260 = vsel %vm1012, %v941, 0
        %v1263 = vsel %vm1012, %v942, 0
        %v1266 = vsel %vm1012, %v943, 0
        %v1269 = vsel %vm1012, %v944, 0
        %v1272 = vsel %vm1012, %v945, 0
        %v1275 = vsel %vm1012, %v946, 0
        %v1278 = vsel %vm1012, %v947, 0
        %v1281 = vsel %vm1012, %v948, 0
        %v1284 = vsel %vm1012, %v949, 0
        %v1287 = vsel %vm1012, %v950, 0
        %v1290 = vsel %vm1012, %v951, 0
        %v1293 = vsel %vm1012, %v952, 0
        %v1296 = vsel %vm1012, %v953, 0
        %v1299 = vsel %vm1012, %v954, 0
        %v1302 = vsel %vm1012, %v955, 0
        %v1305 = vsel %vm1012, %v956, 0
        %v1308 = vsel %vm1012, %v957, 0
        %v1311 = vsel %vm1012, %v958, 0
        %v1314 = vsel %vm1012, %v959, 0
        %v1317 = vsel %vm1012, %v960, 0
        %v1320 = vsel %vm1012, %v961, 0
        %v1323 = vsel %vm1012, %v962, 0
        %v1326 = vsel %vm1012, %v963, 0
        %v1329 = vsel %vm1012, %v964, 0
        %v1332 = vsel %vm1012, %v965, 0
        %v1335 = vsel %vm1012, %v966, 0
        %v1338 = vsel %vm1012, %v967, 0
        %v1341 = vsel %vm1012, %v968, 0
        %v1344 = vsel %vm1012, %v969, 0
        %v1347 = vsel %vm1012, %v970, 0
        %v1350 = vsel %vm1012, %v971, 0
        %v1353 = vsel %vm1012, %v972, 0
        %v1356 = vsel %vm1012, %v973, 0
        %v1359 = vsel %vm1012, %v974, 0
        %v1362 = vsel %vm1012, %v975, 0
        %v1365 = vsel %vm1012, %v976, 0
        %v1368 = vsel %vm1012, %v977, 0
        %v1371 = vsel %vm1012, %v978, 0
        %v1374 = vsel %vm1012, %v979, 0
        %v1377 = vsel %vm1012, %v980, 0
        %v1380 = vsel %vm1012, %v981, 0
        %v1383 = vsel %vm1012, %v982, 0
        %v1386 = vsel %vm1012, %v983, 0
        %v1389 = vsel %vm1012, %v984, 0
        %v1392 = vsel %vm1012, %v985, 0
        %v1395 = vsel %vm1012, %v986, 0
        %v1398 = vsel %vm1012, %v987, 0
        %v1401 = vsel %vm1012, %v988, 0
        %v1404 = vsel %vm1012, %v989, 0
        %v1407 = vsel %vm1012, %v990, 0
        %v1410 = vsel %vm1012, %v991, 0
        %v1413 = vsel %vm1012, %v992, 0
        %v1416 = vsel %vm1012, %v993, 0
        %v1419 = vsel %vm1012, %v994, 0
        %v1422 = vsel %vm1012, %v995, 0
        %v1425 = vsel %vm1012, %v996, 0
        %v1428 = vsel %vm1012, %v997, 0
        %v1431 = vsel %vm1012, %v998, 0
        %v1434 = vsel %vm1012, %v999, 0
        %v1437 = vsel %vm1012, %v1000, 0
        %v1440 = vsel %vm1012, %v1001, 0
        %v1443 = vsel %vm1012, %v1002, 0
        %vm1445 = vcmask 1040384
        %v1447 = vsel %vm1445, %v1004, 0
        %1449 = vmatprep.subr.mxu0 0.0
        %1450 = vmatpush1.msra.mxu0 %v1003
        %1451 = vmatprep.subr.mxu0 0.0
        %1452 = vmatpush1.msra.mxu0 %v1447
        %1453 = vmatprep.subr.mxu0 0.0
        %1454 = vmatpush1.msra.mxu0 0.0
        %1455 = vmatprep.subr.mxu0 0.0
        %1456 = vmatpush1.msra.mxu0 0.0
        %1457 = vmatprep.subr.mxu0 0.0
        %1458 = vmatpush1.msra.mxu0 0.0
        %1459 = vmatprep.subr.mxu0 0.0
        %1460 = vmatpush1.msra.mxu0 0.0
        %1461 = vmatprep.subr.mxu0 0.0
        %1462 = vmatpush1.msra.mxu0 0.0
        %1463 = vmatprep.subr.mxu0 0.0
        %1464 = vmatpush1.msra.mxu0 0.0
        %1465 = vmatprep.subr.mxu0 0.0
        %1466 = vmatpush1.msra.mxu0 0.0
        %1467 = vmatprep.subr.mxu0 0.0
        %1468 = vmatpush1.msra.mxu0 0.0
        %1469 = vmatprep.subr.mxu0 0.0
        %1470 = vmatpush1.msra.mxu0 0.0
        %1471 = vmatprep.subr.mxu0 0.0
        %1472 = vmatpush1.msra.mxu0 0.0
        %1473 = vmatprep.subr.mxu0 0.0
        %1474 = vmatpush1.msra.mxu0 0.0
        %1475 = vmatprep.subr.mxu0 0.0
        %1476 = vmatpush1.msra.mxu0 0.0
        %1477 = vmatprep.subr.mxu0 0.0
        %1478 = vmatpush1.msra.mxu0 0.0
        %1479 = vmatprep.subr.mxu0 0.0
        %1480 = vmatpush1.msra.mxu0 0.0
        %1481 = vmatprep.subr.mxu0 0.0
        %1482 = vmatpush1.msra.mxu0 0.0
        %1483 = vmatprep.subr.mxu0 0.0
        %1484 = vmatpush1.msra.mxu0 0.0
        %1485 = vmatprep.subr.mxu0 0.0
        %1486 = vmatpush1.msra.mxu0 0.0
        %1487 = vmatprep.subr.mxu0 0.0
        %1488 = vmatpush1.msra.mxu0 0.0
        %1489 = vmatprep.subr.mxu0 0.0
        %1490 = vmatpush1.msra.mxu0 0.0
        %1491 = vmatprep.subr.mxu0 0.0
        %1492 = vmatpush1.msra.mxu0 0.0
        %1493 = vmatprep.subr.mxu0 0.0
        %1494 = vmatpush1.msra.mxu0 0.0
        %1495 = vmatprep.subr.mxu0 0.0
        %1496 = vmatpush1.msra.mxu0 0.0
        %1497 = vmatprep.subr.mxu0 0.0
        %1498 = vmatpush1.msra.mxu0 0.0
        %1499 = vmatprep.subr.mxu0 0.0
        %1500 = vmatpush1.msra.mxu0 0.0
        %1501 = vmatprep.subr.mxu0 0.0
        %1502 = vmatpush1.msra.mxu0 0.0
        %1503 = vmatprep.subr.mxu0 0.0
        %1504 = vmatpush1.msra.mxu0 0.0
        %1505 = vmatprep.subr.mxu0 0.0
        %1506 = vmatpush1.msra.mxu0 0.0
        %1507 = vmatprep.subr.mxu0 0.0
        %1508 = vmatpush1.msra.mxu0 0.0
        %1509 = vmatprep.subr.mxu0 0.0
        %1510 = vmatpush1.msra.mxu0 0.0
        %1511 = vmatprep.subr.mxu0 0.0
        %1512 = vmatpush1.msra.mxu0 0.0
        %1513 = vmatprep.mubr.f32.mxu0 0.0
        %1514 = vmatmul.mubr.f32.gmra.mrb[0].mxu0 %v1014
        %v1515 = vpop.f32.mrb[0].mxu0
        %v1516 = vadd.f32 %v1010, %v1515
        %v1517 = vpop.f32.mrb[0].mxu0
        %1518 = vmatprep.mubr.f32.mxu0 0.0
        %1519 = vmatmul.mubr.f32.gmra.mrb[0].mxu0 %v1017
        %v1520 = vpop.f32.mrb[0].mxu0
        %v1521 = vadd.f32 %v1010, %v1520
        %v1522 = vpop.f32.mrb[0].mxu0
        %1523 = vmatprep.mubr.f32.mxu0 0.0
        %1524 = vmatmul.mubr.f32.gmra.mrb[0].mxu0 %v1020
        %v1525 = vpop.f32.mrb[0].mxu0
        %v1526 = vadd.f32 %v1010, %v1525
        %v1527 = vpop.f32.mrb[0].mxu0
        %1528 = vmatprep.mubr.f32.mxu0 0.0
        %1529 = vmatmul.mubr.f32.gmra.mrb[0].mxu0 %v1023
        %v1530 = vpop.f32.mrb[0].mxu0
        %v1531 = vadd.f32 %v1010, %v1530
        %v1532 = vpop.f32.mrb[0].mxu0
        %1533 = vmatprep.mubr.f32.mxu0 0.0
        %1534 = vmatmul.mubr.f32.gmra.mrb[0].mxu0 %v1026
        %v1535 = vpop.f32.mrb[0].mxu0
        %v1536 = vadd.f32 %v1010, %v1535
        %v1537 = vpop.f32.mrb[0].mxu0
        %1538 = vmatprep.mubr.f32.mxu0 0.0
        %1539 = vmatmul.mubr.f32.gmra.mrb[0].mxu0 %v1029
        %v1540 = vpop.f32.mrb[0].mxu0
        %v1541 = vadd.f32 %v1010, %v1540
        %v1542 = vpop.f32.mrb[0].mxu0
        %1543 = vmatprep.mubr.f32.mxu0 0.0
        %1544 = vmatmul.mubr.f32.gmra.mrb[0].mxu0 %v1032
        %v1545 = vpop.f32.mrb[0].mxu0
        %v1546 = vadd.f32 %v1010, %v1545
        %v1547 = vpop.f32.mrb[0].mxu0
        %1548 = vmatprep.mubr.f32.mxu0 0.0
        %1549 = vmatmul.mubr.f32.gmra.mrb[0].mxu0 %v1035
        %v1550 = vpop.f32.mrb[0].mxu0
        %v1551 = vadd.f32 %v1010, %v1550
        %v1552 = vpop.f32.mrb[0].mxu0
        %1553 = vmatprep.mubr.f32.mxu0 0.0
        %1554 = vmatmul.mubr.f32.gmra.mrb[0].mxu0 %v1038
        %v1555 = vpop.f32.mrb[0].mxu0
        %v1556 = vadd.f32 %v1010, %v1555
        %v1557 = vpop.f32.mrb[0].mxu0
        %1558 = vmatprep.mubr.f32.mxu0 0.0
        %1559 = vmatmul.mubr.f32.gmra.mrb[0].mxu0 %v1041
        %v1560 = vpop.f32.mrb[0].mxu0
        %v1561 = vadd.f32 %v1010, %v1560
        %v1562 = vpop.f32.mrb[0].mxu0
        %1563 = vmatprep.mubr.f32.mxu0 0.0
        %1564 = vmatmul.mubr.f32.gmra.mrb[0].mxu0 %v1044
        %v1565 = vpop.f32.mrb[0].mxu0
        %v1566 = vadd.f32 %v1010, %v1565
        %v1567 = vpop.f32.mrb[0].mxu0
        %1568 = vmatprep.mubr.f32.mxu0 0.0
        %1569 = vmatmul.mubr.f32.gmra.mrb[0].mxu0 %v1047
        %v1570 = vpop.f32.mrb[0].mxu0
        %v1571 = vadd.f32 %v1010, %v1570
        %v1572 = vpop.f32.mrb[0].mxu0
        %1573 = vmatprep.mubr.f32.mxu0 0.0
        %1574 = vmatmul.mubr.f32.gmra.mrb[0].mxu0 %v1050
        %v1575 = vpop.f32.mrb[0].mxu0
        %v1576 = vadd.f32 %v1010, %v1575
        %v1577 = vpop.f32.mrb[0].mxu0
        %1578 = vmatprep.mubr.f32.mxu0 0.0
        %1579 = vmatmul.mubr.f32.gmra.mrb[0].mxu0 %v1053
        %v1580 = vpop.f32.mrb[0].mxu0
        %v1581 = vadd.f32 %v1010, %v1580
        %v1582 = vpop.f32.mrb[0].mxu0
        %1583 = vmatprep.mubr.f32.mxu0 0.0
        %1584 = vmatmul.mubr.f32.gmra.mrb[0].mxu0 %v1056
        %v1585 = vpop.f32.mrb[0].mxu0
        %v1586 = vadd.f32 %v1010, %v1585
        %v1587 = vpop.f32.mrb[0].mxu0
        %1588 = vmatprep.mubr.f32.mxu0 0.0
        %1589 = vmatmul.mubr.f32.gmra.mrb[0].mxu0 %v1059
        %v1590 = vpop.f32.mrb[0].mxu0
        %v1591 = vadd.f32 %v1010, %v1590
        %v1592 = vpop.f32.mrb[0].mxu0
        %1593 = vmatprep.mubr.f32.mxu0 0.0
        %1594 = vmatmul.mubr.f32.gmra.mrb[0].mxu0 %v1062
        %v1595 = vpop.f32.mrb[0].mxu0
        %v1596 = vadd.f32 %v1010, %v1595
        %v1597 = vpop.f32.mrb[0].mxu0
        %1598 = vmatprep.mubr.f32.mxu0 0.0
        %1599 = vmatmul.mubr.f32.gmra.mrb[0].mxu0 %v1065
        %v1600 = vpop.f32.mrb[0].mxu0
        %v1601 = vadd.f32 %v1010, %v1600
        %v1602 = vpop.f32.mrb[0].mxu0
        %1603 = vmatprep.mubr.f32.mxu0 0.0
        %1604 = vmatmul.mubr.f32.gmra.mrb[0].mxu0 %v1068
        %v1605 = vpop.f32.mrb[0].mxu0
        %v1606 = vadd.f32 %v1010, %v1605
        %v1607 = vpop.f32.mrb[0].mxu0
        %1608 = vmatprep.mubr.f32.mxu0 0.0
        %1609 = vmatmul.mubr.f32.gmra.mrb[0].mxu0 %v1071
        %v1610 = vpop.f32.mrb[0].mxu0
        %v1611 = vadd.f32 %v1010, %v1610
        %v1612 = vpop.f32.mrb[0].mxu0
        %1613 = vmatprep.mubr.f32.mxu0 0.0
        %1614 = vmatmul.mubr.f32.gmra.mrb[0].mxu0 %v1074
        %v1615 = vpop.f32.mrb[0].mxu0
        %v1616 = vadd.f32 %v1010, %v1615
        %v1617 = vpop.f32.mrb[0].mxu0
        %1618 = vmatprep.mubr.f32.mxu0 0.0
        %1619 = vmatmul.mubr.f32.gmra.mrb[0].mxu0 %v1077
        %v1620 = vpop.f32.mrb[0].mxu0
        %v1621 = vadd.f32 %v1010, %v1620
        %v1622 = vpop.f32.mrb[0].mxu0
        %1623 = vmatprep.mubr.f32.mxu0 0.0
        %1624 = vmatmul.mubr.f32.gmra.mrb[0].mxu0 %v1080
        %v1625 = vpop.f32.mrb[0].mxu0
        %v1626 = vadd.f32 %v1010, %v1625
        %v1627 = vpop.f32.mrb[0].mxu0
        %1628 = vmatprep.mubr.f32.mxu0 0.0
        %1629 = vmatmul.mubr.f32.gmra.mrb[0].mxu0 %v1083
        %v1630 = vpop.f32.mrb[0].mxu0
        %v1631 = vadd.f32 %v1010, %v1630
        %v1632 = vpop.f32.mrb[0].mxu0
        %1633 = vmatprep.mubr.f32.mxu0 0.0
        %1634 = vmatmul.mubr.f32.gmra.mrb[0].mxu0 %v1086
        %v1635 = vpop.f32.mrb[0].mxu0
        %v1636 = vadd.f32 %v1010, %v1635
        %v1637 = vpop.f32.mrb[0].mxu0
        %1638 = vmatprep.mubr.f32.mxu0 0.0
        %1639 = vmatmul.mubr.f32.gmra.mrb[0].mxu0 %v1089
        %v1640 = vpop.f32.mrb[0].mxu0
        %v1641 = vadd.f32 %v1010, %v1640
        %v1642 = vpop.f32.mrb[0].mxu0
        %1643 = vmatprep.mubr.f32.mxu0 0.0
        %1644 = vmatmul.mubr.f32.gmra.mrb[0].mxu0 %v1092
        %v1645 = vpop.f32.mrb[0].mxu0
        %v1646 = vadd.f32 %v1010, %v1645
        %v1647 = vpop.f32.mrb[0].mxu0
        %1648 = vmatprep.mubr.f32.mxu0 0.0
        %1649 = vmatmul.mubr.f32.gmra.mrb[0].mxu0 %v1095
        %v1650 = vpop.f32.mrb[0].mxu0
        %v1651 = vadd.f32 %v1010, %v1650
        %v1652 = vpop.f32.mrb[0].mxu0
        %1653 = vmatprep.mubr.f32.mxu0 0.0
        %1654 = vmatmul.mubr.f32.gmra.mrb[0].mxu0 %v1098
        %v1655 = vpop.f32.mrb[0].mxu0
        %v1656 = vadd.f32 %v1010, %v1655
        %v1657 = vpop.f32.mrb[0].mxu0
        %1658 = vmatprep.mubr.f32.mxu0 0.0
        %1659 = vmatmul.mubr.f32.gmra.mrb[0].mxu0 %v1101
        %v1660 = vpop.f32.mrb[0].mxu0
        %v1661 = vadd.f32 %v1010, %v1660
        %v1662 = vpop.f32.mrb[0].mxu0
        %1663 = vmatprep.mubr.f32.mxu0 0.0
        %1664 = vmatmul.mubr.f32.gmra.mrb[0].mxu0 %v1104
        %v1665 = vpop.f32.mrb[0].mxu0
        %v1666 = vadd.f32 %v1010, %v1665
        %v1667 = vpop.f32.mrb[0].mxu0
        %1668 = vmatprep.mubr.f32.mxu0 0.0
        %1669 = vmatmul.mubr.f32.gmra.mrb[0].mxu0 %v1107
        %v1670 = vpop.f32.mrb[0].mxu0
        %v1671 = vadd.f32 %v1010, %v1670
        %v1672 = vpop.f32.mrb[0].mxu0
        %1673 = vmatprep.mubr.f32.mxu0 0.0
        %1674 = vmatmul.mubr.f32.gmra.mrb[0].mxu0 %v1110
        %v1675 = vpop.f32.mrb[0].mxu0
        %v1676 = vadd.f32 %v1010, %v1675
        %v1677 = vpop.f32.mrb[0].mxu0
        %1678 = vmatprep.mubr.f32.mxu0 0.0
        %1679 = vmatmul.mubr.f32.gmra.mrb[0].mxu0 %v1113
        %v1680 = vpop.f32.mrb[0].mxu0
        %v1681 = vadd.f32 %v1010, %v1680
        %v1682 = vpop.f32.mrb[0].mxu0
        %1683 = vmatprep.mubr.f32.mxu0 0.0
        %1684 = vmatmul.mubr.f32.gmra.mrb[0].mxu0 %v1116
        %v1685 = vpop.f32.mrb[0].mxu0
        %v1686 = vadd.f32 %v1010, %v1685
        %v1687 = vpop.f32.mrb[0].mxu0
        %1688 = vmatprep.mubr.f32.mxu0 0.0
        %1689 = vmatmul.mubr.f32.gmra.mrb[0].mxu0 %v1119
        %v1690 = vpop.f32.mrb[0].mxu0
        %v1691 = vadd.f32 %v1010, %v1690
        %v1692 = vpop.f32.mrb[0].mxu0
        %1693 = vmatprep.mubr.f32.mxu0 0.0
        %1694 = vmatmul.mubr.f32.gmra.mrb[0].mxu0 %v1122
        %v1695 = vpop.f32.mrb[0].mxu0
        %v1696 = vadd.f32 %v1010, %v1695
        %v1697 = vpop.f32.mrb[0].mxu0
        %1698 = vmatprep.mubr.f32.mxu0 0.0
        %1699 = vmatmul.mubr.f32.gmra.mrb[0].mxu0 %v1125
        %v1700 = vpop.f32.mrb[0].mxu0
        %v1701 = vadd.f32 %v1010, %v1700
        %v1702 = vpop.f32.mrb[0].mxu0
        %1703 = vmatprep.mubr.f32.mxu0 0.0
        %1704 = vmatmul.mubr.f32.gmra.mrb[0].mxu0 %v1128
        %v1705 = vpop.f32.mrb[0].mxu0
        %v1706 = vadd.f32 %v1010, %v1705
        %v1707 = vpop.f32.mrb[0].mxu0
        %1708 = vmatprep.mubr.f32.mxu0 0.0
        %1709 = vmatmul.mubr.f32.gmra.mrb[0].mxu0 %v1131
        %v1710 = vpop.f32.mrb[0].mxu0
        %v1711 = vadd.f32 %v1010, %v1710
        %v1712 = vpop.f32.mrb[0].mxu0
        %1713 = vmatprep.mubr.f32.mxu0 0.0
        %1714 = vmatmul.mubr.f32.gmra.mrb[0].mxu0 %v1134
        %v1715 = vpop.f32.mrb[0].mxu0
        %v1716 = vadd.f32 %v1010, %v1715
        %v1717 = vpop.f32.mrb[0].mxu0
        %1718 = vmatprep.mubr.f32.mxu0 0.0
        %1719 = vmatmul.mubr.f32.gmra.mrb[0].mxu0 %v1137
        %v1720 = vpop.f32.mrb[0].mxu0
        %v1721 = vadd.f32 %v1010, %v1720
        %v1722 = vpop.f32.mrb[0].mxu0
        %1723 = vmatprep.mubr.f32.mxu0 0.0
        %1724 = vmatmul.mubr.f32.gmra.mrb[0].mxu0 %v1140
        %v1725 = vpop.f32.mrb[0].mxu0
        %v1726 = vadd.f32 %v1010, %v1725
        %v1727 = vpop.f32.mrb[0].mxu0
        %1728 = vmatprep.mubr.f32.mxu0 0.0
        %1729 = vmatmul.mubr.f32.gmra.mrb[0].mxu0 %v1143
        %v1730 = vpop.f32.mrb[0].mxu0
        %v1731 = vadd.f32 %v1010, %v1730
        %v1732 = vpop.f32.mrb[0].mxu0
        %1733 = vmatprep.mubr.f32.mxu0 0.0
        %1734 = vmatmul.mubr.f32.gmra.mrb[0].mxu0 %v1146
        %v1735 = vpop.f32.mrb[0].mxu0
        %v1736 = vadd.f32 %v1010, %v1735
        %v1737 = vpop.f32.mrb[0].mxu0
        %1738 = vmatprep.mubr.f32.mxu0 0.0
        %1739 = vmatmul.mubr.f32.gmra.mrb[0].mxu0 %v1149
        %v1740 = vpop.f32.mrb[0].mxu0
        %v1741 = vadd.f32 %v1010, %v1740
        %v1742 = vpop.f32.mrb[0].mxu0
        %1743 = vmatprep.mubr.f32.mxu0 0.0
        %1744 = vmatmul.mubr.f32.gmra.mrb[0].mxu0 %v1152
        %v1745 = vpop.f32.mrb[0].mxu0
        %v1746 = vadd.f32 %v1010, %v1745
        %v1747 = vpop.f32.mrb[0].mxu0
        %1748 = vmatprep.mubr.f32.mxu0 0.0
        %1749 = vmatmul.mubr.f32.gmra.mrb[0].mxu0 %v1155
        %v1750 = vpop.f32.mrb[0].mxu0
        %v1751 = vadd.f32 %v1010, %v1750
        %v1752 = vpop.f32.mrb[0].mxu0
        %1753 = vmatprep.mubr.f32.mxu0 0.0
        %1754 = vmatmul.mubr.f32.gmra.mrb[0].mxu0 %v1158
        %v1755 = vpop.f32.mrb[0].mxu0
        %v1756 = vadd.f32 %v1010, %v1755
        %v1757 = vpop.f32.mrb[0].mxu0
        %1758 = vmatprep.mubr.f32.mxu0 0.0
        %1759 = vmatmul.mubr.f32.gmra.mrb[0].mxu0 %v1161
        %v1760 = vpop.f32.mrb[0].mxu0
        %v1761 = vadd.f32 %v1010, %v1760
        %v1762 = vpop.f32.mrb[0].mxu0
        %1763 = vmatprep.mubr.f32.mxu0 0.0
        %1764 = vmatmul.mubr.f32.gmra.mrb[0].mxu0 %v1164
        %v1765 = vpop.f32.mrb[0].mxu0
        %v1766 = vadd.f32 %v1010, %v1765
        %v1767 = vpop.f32.mrb[0].mxu0
        %1768 = vmatprep.mubr.f32.mxu0 0.0
        %1769 = vmatmul.mubr.f32.gmra.mrb[0].mxu0 %v1167
        %v1770 = vpop.f32.mrb[0].mxu0
        %v1771 = vadd.f32 %v1010, %v1770
        %v1772 = vpop.f32.mrb[0].mxu0
        %1773 = vmatprep.mubr.f32.mxu0 0.0
        %1774 = vmatmul.mubr.f32.gmra.mrb[0].mxu0 %v1170
        %v1775 = vpop.f32.mrb[0].mxu0
        %v1776 = vadd.f32 %v1010, %v1775
        %v1777 = vpop.f32.mrb[0].mxu0
        %1778 = vmatprep.mubr.f32.mxu0 0.0
        %1779 = vmatmul.mubr.f32.gmra.mrb[0].mxu0 %v1173
        %v1780 = vpop.f32.mrb[0].mxu0
        %v1781 = vadd.f32 %v1010, %v1780
        %v1782 = vpop.f32.mrb[0].mxu0
        %1783 = vmatprep.mubr.f32.mxu0 0.0
        %1784 = vmatmul.mubr.f32.gmra.mrb[0].mxu0 %v1176
        %v1785 = vpop.f32.mrb[0].mxu0
        %v1786 = vadd.f32 %v1010, %v1785
        %v1787 = vpop.f32.mrb[0].mxu0
        %1788 = vmatprep.mubr.f32.mxu0 0.0
        %1789 = vmatmul.mubr.f32.gmra.mrb[0].mxu0 %v1179
        %v1790 = vpop.f32.mrb[0].mxu0
        %v1791 = vadd.f32 %v1010, %v1790
        %v1792 = vpop.f32.mrb[0].mxu0
        %1793 = vmatprep.mubr.f32.mxu0 0.0
        %1794 = vmatmul.mubr.f32.gmra.mrb[0].mxu0 %v1182
        %v1795 = vpop.f32.mrb[0].mxu0
        %v1796 = vadd.f32 %v1010, %v1795
        %v1797 = vpop.f32.mrb[0].mxu0
        %1798 = vmatprep.mubr.f32.mxu0 0.0
        %1799 = vmatmul.mubr.f32.gmra.mrb[0].mxu0 %v1185
        %v1800 = vpop.f32.mrb[0].mxu0
        %v1801 = vadd.f32 %v1010, %v1800
        %v1802 = vpop.f32.mrb[0].mxu0
        %1803 = vmatprep.mubr.f32.mxu0 0.0
        %1804 = vmatmul.mubr.f32.gmra.mrb[0].mxu0 %v1188
        %v1805 = vpop.f32.mrb[0].mxu0
        %v1806 = vadd.f32 %v1010, %v1805
        %v1807 = vpop.f32.mrb[0].mxu0
        %1808 = vmatprep.mubr.f32.mxu0 0.0
        %1809 = vmatmul.mubr.f32.gmra.mrb[0].mxu0 %v1191
        %v1810 = vpop.f32.mrb[0].mxu0
        %v1811 = vadd.f32 %v1010, %v1810
        %v1812 = vpop.f32.mrb[0].mxu0
        %1813 = vmatprep.mubr.f32.mxu0 0.0
        %1814 = vmatmul.mubr.f32.gmra.mrb[0].mxu0 %v1194
        %v1815 = vpop.f32.mrb[0].mxu0
        %v1816 = vadd.f32 %v1010, %v1815
        %v1817 = vpop.f32.mrb[0].mxu0
        %1818 = vmatprep.mubr.f32.mxu0 0.0
        %1819 = vmatmul.mubr.f32.gmra.mrb[0].mxu0 %v1197
        %v1820 = vpop.f32.mrb[0].mxu0
        %v1821 = vadd.f32 %v1010, %v1820
        %v1822 = vpop.f32.mrb[0].mxu0
        %1823 = vmatprep.mubr.f32.mxu0 0.0
        %1824 = vmatmul.mubr.f32.gmra.mrb[0].mxu0 %v1200
        %v1825 = vpop.f32.mrb[0].mxu0
        %v1826 = vadd.f32 %v1010, %v1825
        %v1827 = vpop.f32.mrb[0].mxu0
        %1828 = vmatprep.mubr.f32.mxu0 0.0
        %1829 = vmatmul.mubr.f32.gmra.mrb[0].mxu0 %v1203
        %v1830 = vpop.f32.mrb[0].mxu0
        %v1831 = vadd.f32 %v1010, %v1830
        %v1832 = vpop.f32.mrb[0].mxu0
        %1833 = vmatprep.mubr.f32.mxu0 0.0
        %1834 = vmatmul.mubr.f32.gmra.mrb[0].mxu0 %v1206
        %v1835 = vpop.f32.mrb[0].mxu0
        %v1836 = vadd.f32 %v1010, %v1835
        %v1837 = vpop.f32.mrb[0].mxu0
        %1838 = vmatprep.mubr.f32.mxu0 0.0
        %1839 = vmatmul.mubr.f32.gmra.mrb[0].mxu0 %v1209
        %v1840 = vpop.f32.mrb[0].mxu0
        %v1841 = vadd.f32 %v1010, %v1840
        %v1842 = vpop.f32.mrb[0].mxu0
        %1843 = vmatprep.mubr.f32.mxu0 0.0
        %1844 = vmatmul.mubr.f32.gmra.mrb[0].mxu0 %v1212
        %v1845 = vpop.f32.mrb[0].mxu0
        %v1846 = vadd.f32 %v1010, %v1845
        %v1847 = vpop.f32.mrb[0].mxu0
        %1848 = vmatprep.mubr.f32.mxu0 0.0
        %1849 = vmatmul.mubr.f32.gmra.mrb[0].mxu0 %v1215
        %v1850 = vpop.f32.mrb[0].mxu0
        %v1851 = vadd.f32 %v1010, %v1850
        %v1852 = vpop.f32.mrb[0].mxu0
        %1853 = vmatprep.mubr.f32.mxu0 0.0
        %1854 = vmatmul.mubr.f32.gmra.mrb[0].mxu0 %v1218
        %v1855 = vpop.f32.mrb[0].mxu0
        %v1856 = vadd.f32 %v1010, %v1855
        %v1857 = vpop.f32.mrb[0].mxu0
        %1858 = vmatprep.mubr.f32.mxu0 0.0
        %1859 = vmatmul.mubr.f32.gmra.mrb[0].mxu0 %v1221
        %v1860 = vpop.f32.mrb[0].mxu0
        %v1861 = vadd.f32 %v1010, %v1860
        %v1862 = vpop.f32.mrb[0].mxu0
        %1863 = vmatprep.mubr.f32.mxu0 0.0
        %1864 = vmatmul.mubr.f32.gmra.mrb[0].mxu0 %v1224
        %v1865 = vpop.f32.mrb[0].mxu0
        %v1866 = vadd.f32 %v1010, %v1865
        %v1867 = vpop.f32.mrb[0].mxu0
        %1868 = vmatprep.mubr.f32.mxu0 0.0
        %1869 = vmatmul.mubr.f32.gmra.mrb[0].mxu0 %v1227
        %v1870 = vpop.f32.mrb[0].mxu0
        %v1871 = vadd.f32 %v1010, %v1870
        %v1872 = vpop.f32.mrb[0].mxu0
        %1873 = vmatprep.mubr.f32.mxu0 0.0
        %1874 = vmatmul.mubr.f32.gmra.mrb[0].mxu0 %v1230
        %v1875 = vpop.f32.mrb[0].mxu0
        %v1876 = vadd.f32 %v1010, %v1875
        %v1877 = vpop.f32.mrb[0].mxu0
        %1878 = vmatprep.mubr.f32.mxu0 0.0
        %1879 = vmatmul.mubr.f32.gmra.mrb[0].mxu0 %v1233
        %v1880 = vpop.f32.mrb[0].mxu0
        %v1881 = vadd.f32 %v1010, %v1880
        %v1882 = vpop.f32.mrb[0].mxu0
        %1883 = vmatprep.mubr.f32.mxu0 0.0
        %1884 = vmatmul.mubr.f32.gmra.mrb[0].mxu0 %v1236
        %v1885 = vpop.f32.mrb[0].mxu0
        %v1886 = vadd.f32 %v1010, %v1885
        %v1887 = vpop.f32.mrb[0].mxu0
        %1888 = vmatprep.mubr.f32.mxu0 0.0
        %1889 = vmatmul.mubr.f32.gmra.mrb[0].mxu0 %v1239
        %v1890 = vpop.f32.mrb[0].mxu0
        %v1891 = vadd.f32 %v1010, %v1890
        %v1892 = vpop.f32.mrb[0].mxu0
        %1893 = vmatprep.mubr.f32.mxu0 0.0
        %1894 = vmatmul.mubr.f32.gmra.mrb[0].mxu0 %v1242
        %v1895 = vpop.f32.mrb[0].mxu0
        %v1896 = vadd.f32 %v1010, %v1895
        %v1897 = vpop.f32.mrb[0].mxu0
        %1898 = vmatprep.mubr.f32.mxu0 0.0
        %1899 = vmatmul.mubr.f32.gmra.mrb[0].mxu0 %v1245
        %v1900 = vpop.f32.mrb[0].mxu0
        %v1901 = vadd.f32 %v1010, %v1900
        %v1902 = vpop.f32.mrb[0].mxu0
        %1903 = vmatprep.mubr.f32.mxu0 0.0
        %1904 = vmatmul.mubr.f32.gmra.mrb[0].mxu0 %v1248
        %v1905 = vpop.f32.mrb[0].mxu0
        %v1906 = vadd.f32 %v1010, %v1905
        %v1907 = vpop.f32.mrb[0].mxu0
        %1908 = vmatprep.mubr.f32.mxu0 0.0
        %1909 = vmatmul.mubr.f32.gmra.mrb[0].mxu0 %v1251
        %v1910 = vpop.f32.mrb[0].mxu0
        %v1911 = vadd.f32 %v1010, %v1910
        %v1912 = vpop.f32.mrb[0].mxu0
        %1913 = vmatprep.mubr.f32.mxu0 0.0
        %1914 = vmatmul.mubr.f32.gmra.mrb[0].mxu0 %v1254
        %v1915 = vpop.f32.mrb[0].mxu0
        %v1916 = vadd.f32 %v1010, %v1915
        %v1917 = vpop.f32.mrb[0].mxu0
        %1918 = vmatprep.mubr.f32.mxu0 0.0
        %1919 = vmatmul.mubr.f32.gmra.mrb[0].mxu0 %v1257
        %v1920 = vpop.f32.mrb[0].mxu0
        %v1921 = vadd.f32 %v1010, %v1920
        %v1922 = vpop.f32.mrb[0].mxu0
        %1923 = vmatprep.mubr.f32.mxu0 0.0
        %1924 = vmatmul.mubr.f32.gmra.mrb[0].mxu0 %v1260
        %v1925 = vpop.f32.mrb[0].mxu0
        %v1926 = vadd.f32 %v1010, %v1925
        %v1927 = vpop.f32.mrb[0].mxu0
        %1928 = vmatprep.mubr.f32.mxu0 0.0
        %1929 = vmatmul.mubr.f32.gmra.mrb[0].mxu0 %v1263
        %v1930 = vpop.f32.mrb[0].mxu0
        %v1931 = vadd.f32 %v1010, %v1930
        %v1932 = vpop.f32.mrb[0].mxu0
        %1933 = vmatprep.mubr.f32.mxu0 0.0
        %1934 = vmatmul.mubr.f32.gmra.mrb[0].mxu0 %v1266
        %v1935 = vpop.f32.mrb[0].mxu0
        %v1936 = vadd.f32 %v1010, %v1935
        %v1937 = vpop.f32.mrb[0].mxu0
        %1938 = vmatprep.mubr.f32.mxu0 0.0
        %1939 = vmatmul.mubr.f32.gmra.mrb[0].mxu0 %v1269
        %v1940 = vpop.f32.mrb[0].mxu0
        %v1941 = vadd.f32 %v1010, %v1940
        %v1942 = vpop.f32.mrb[0].mxu0
        %1943 = vmatprep.mubr.f32.mxu0 0.0
        %1944 = vmatmul.mubr.f32.gmra.mrb[0].mxu0 %v1272
        %v1945 = vpop.f32.mrb[0].mxu0
        %v1946 = vadd.f32 %v1010, %v1945
        %v1947 = vpop.f32.mrb[0].mxu0
        %1948 = vmatprep.mubr.f32.mxu0 0.0
        %1949 = vmatmul.mubr.f32.gmra.mrb[0].mxu0 %v1275
        %v1950 = vpop.f32.mrb[0].mxu0
        %v1951 = vadd.f32 %v1010, %v1950
        %v1952 = vpop.f32.mrb[0].mxu0
        %1953 = vmatprep.mubr.f32.mxu0 0.0
        %1954 = vmatmul.mubr.f32.gmra.mrb[0].mxu0 %v1278
        %v1955 = vpop.f32.mrb[0].mxu0
        %v1956 = vadd.f32 %v1010, %v1955
        %v1957 = vpop.f32.mrb[0].mxu0
        %1958 = vmatprep.mubr.f32.mxu0 0.0
        %1959 = vmatmul.mubr.f32.gmra.mrb[0].mxu0 %v1281
        %v1960 = vpop.f32.mrb[0].mxu0
        %v1961 = vadd.f32 %v1010, %v1960
        %v1962 = vpop.f32.mrb[0].mxu0
        %1963 = vmatprep.mubr.f32.mxu0 0.0
        %1964 = vmatmul.mubr.f32.gmra.mrb[0].mxu0 %v1284
        %v1965 = vpop.f32.mrb[0].mxu0
        %v1966 = vadd.f32 %v1010, %v1965
        %v1967 = vpop.f32.mrb[0].mxu0
        %1968 = vmatprep.mubr.f32.mxu0 0.0
        %1969 = vmatmul.mubr.f32.gmra.mrb[0].mxu0 %v1287
        %v1970 = vpop.f32.mrb[0].mxu0
        %v1971 = vadd.f32 %v1010, %v1970
        %v1972 = vpop.f32.mrb[0].mxu0
        %1973 = vmatprep.mubr.f32.mxu0 0.0
        %1974 = vmatmul.mubr.f32.gmra.mrb[0].mxu0 %v1290
        %v1975 = vpop.f32.mrb[0].mxu0
        %v1976 = vadd.f32 %v1010, %v1975
        %v1977 = vpop.f32.mrb[0].mxu0
        %1978 = vmatprep.mubr.f32.mxu0 0.0
        %1979 = vmatmul.mubr.f32.gmra.mrb[0].mxu0 %v1293
        %v1980 = vpop.f32.mrb[0].mxu0
        %v1981 = vadd.f32 %v1010, %v1980
        %v1982 = vpop.f32.mrb[0].mxu0
        %1983 = vmatprep.mubr.f32.mxu0 0.0
        %1984 = vmatmul.mubr.f32.gmra.mrb[0].mxu0 %v1296
        %v1985 = vpop.f32.mrb[0].mxu0
        %v1986 = vadd.f32 %v1010, %v1985
        %v1987 = vpop.f32.mrb[0].mxu0
        %1988 = vmatprep.mubr.f32.mxu0 0.0
        %1989 = vmatmul.mubr.f32.gmra.mrb[0].mxu0 %v1299
        %v1990 = vpop.f32.mrb[0].mxu0
        %v1991 = vadd.f32 %v1010, %v1990
        %v1992 = vpop.f32.mrb[0].mxu0
        %1993 = vmatprep.mubr.f32.mxu0 0.0
        %1994 = vmatmul.mubr.f32.gmra.mrb[0].mxu0 %v1302
        %v1995 = vpop.f32.mrb[0].mxu0
        %v1996 = vadd.f32 %v1010, %v1995
        %v1997 = vpop.f32.mrb[0].mxu0
        %1998 = vmatprep.mubr.f32.mxu0 0.0
        %1999 = vmatmul.mubr.f32.gmra.mrb[0].mxu0 %v1305
        %v2000 = vpop.f32.mrb[0].mxu0
        %v2001 = vadd.f32 %v1010, %v2000
        %v2002 = vpop.f32.mrb[0].mxu0
        %2003 = vmatprep.mubr.f32.mxu0 0.0
        %2004 = vmatmul.mubr.f32.gmra.mrb[0].mxu0 %v1308
        %v2005 = vpop.f32.mrb[0].mxu0
        %v2006 = vadd.f32 %v1010, %v2005
        %v2007 = vpop.f32.mrb[0].mxu0
        %2008 = vmatprep.mubr.f32.mxu0 0.0
        %2009 = vmatmul.mubr.f32.gmra.mrb[0].mxu0 %v1311
        %v2010 = vpop.f32.mrb[0].mxu0
        %v2011 = vadd.f32 %v1010, %v2010
        %v2012 = vpop.f32.mrb[0].mxu0
        %2013 = vmatprep.mubr.f32.mxu0 0.0
        %2014 = vmatmul.mubr.f32.gmra.mrb[0].mxu0 %v1314
        %v2015 = vpop.f32.mrb[0].mxu0
        %v2016 = vadd.f32 %v1010, %v2015
        %v2017 = vpop.f32.mrb[0].mxu0
        %2018 = vmatprep.mubr.f32.mxu0 0.0
        %2019 = vmatmul.mubr.f32.gmra.mrb[0].mxu0 %v1317
        %v2020 = vpop.f32.mrb[0].mxu0
        %v2021 = vadd.f32 %v1010, %v2020
        %v2022 = vpop.f32.mrb[0].mxu0
        %2023 = vmatprep.mubr.f32.mxu0 0.0
        %2024 = vmatmul.mubr.f32.gmra.mrb[0].mxu0 %v1320
        %v2025 = vpop.f32.mrb[0].mxu0
        %v2026 = vadd.f32 %v1010, %v2025
        %v2027 = vpop.f32.mrb[0].mxu0
        %2028 = vmatprep.mubr.f32.mxu0 0.0
        %2029 = vmatmul.mubr.f32.gmra.mrb[0].mxu0 %v1323
        %v2030 = vpop.f32.mrb[0].mxu0
        %v2031 = vadd.f32 %v1010, %v2030
        %v2032 = vpop.f32.mrb[0].mxu0
        %2033 = vmatprep.mubr.f32.mxu0 0.0
        %2034 = vmatmul.mubr.f32.gmra.mrb[0].mxu0 %v1326
        %v2035 = vpop.f32.mrb[0].mxu0
        %v2036 = vadd.f32 %v1010, %v2035
        %v2037 = vpop.f32.mrb[0].mxu0
        %2038 = vmatprep.mubr.f32.mxu0 0.0
        %2039 = vmatmul.mubr.f32.gmra.mrb[0].mxu0 %v1329
        %v2040 = vpop.f32.mrb[0].mxu0
        %v2041 = vadd.f32 %v1010, %v2040
        %v2042 = vpop.f32.mrb[0].mxu0
        %2043 = vmatprep.mubr.f32.mxu0 0.0
        %2044 = vmatmul.mubr.f32.gmra.mrb[0].mxu0 %v1332
        %v2045 = vpop.f32.mrb[0].mxu0
        %v2046 = vadd.f32 %v1010, %v2045
        %v2047 = vpop.f32.mrb[0].mxu0
        %2048 = vmatprep.mubr.f32.mxu0 0.0
        %2049 = vmatmul.mubr.f32.gmra.mrb[0].mxu0 %v1335
        %v2050 = vpop.f32.mrb[0].mxu0
        %v2051 = vadd.f32 %v1010, %v2050
        %v2052 = vpop.f32.mrb[0].mxu0
        %2053 = vmatprep.mubr.f32.mxu0 0.0
        %2054 = vmatmul.mubr.f32.gmra.mrb[0].mxu0 %v1338
        %v2055 = vpop.f32.mrb[0].mxu0
        %v2056 = vadd.f32 %v1010, %v2055
        %v2057 = vpop.f32.mrb[0].mxu0
        %2058 = vmatprep.mubr.f32.mxu0 0.0
        %2059 = vmatmul.mubr.f32.gmra.mrb[0].mxu0 %v1341
        %v2060 = vpop.f32.mrb[0].mxu0
        %v2061 = vadd.f32 %v1010, %v2060
        %v2062 = vpop.f32.mrb[0].mxu0
        %2063 = vmatprep.mubr.f32.mxu0 0.0
        %2064 = vmatmul.mubr.f32.gmra.mrb[0].mxu0 %v1344
        %v2065 = vpop.f32.mrb[0].mxu0
        %v2066 = vadd.f32 %v1010, %v2065
        %v2067 = vpop.f32.mrb[0].mxu0
        %2068 = vmatprep.mubr.f32.mxu0 0.0
        %2069 = vmatmul.mubr.f32.gmra.mrb[0].mxu0 %v1347
        %v2070 = vpop.f32.mrb[0].mxu0
        %v2071 = vadd.f32 %v1010, %v2070
        %v2072 = vpop.f32.mrb[0].mxu0
        %2073 = vmatprep.mubr.f32.mxu0 0.0
        %2074 = vmatmul.mubr.f32.gmra.mrb[0].mxu0 %v1350
        %v2075 = vpop.f32.mrb[0].mxu0
        %v2076 = vadd.f32 %v1010, %v2075
        %v2077 = vpop.f32.mrb[0].mxu0
        %2078 = vmatprep.mubr.f32.mxu0 0.0
        %2079 = vmatmul.mubr.f32.gmra.mrb[0].mxu0 %v1353
        %v2080 = vpop.f32.mrb[0].mxu0
        %v2081 = vadd.f32 %v1010, %v2080
        %v2082 = vpop.f32.mrb[0].mxu0
        %2083 = vmatprep.mubr.f32.mxu0 0.0
        %2084 = vmatmul.mubr.f32.gmra.mrb[0].mxu0 %v1356
        %v2085 = vpop.f32.mrb[0].mxu0
        %v2086 = vadd.f32 %v1010, %v2085
        %v2087 = vpop.f32.mrb[0].mxu0
        %2088 = vmatprep.mubr.f32.mxu0 0.0
        %2089 = vmatmul.mubr.f32.gmra.mrb[0].mxu0 %v1359
        %v2090 = vpop.f32.mrb[0].mxu0
        %v2091 = vadd.f32 %v1010, %v2090
        %v2092 = vpop.f32.mrb[0].mxu0
        %2093 = vmatprep.mubr.f32.mxu0 0.0
        %2094 = vmatmul.mubr.f32.gmra.mrb[0].mxu0 %v1362
        %v2095 = vpop.f32.mrb[0].mxu0
        %v2096 = vadd.f32 %v1010, %v2095
        %v2097 = vpop.f32.mrb[0].mxu0
        %2098 = vmatprep.mubr.f32.mxu0 0.0
        %2099 = vmatmul.mubr.f32.gmra.mrb[0].mxu0 %v1365
        %v2100 = vpop.f32.mrb[0].mxu0
        %v2101 = vadd.f32 %v1010, %v2100
        %v2102 = vpop.f32.mrb[0].mxu0
        %2103 = vmatprep.mubr.f32.mxu0 0.0
        %2104 = vmatmul.mubr.f32.gmra.mrb[0].mxu0 %v1368
        %v2105 = vpop.f32.mrb[0].mxu0
        %v2106 = vadd.f32 %v1010, %v2105
        %v2107 = vpop.f32.mrb[0].mxu0
        %2108 = vmatprep.mubr.f32.mxu0 0.0
        %2109 = vmatmul.mubr.f32.gmra.mrb[0].mxu0 %v1371
        %v2110 = vpop.f32.mrb[0].mxu0
        %v2111 = vadd.f32 %v1010, %v2110
        %v2112 = vpop.f32.mrb[0].mxu0
        %2113 = vmatprep.mubr.f32.mxu0 0.0
        %2114 = vmatmul.mubr.f32.gmra.mrb[0].mxu0 %v1374
        %v2115 = vpop.f32.mrb[0].mxu0
        %v2116 = vadd.f32 %v1010, %v2115
        %v2117 = vpop.f32.mrb[0].mxu0
        %2118 = vmatprep.mubr.f32.mxu0 0.0
        %2119 = vmatmul.mubr.f32.gmra.mrb[0].mxu0 %v1377
        %v2120 = vpop.f32.mrb[0].mxu0
        %v2121 = vadd.f32 %v1010, %v2120
        %v2122 = vpop.f32.mrb[0].mxu0
        %2123 = vmatprep.mubr.f32.mxu0 0.0
        %2124 = vmatmul.mubr.f32.gmra.mrb[0].mxu0 %v1380
        %v2125 = vpop.f32.mrb[0].mxu0
        %v2126 = vadd.f32 %v1010, %v2125
        %v2127 = vpop.f32.mrb[0].mxu0
        %2128 = vmatprep.mubr.f32.mxu0 0.0
        %2129 = vmatmul.mubr.f32.gmra.mrb[0].mxu0 %v1383
        %v2130 = vpop.f32.mrb[0].mxu0
        %v2131 = vadd.f32 %v1010, %v2130
        %v2132 = vpop.f32.mrb[0].mxu0
        %2133 = vmatprep.mubr.f32.mxu0 0.0
        %2134 = vmatmul.mubr.f32.gmra.mrb[0].mxu0 %v1386
        %v2135 = vpop.f32.mrb[0].mxu0
        %v2136 = vadd.f32 %v1010, %v2135
        %v2137 = vpop.f32.mrb[0].mxu0
        %2138 = vmatprep.mubr.f32.mxu0 0.0
        %2139 = vmatmul.mubr.f32.gmra.mrb[0].mxu0 %v1389
        %v2140 = vpop.f32.mrb[0].mxu0
        %v2141 = vadd.f32 %v1010, %v2140
        %v2142 = vpop.f32.mrb[0].mxu0
        %2143 = vmatprep.mubr.f32.mxu0 0.0
        %2144 = vmatmul.mubr.f32.gmra.mrb[0].mxu0 %v1392
        %v2145 = vpop.f32.mrb[0].mxu0
        %v2146 = vadd.f32 %v1010, %v2145
        %v2147 = vpop.f32.mrb[0].mxu0
        %2148 = vmatprep.mubr.f32.mxu0 0.0
        %2149 = vmatmul.mubr.f32.gmra.mrb[0].mxu0 %v1395
        %v2150 = vpop.f32.mrb[0].mxu0
        %v2151 = vadd.f32 %v1010, %v2150
        %v2152 = vpop.f32.mrb[0].mxu0
        %2153 = vmatprep.mubr.f32.mxu0 0.0
        %2154 = vmatmul.mubr.f32.gmra.mrb[0].mxu0 %v1398
        %v2155 = vpop.f32.mrb[0].mxu0
        %v2156 = vadd.f32 %v1010, %v2155
        %v2157 = vpop.f32.mrb[0].mxu0
        %2158 = vmatprep.mubr.f32.mxu0 0.0
        %2159 = vmatmul.mubr.f32.gmra.mrb[0].mxu0 %v1401
        %v2160 = vpop.f32.mrb[0].mxu0
        %v2161 = vadd.f32 %v1010, %v2160
        %v2162 = vpop.f32.mrb[0].mxu0
        %2163 = vmatprep.mubr.f32.mxu0 0.0
        %2164 = vmatmul.mubr.f32.gmra.mrb[0].mxu0 %v1404
        %v2165 = vpop.f32.mrb[0].mxu0
        %v2166 = vadd.f32 %v1010, %v2165
        %v2167 = vpop.f32.mrb[0].mxu0
        %2168 = vmatprep.mubr.f32.mxu0 0.0
        %2169 = vmatmul.mubr.f32.gmra.mrb[0].mxu0 %v1407
        %v2170 = vpop.f32.mrb[0].mxu0
        %v2171 = vadd.f32 %v1010, %v2170
        %v2172 = vpop.f32.mrb[0].mxu0
        %2173 = vmatprep.mubr.f32.mxu0 0.0
        %2174 = vmatmul.mubr.f32.gmra.mrb[0].mxu0 %v1410
        %v2175 = vpop.f32.mrb[0].mxu0
        %v2176 = vadd.f32 %v1010, %v2175
        %v2177 = vpop.f32.mrb[0].mxu0
        %2178 = vmatprep.mubr.f32.mxu0 0.0
        %2179 = vmatmul.mubr.f32.gmra.mrb[0].mxu0 %v1413
        %v2180 = vpop.f32.mrb[0].mxu0
        %v2181 = vadd.f32 %v1010, %v2180
        %v2182 = vpop.f32.mrb[0].mxu0
        %2183 = vmatprep.mubr.f32.mxu0 0.0
        %2184 = vmatmul.mubr.f32.gmra.mrb[0].mxu0 %v1416
        %v2185 = vpop.f32.mrb[0].mxu0
        %v2186 = vadd.f32 %v1010, %v2185
        %v2187 = vpop.f32.mrb[0].mxu0
        %2188 = vmatprep.mubr.f32.mxu0 0.0
        %2189 = vmatmul.mubr.f32.gmra.mrb[0].mxu0 %v1419
        %v2190 = vpop.f32.mrb[0].mxu0
        %v2191 = vadd.f32 %v1010, %v2190
        %v2192 = vpop.f32.mrb[0].mxu0
        %2193 = vmatprep.mubr.f32.mxu0 0.0
        %2194 = vmatmul.mubr.f32.gmra.mrb[0].mxu0 %v1422
        %v2195 = vpop.f32.mrb[0].mxu0
        %v2196 = vadd.f32 %v1010, %v2195
        %v2197 = vpop.f32.mrb[0].mxu0
        %2198 = vmatprep.mubr.f32.mxu0 0.0
        %2199 = vmatmul.mubr.f32.gmra.mrb[0].mxu0 %v1425
        %v2200 = vpop.f32.mrb[0].mxu0
        %v2201 = vadd.f32 %v1010, %v2200
        %v2202 = vpop.f32.mrb[0].mxu0
        %2203 = vmatprep.mubr.f32.mxu0 0.0
        %2204 = vmatmul.mubr.f32.gmra.mrb[0].mxu0 %v1428
        %v2205 = vpop.f32.mrb[0].mxu0
        %v2206 = vadd.f32 %v1010, %v2205
        %v2207 = vpop.f32.mrb[0].mxu0
        %2208 = vmatprep.mubr.f32.mxu0 0.0
        %2209 = vmatmul.mubr.f32.gmra.mrb[0].mxu0 %v1431
        %v2210 = vpop.f32.mrb[0].mxu0
        %v2211 = vadd.f32 %v1010, %v2210
        %v2212 = vpop.f32.mrb[0].mxu0
        %2213 = vmatprep.mubr.f32.mxu0 0.0
        %2214 = vmatmul.mubr.f32.gmra.mrb[0].mxu0 %v1434
        %v2215 = vpop.f32.mrb[0].mxu0
        %v2216 = vadd.f32 %v1010, %v2215
        %v2217 = vpop.f32.mrb[0].mxu0
        %2218 = vmatprep.mubr.f32.mxu0 0.0
        %2219 = vmatmul.mubr.f32.gmra.mrb[0].mxu0 %v1437
        %v2220 = vpop.f32.mrb[0].mxu0
        %v2221 = vadd.f32 %v1010, %v2220
        %v2222 = vpop.f32.mrb[0].mxu0
        %2223 = vmatprep.mubr.f32.mxu0 0.0
        %2224 = vmatmul.mubr.f32.gmra.mrb[0].mxu0 %v1440
        %v2225 = vpop.f32.mrb[0].mxu0
        %v2226 = vadd.f32 %v1010, %v2225
        %v2227 = vpop.f32.mrb[0].mxu0
        %2228 = vmatprep.mubr.f32.mxu0 0.0
        %2229 = vmatmul.mubr.f32.gmra.mrb[0].mxu0 %v1443
        %v2230 = vpop.f32.mrb[0].mxu0
        %v2231 = vadd.f32 %v1010, %v2230
        %v2232 = vpop.f32.mrb[0].mxu0
        %2233 = vdwg.mxu0
        %v2234 = vmax.f32 %v1516, 0.0
        %v2235 = vmax.f32 %v1521, 0.0
        %v2236 = vmax.f32 %v1526, 0.0
        %v2237 = vmax.f32 %v1531, 0.0
        %v2238 = vmax.f32 %v1536, 0.0
        %v2239 = vmax.f32 %v1541, 0.0
        %v2240 = vmax.f32 %v1546, 0.0
        %v2241 = vmax.f32 %v1551, 0.0
        %v2242 = vmax.f32 %v1556, 0.0
        %v2243 = vmax.f32 %v1561, 0.0
        %v2244 = vmax.f32 %v1566, 0.0
        %v2245 = vmax.f32 %v1571, 0.0
        %v2246 = vmax.f32 %v1576, 0.0
        %v2247 = vmax.f32 %v1581, 0.0
        %v2248 = vmax.f32 %v1586, 0.0
        %v2249 = vmax.f32 %v1591, 0.0
        %v2250 = vmax.f32 %v1596, 0.0
        %v2251 = vmax.f32 %v1601, 0.0
        %v2252 = vmax.f32 %v1606, 0.0
        %v2253 = vmax.f32 %v1611, 0.0
        %v2254 = vmax.f32 %v1616, 0.0
        %v2255 = vmax.f32 %v1621, 0.0
        %v2256 = vmax.f32 %v1626, 0.0
        %v2257 = vmax.f32 %v1631, 0.0
        %v2258 = vmax.f32 %v1636, 0.0
        %v2259 = vmax.f32 %v1641, 0.0
        %v2260 = vmax.f32 %v1646, 0.0
        %v2261 = vmax.f32 %v1651, 0.0
        %v2262 = vmax.f32 %v1656, 0.0
        %v2263 = vmax.f32 %v1661, 0.0
        %v2264 = vmax.f32 %v1666, 0.0
        %v2265 = vmax.f32 %v1671, 0.0
        %v2266 = vmax.f32 %v1676, 0.0
        %v2267 = vmax.f32 %v1681, 0.0
        %v2268 = vmax.f32 %v1686, 0.0
        %v2269 = vmax.f32 %v1691, 0.0
        %v2270 = vmax.f32 %v1696, 0.0
        %v2271 = vmax.f32 %v1701, 0.0
        %v2272 = vmax.f32 %v1706, 0.0
        %v2273 = vmax.f32 %v1711, 0.0
        %v2274 = vmax.f32 %v1716, 0.0
        %v2275 = vmax.f32 %v1721, 0.0
        %v2276 = vmax.f32 %v1726, 0.0
        %v2277 = vmax.f32 %v1731, 0.0
        %v2278 = vmax.f32 %v1736, 0.0
        %v2279 = vmax.f32 %v1741, 0.0
        %v2280 = vmax.f32 %v1746, 0.0
        %v2281 = vmax.f32 %v1751, 0.0
        %v2282 = vmax.f32 %v1756, 0.0
        %v2283 = vmax.f32 %v1761, 0.0
        %v2284 = vmax.f32 %v1766, 0.0
        %v2285 = vmax.f32 %v1771, 0.0
        %v2286 = vmax.f32 %v1776, 0.0
        %v2287 = vmax.f32 %v1781, 0.0
        %v2288 = vmax.f32 %v1786, 0.0
        %v2289 = vmax.f32 %v1791, 0.0
        %v2290 = vmax.f32 %v1796, 0.0
        %v2291 = vmax.f32 %v1801, 0.0
        %v2292 = vmax.f32 %v1806, 0.0
        %v2293 = vmax.f32 %v1811, 0.0
        %v2294 = vmax.f32 %v1816, 0.0
        %v2295 = vmax.f32 %v1821, 0.0
        %v2296 = vmax.f32 %v1826, 0.0
        %v2297 = vmax.f32 %v1831, 0.0
        %v2298 = vmax.f32 %v1836, 0.0
        %v2299 = vmax.f32 %v1841, 0.0
        %v2300 = vmax.f32 %v1846, 0.0
        %v2301 = vmax.f32 %v1851, 0.0
        %v2302 = vmax.f32 %v1856, 0.0
        %v2303 = vmax.f32 %v1861, 0.0
        %v2304 = vmax.f32 %v1866, 0.0
        %v2305 = vmax.f32 %v1871, 0.0
        %v2306 = vmax.f32 %v1876, 0.0
        %v2307 = vmax.f32 %v1881, 0.0
        %v2308 = vmax.f32 %v1886, 0.0
        %v2309 = vmax.f32 %v1891, 0.0
        %v2310 = vmax.f32 %v1896, 0.0
        %v2311 = vmax.f32 %v1901, 0.0
        %v2312 = vmax.f32 %v1906, 0.0
        %v2313 = vmax.f32 %v1911, 0.0
        %v2314 = vmax.f32 %v1916, 0.0
        %v2315 = vmax.f32 %v1921, 0.0
        %v2316 = vmax.f32 %v1926, 0.0
        %v2317 = vmax.f32 %v1931, 0.0
        %v2318 = vmax.f32 %v1936, 0.0
        %v2319 = vmax.f32 %v1941, 0.0
        %v2320 = vmax.f32 %v1946, 0.0
        %v2321 = vmax.f32 %v1951, 0.0
        %v2322 = vmax.f32 %v1956, 0.0
        %v2323 = vmax.f32 %v1961, 0.0
        %v2324 = vmax.f32 %v1966, 0.0
        %v2325 = vmax.f32 %v1971, 0.0
        %v2326 = vmax.f32 %v1976, 0.0
        %v2327 = vmax.f32 %v1981, 0.0
        %v2328 = vmax.f32 %v1986, 0.0
        %v2329 = vmax.f32 %v1991, 0.0
        %v2330 = vmax.f32 %v1996, 0.0
        %v2331 = vmax.f32 %v2001, 0.0
        %v2332 = vmax.f32 %v2006, 0.0
        %v2333 = vmax.f32 %v2011, 0.0
        %v2334 = vmax.f32 %v2016, 0.0
        %v2335 = vmax.f32 %v2021, 0.0
        %v2336 = vmax.f32 %v2026, 0.0
        %v2337 = vmax.f32 %v2031, 0.0
        %v2338 = vmax.f32 %v2036, 0.0
        %v2339 = vmax.f32 %v2041, 0.0
        %v2340 = vmax.f32 %v2046, 0.0
        %v2341 = vmax.f32 %v2051, 0.0
        %v2342 = vmax.f32 %v2056, 0.0
        %v2343 = vmax.f32 %v2061, 0.0
        %v2344 = vmax.f32 %v2066, 0.0
        %v2345 = vmax.f32 %v2071, 0.0
        %v2346 = vmax.f32 %v2076, 0.0
        %v2347 = vmax.f32 %v2081, 0.0
        %v2348 = vmax.f32 %v2086, 0.0
        %v2349 = vmax.f32 %v2091, 0.0
        %v2350 = vmax.f32 %v2096, 0.0
        %v2351 = vmax.f32 %v2101, 0.0
        %v2352 = vmax.f32 %v2106, 0.0
        %v2353 = vmax.f32 %v2111, 0.0
        %v2354 = vmax.f32 %v2116, 0.0
        %v2355 = vmax.f32 %v2121, 0.0
        %v2356 = vmax.f32 %v2126, 0.0
        %v2357 = vmax.f32 %v2131, 0.0
        %v2358 = vmax.f32 %v2136, 0.0
        %v2359 = vmax.f32 %v2141, 0.0
        %v2360 = vmax.f32 %v2146, 0.0
        %v2361 = vmax.f32 %v2151, 0.0
        %v2362 = vmax.f32 %v2156, 0.0
        %v2363 = vmax.f32 %v2161, 0.0
        %v2364 = vmax.f32 %v2166, 0.0
        %v2365 = vmax.f32 %v2171, 0.0
        %v2366 = vmax.f32 %v2176, 0.0
        %v2367 = vmax.f32 %v2181, 0.0
        %v2368 = vmax.f32 %v2186, 0.0
        %v2369 = vmax.f32 %v2191, 0.0
        %v2370 = vmax.f32 %v2196, 0.0
        %v2371 = vmax.f32 %v2201, 0.0
        %v2372 = vmax.f32 %v2206, 0.0
        %v2373 = vmax.f32 %v2211, 0.0
        %v2374 = vmax.f32 %v2216, 0.0
        %v2375 = vmax.f32 %v2221, 0.0
        %v2376 = vmax.f32 %v2226, 0.0
        %v2377 = vmax.f32 %v2231, 0.0
        %v2378 = vmax.f32 %v2234, %v2270
        %v2379 = vmax.f32 %v2235, %v2271
        %v2380 = vmax.f32 %v2236, %v2272
        %v2381 = vmax.f32 %v2237, %v2273
        %v2382 = vmax.f32 %v2238, %v2274
        %v2383 = vmax.f32 %v2239, %v2275
        %v2384 = vmax.f32 %v2240, %v2276
        %v2385 = vmax.f32 %v2241, %v2277
        %v2386 = vmax.f32 %v2242, %v2278
        %v2387 = vmax.f32 %v2243, %v2279
        %v2388 = vmax.f32 %v2244, %v2280
        %v2389 = vmax.f32 %v2245, %v2281
        %v2390 = vmax.f32 %v2246, %v2282
        %v2391 = vmax.f32 %v2247, %v2283
        %v2392 = vmax.f32 %v2248, %v2284
        %v2393 = vmax.f32 %v2249, %v2285
        %v2394 = vmax.f32 %v2250, %v2286
        %v2395 = vmax.f32 %v2251, %v2287
        %v2396 = vmax.f32 %v2252, %v2288
        %v2397 = vmax.f32 %v2253, %v2289
        %v2398 = vmax.f32 %v2254, %v2290
        %v2399 = vmax.f32 %v2255, %v2291
        %v2400 = vmax.f32 %v2256, %v2292
        %v2401 = vmax.f32 %v2257, %v2293
        %v2402 = vmax.f32 %v2258, %v2294
        %v2403 = vmax.f32 %v2259, %v2295
        %v2404 = vmax.f32 %v2260, %v2296
        %v2405 = vmax.f32 %v2261, %v2297
        %v2406 = vmax.f32 %v2262, %v2298
        %v2407 = vmax.f32 %v2263, %v2299
        %v2408 = vmax.f32 %v2264, %v2300
        %v2409 = vmax.f32 %v2265, %v2301
        %v2410 = vmax.f32 %v2266, %v2302
        %v2411 = vmax.f32 %v2267, %v2303
        %v2412 = vmax.f32 %v2268, %v2304
        %v2413 = vmax.f32 %v2269, %v2305
        %v2414 = vmax.f32 %v2306, %v2342
        %v2415 = vmax.f32 %v2307, %v2343
        %v2416 = vmax.f32 %v2308, %v2344
        %v2417 = vmax.f32 %v2309, %v2345
        %v2418 = vmax.f32 %v2310, %v2346
        %v2419 = vmax.f32 %v2311, %v2347
        %v2420 = vmax.f32 %v2312, %v2348
        %v2421 = vmax.f32 %v2313, %v2349
        %v2422 = vmax.f32 %v2314, %v2350
        %v2423 = vmax.f32 %v2315, %v2351
        %v2424 = vmax.f32 %v2316, %v2352
        %v2425 = vmax.f32 %v2317, %v2353
        %v2426 = vmax.f32 %v2318, %v2354
        %v2427 = vmax.f32 %v2319, %v2355
        %v2428 = vmax.f32 %v2320, %v2356
        %v2429 = vmax.f32 %v2321, %v2357
        %v2430 = vmax.f32 %v2322, %v2358
        %v2431 = vmax.f32 %v2323, %v2359
        %v2432 = vmax.f32 %v2324, %v2360
        %v2433 = vmax.f32 %v2325, %v2361
        %v2434 = vmax.f32 %v2326, %v2362
        %v2435 = vmax.f32 %v2327, %v2363
        %v2436 = vmax.f32 %v2328, %v2364
        %v2437 = vmax.f32 %v2329, %v2365
        %v2438 = vmax.f32 %v2330, %v2366
        %v2439 = vmax.f32 %v2331, %v2367
        %v2440 = vmax.f32 %v2332, %v2368
        %v2441 = vmax.f32 %v2333, %v2369
        %v2442 = vmax.f32 %v2334, %v2370
        %v2443 = vmax.f32 %v2335, %v2371
        %v2444 = vmax.f32 %v2336, %v2372
        %v2445 = vmax.f32 %v2337, %v2373
        %v2446 = vmax.f32 %v2338, %v2374
        %v2447 = vmax.f32 %v2339, %v2375
        %v2448 = vmax.f32 %v2340, %v2376
        %v2449 = vmax.f32 %v2341, %v2377
        %v2450 = vmax.f32 %v2378, %v2414
        %v2451 = vmax.f32 %v2379, %v2415
        %v2452 = vmax.f32 %v2380, %v2416
        %v2453 = vmax.f32 %v2381, %v2417
        %v2454 = vmax.f32 %v2382, %v2418
        %v2455 = vmax.f32 %v2383, %v2419
        %v2456 = vmax.f32 %v2384, %v2420
        %v2457 = vmax.f32 %v2385, %v2421
        %v2458 = vmax.f32 %v2386, %v2422
        %v2459 = vmax.f32 %v2387, %v2423
        %v2460 = vmax.f32 %v2388, %v2424
        %v2461 = vmax.f32 %v2389, %v2425
        %v2462 = vmax.f32 %v2390, %v2426
        %v2463 = vmax.f32 %v2391, %v2427
        %v2464 = vmax.f32 %v2392, %v2428
        %v2465 = vmax.f32 %v2393, %v2429
        %v2466 = vmax.f32 %v2394, %v2430
        %v2467 = vmax.f32 %v2395, %v2431
        %v2468 = vmax.f32 %v2396, %v2432
        %v2469 = vmax.f32 %v2397, %v2433
        %v2470 = vmax.f32 %v2398, %v2434
        %v2471 = vmax.f32 %v2399, %v2435
        %v2472 = vmax.f32 %v2400, %v2436
        %v2473 = vmax.f32 %v2401, %v2437
        %v2474 = vmax.f32 %v2402, %v2438
        %v2475 = vmax.f32 %v2403, %v2439
        %v2476 = vmax.f32 %v2404, %v2440
        %v2477 = vmax.f32 %v2405, %v2441
        %v2478 = vmax.f32 %v2406, %v2442
        %v2479 = vmax.f32 %v2407, %v2443
        %v2480 = vmax.f32 %v2408, %v2444
        %v2481 = vmax.f32 %v2409, %v2445
        %v2482 = vmax.f32 %v2410, %v2446
        %v2483 = vmax.f32 %v2411, %v2447
        %v2484 = vmax.f32 %v2412, %v2448
        %v2485 = vmax.f32 %v2413, %v2449
        %v2486 = vld [vmem:[%s1] sm:$0xff]
        %v2487 = vld [vmem:[%s1 + $0x8] sm:$0xff]
        %v2488 = vld [vmem:[%s1 + $0x10] sm:$0xff]
        %v2489 = vld [vmem:[%s1 + $0x18] sm:$0xff]
        %v2490 = vld [vmem:[%s1 + $0x20] sm:$0xff]
        %v2491 = vld [vmem:[%s1 + $0x28] sm:$0xff]
        %v2492 = vld [vmem:[%s1 + $0x30] sm:$0xff]
        %v2493 = vld [vmem:[%s1 + $0x38] sm:$0xff]
        %v2494 = vld [vmem:[%s1 + $0x40] sm:$0xff]
        %v2495 = vld [vmem:[%s1 + $0x48] sm:$0xff]
        %v2496 = vld [vmem:[%s1 + $0x50] sm:$0xff]
        %v2497 = vld [vmem:[%s1 + $0x58] sm:$0xff]
        %v2498 = vld [vmem:[%s1 + $0x60] sm:$0xff]
        %v2499 = vld [vmem:[%s1 + $0x68] sm:$0xff]
        %v2500 = vld [vmem:[%s1 + $0x70] sm:$0xff]
        %v2501 = vld [vmem:[%s1 + $0x78] sm:$0xff]
        %v2502 = vld [vmem:[%s1 + $0x80] sm:$0xff]
        %v2503 = vld [vmem:[%s1 + $0x88] sm:$0xff]
        %v2504 = vld [vmem:[%s1 + $0x90] sm:$0xff]
        %v2505 = vld [vmem:[%s1 + $0x98] sm:$0xff]
        %v2506 = vld [vmem:[%s1 + $0xa0] sm:$0xff]
        %v2507 = vld [vmem:[%s1 + $0xa8] sm:$0xff]
        %v2508 = vld [vmem:[%s1 + $0xb0] sm:$0xff]
        %v2509 = vld [vmem:[%s1 + $0xb8] sm:$0xff]
        %v2510 = vld [vmem:[%s1 + $0xc0] sm:$0xff]
        %v2511 = vld [vmem:[%s1 + $0xc8] sm:$0xff]
        %v2512 = vld [vmem:[%s1 + $0xd0] sm:$0xff]
        %v2513 = vld [vmem:[%s1 + $0xd8] sm:$0xff]
        %v2514 = vld [vmem:[%s1 + $0xe0] sm:$0xff]
        %v2515 = vld [vmem:[%s1 + $0xe8] sm:$0xff]
        %v2516 = vld [vmem:[%s1 + $0xf0] sm:$0xff]
        %v2517 = vld [vmem:[%s1 + $0xf8] sm:$0xff]
        %v2518 = vld [vmem:[%s1 + $0x100] sm:$0xff]
        %v2519 = vld [vmem:[%s1 + $0x108] sm:$0xff]
        %v2520 = vld [vmem:[%s1 + $0x110] sm:$0xff]
        %v2521 = vld [vmem:[%s1 + $0x118] sm:$0xff]
        %2523 = vset.pattern.permute.xlu0 0
        %2524 = vperm.xlu0 %2523, %v2486
        %v2525 = vpop.permute.xlu0 %2524
        %2528 = vset.pattern.permute.xlu0 0
        %2529 = vperm.xlu0 %2528, %v2487
        %v2530 = vpop.permute.xlu0 %2529
        %2533 = vset.pattern.permute.xlu0 0
        %2534 = vperm.xlu0 %2533, %v2488
        %v2535 = vpop.permute.xlu0 %2534
        %2538 = vset.pattern.permute.xlu0 0
        %2539 = vperm.xlu0 %2538, %v2489
        %v2540 = vpop.permute.xlu0 %2539
        %2543 = vset.pattern.permute.xlu0 0
        %2544 = vperm.xlu0 %2543, %v2490
        %v2545 = vpop.permute.xlu0 %2544
        %2548 = vset.pattern.permute.xlu0 0
        %2549 = vperm.xlu0 %2548, %v2491
        %v2550 = vpop.permute.xlu0 %2549
        %2553 = vset.pattern.permute.xlu0 0
        %2554 = vperm.xlu0 %2553, %v2492
        %v2555 = vpop.permute.xlu0 %2554
        %2558 = vset.pattern.permute.xlu0 0
        %2559 = vperm.xlu0 %2558, %v2493
        %v2560 = vpop.permute.xlu0 %2559
        %2563 = vset.pattern.permute.xlu0 0
        %2564 = vperm.xlu0 %2563, %v2494
        %v2565 = vpop.permute.xlu0 %2564
        %2568 = vset.pattern.permute.xlu0 0
        %2569 = vperm.xlu0 %2568, %v2495
        %v2570 = vpop.permute.xlu0 %2569
        %2573 = vset.pattern.permute.xlu0 0
        %2574 = vperm.xlu0 %2573, %v2496
        %v2575 = vpop.permute.xlu0 %2574
        %2578 = vset.pattern.permute.xlu0 0
        %2579 = vperm.xlu0 %2578, %v2497
        %v2580 = vpop.permute.xlu0 %2579
        %2583 = vset.pattern.permute.xlu0 0
        %2584 = vperm.xlu0 %2583, %v2498
        %v2585 = vpop.permute.xlu0 %2584
        %2588 = vset.pattern.permute.xlu0 0
        %2589 = vperm.xlu0 %2588, %v2499
        %v2590 = vpop.permute.xlu0 %2589
        %2593 = vset.pattern.permute.xlu0 0
        %2594 = vperm.xlu0 %2593, %v2500
        %v2595 = vpop.permute.xlu0 %2594
        %2598 = vset.pattern.permute.xlu0 0
        %2599 = vperm.xlu0 %2598, %v2501
        %v2600 = vpop.permute.xlu0 %2599
        %2603 = vset.pattern.permute.xlu0 0
        %2604 = vperm.xlu0 %2603, %v2502
        %v2605 = vpop.permute.xlu0 %2604
        %2608 = vset.pattern.permute.xlu0 0
        %2609 = vperm.xlu0 %2608, %v2503
        %v2610 = vpop.permute.xlu0 %2609
        %2613 = vset.pattern.permute.xlu0 0
        %2614 = vperm.xlu0 %2613, %v2504
        %v2615 = vpop.permute.xlu0 %2614
        %2618 = vset.pattern.permute.xlu0 0
        %2619 = vperm.xlu0 %2618, %v2505
        %v2620 = vpop.permute.xlu0 %2619
        %2623 = vset.pattern.permute.xlu0 0
        %2624 = vperm.xlu0 %2623, %v2506
        %v2625 = vpop.permute.xlu0 %2624
        %2628 = vset.pattern.permute.xlu0 0
        %2629 = vperm.xlu0 %2628, %v2507
        %v2630 = vpop.permute.xlu0 %2629
        %2633 = vset.pattern.permute.xlu0 0
        %2634 = vperm.xlu0 %2633, %v2508
        %v2635 = vpop.permute.xlu0 %2634
        %2638 = vset.pattern.permute.xlu0 0
        %2639 = vperm.xlu0 %2638, %v2509
        %v2640 = vpop.permute.xlu0 %2639
        %2643 = vset.pattern.permute.xlu0 0
        %2644 = vperm.xlu0 %2643, %v2510
        %v2645 = vpop.permute.xlu0 %2644
        %2648 = vset.pattern.permute.xlu0 0
        %2649 = vperm.xlu0 %2648, %v2511
        %v2650 = vpop.permute.xlu0 %2649
        %2653 = vset.pattern.permute.xlu0 0
        %2654 = vperm.xlu0 %2653, %v2512
        %v2655 = vpop.permute.xlu0 %2654
        %2658 = vset.pattern.permute.xlu0 0
        %2659 = vperm.xlu0 %2658, %v2513
        %v2660 = vpop.permute.xlu0 %2659
        %2663 = vset.pattern.permute.xlu0 0
        %2664 = vperm.xlu0 %2663, %v2514
        %v2665 = vpop.permute.xlu0 %2664
        %2668 = vset.pattern.permute.xlu0 0
        %2669 = vperm.xlu0 %2668, %v2515
        %v2670 = vpop.permute.xlu0 %2669
        %2673 = vset.pattern.permute.xlu0 0
        %2674 = vperm.xlu0 %2673, %v2516
        %v2675 = vpop.permute.xlu0 %2674
        %2678 = vset.pattern.permute.xlu0 0
        %2679 = vperm.xlu0 %2678, %v2517
        %v2680 = vpop.permute.xlu0 %2679
        %2683 = vset.pattern.permute.xlu0 0
        %2684 = vperm.xlu0 %2683, %v2518
        %v2685 = vpop.permute.xlu0 %2684
        %2688 = vset.pattern.permute.xlu0 0
        %2689 = vperm.xlu0 %2688, %v2519
        %v2690 = vpop.permute.xlu0 %2689
        %2693 = vset.pattern.permute.xlu0 0
        %2694 = vperm.xlu0 %2693, %v2520
        %v2695 = vpop.permute.xlu0 %2694
        %2698 = vset.pattern.permute.xlu0 0
        %2699 = vperm.xlu0 %2698, %v2521
        %v2700 = vpop.permute.xlu0 %2699
        %v2702 = vmul.f32 %v2450, %v2525
        %v2703 = vmul.f32 %v2451, %v2530
        %v2704 = vmul.f32 %v2452, %v2535
        %v2705 = vmul.f32 %v2453, %v2540
        %v2706 = vmul.f32 %v2454, %v2545
        %v2707 = vmul.f32 %v2455, %v2550
        %v2708 = vmul.f32 %v2456, %v2555
        %v2709 = vmul.f32 %v2457, %v2560
        %v2710 = vmul.f32 %v2458, %v2565
        %v2711 = vmul.f32 %v2459, %v2570
        %v2712 = vmul.f32 %v2460, %v2575
        %v2713 = vmul.f32 %v2461, %v2580
        %v2714 = vmul.f32 %v2462, %v2585
        %v2715 = vmul.f32 %v2463, %v2590
        %v2716 = vmul.f32 %v2464, %v2595
        %v2717 = vmul.f32 %v2465, %v2600
        %v2718 = vmul.f32 %v2466, %v2605
        %v2719 = vmul.f32 %v2467, %v2610
        %v2720 = vmul.f32 %v2468, %v2615
        %v2721 = vmul.f32 %v2469, %v2620
        %v2722 = vmul.f32 %v2470, %v2625
        %v2723 = vmul.f32 %v2471, %v2630
        %v2724 = vmul.f32 %v2472, %v2635
        %v2725 = vmul.f32 %v2473, %v2640
        %v2726 = vmul.f32 %v2474, %v2645
        %v2727 = vmul.f32 %v2475, %v2650
        %v2728 = vmul.f32 %v2476, %v2655
        %v2729 = vmul.f32 %v2477, %v2660
        %v2730 = vmul.f32 %v2478, %v2665
        %v2731 = vmul.f32 %v2479, %v2670
        %v2732 = vmul.f32 %v2480, %v2675
        %v2733 = vmul.f32 %v2481, %v2680
        %v2734 = vmul.f32 %v2482, %v2685
        %v2735 = vmul.f32 %v2483, %v2690
        %v2736 = vmul.f32 %v2484, %v2695
        %v2737 = vmul.f32 %v2485, %v2700
        %vm2738 = vcmask 261120
        %2739 = vst.msk [vmem:[#allocation2] sm:$0xff] %vm2738, %v2702
        %2740 = vst.msk [vmem:[#allocation2 + $0x8] sm:$0xff] %vm2738, %v2703
        %2741 = vst.msk [vmem:[#allocation2 + $0x10] sm:$0xff] %vm2738, %v2704
        %2742 = vst.msk [vmem:[#allocation2 + $0x18] sm:$0xff] %vm2738, %v2705
        %2743 = vst.msk [vmem:[#allocation2 + $0x20] sm:$0xff] %vm2738, %v2706
        %2744 = vst.msk [vmem:[#allocation2 + $0x28] sm:$0xff] %vm2738, %v2707
        %2745 = vst.msk [vmem:[#allocation2 + $0x30] sm:$0xff] %vm2738, %v2708
        %2746 = vst.msk [vmem:[#allocation2 + $0x38] sm:$0xff] %vm2738, %v2709
        %2747 = vst.msk [vmem:[#allocation2 + $0x40] sm:$0xff] %vm2738, %v2710
        %2748 = vst.msk [vmem:[#allocation2 + $0x48] sm:$0xff] %vm2738, %v2711
        %2749 = vst.msk [vmem:[#allocation2 + $0x50] sm:$0xff] %vm2738, %v2712
        %2750 = vst.msk [vmem:[#allocation2 + $0x58] sm:$0xff] %vm2738, %v2713
        %2751 = vst.msk [vmem:[#allocation2 + $0x60] sm:$0xff] %vm2738, %v2714
        %2752 = vst.msk [vmem:[#allocation2 + $0x68] sm:$0xff] %vm2738, %v2715
        %2753 = vst.msk [vmem:[#allocation2 + $0x70] sm:$0xff] %vm2738, %v2716
        %2754 = vst.msk [vmem:[#allocation2 + $0x78] sm:$0xff] %vm2738, %v2717
        %2755 = vst.msk [vmem:[#allocation2 + $0x80] sm:$0xff] %vm2738, %v2718
        %2756 = vst.msk [vmem:[#allocation2 + $0x88] sm:$0xff] %vm2738, %v2719
        %2757 = vst.msk [vmem:[#allocation2 + $0x90] sm:$0xff] %vm2738, %v2720
        %2758 = vst.msk [vmem:[#allocation2 + $0x98] sm:$0xff] %vm2738, %v2721
        %2759 = vst.msk [vmem:[#allocation2 + $0xa0] sm:$0xff] %vm2738, %v2722
        %2760 = vst.msk [vmem:[#allocation2 + $0xa8] sm:$0xff] %vm2738, %v2723
        %2761 = vst.msk [vmem:[#allocation2 + $0xb0] sm:$0xff] %vm2738, %v2724
        %2762 = vst.msk [vmem:[#allocation2 + $0xb8] sm:$0xff] %vm2738, %v2725
        %2763 = vst.msk [vmem:[#allocation2 + $0xc0] sm:$0xff] %vm2738, %v2726
        %2764 = vst.msk [vmem:[#allocation2 + $0xc8] sm:$0xff] %vm2738, %v2727
        %2765 = vst.msk [vmem:[#allocation2 + $0xd0] sm:$0xff] %vm2738, %v2728
        %2766 = vst.msk [vmem:[#allocation2 + $0xd8] sm:$0xff] %vm2738, %v2729
        %2767 = vst.msk [vmem:[#allocation2 + $0xe0] sm:$0xff] %vm2738, %v2730
        %2768 = vst.msk [vmem:[#allocation2 + $0xe8] sm:$0xff] %vm2738, %v2731
        %2769 = vst.msk [vmem:[#allocation2 + $0xf0] sm:$0xff] %vm2738, %v2732
        %2770 = vst.msk [vmem:[#allocation2 + $0xf8] sm:$0xff] %vm2738, %v2733
        %2771 = vst.msk [vmem:[#allocation2 + $0x100] sm:$0xff] %vm2738, %v2734
        %2772 = vst.msk [vmem:[#allocation2 + $0x108] sm:$0xff] %vm2738, %v2735
        %2773 = vst.msk [vmem:[#allocation2 + $0x110] sm:$0xff] %vm2738, %v2736
        %2774 = vst.msk [vmem:[#allocation2 + $0x118] sm:$0xff] %vm2738, %v2737
        %v2775 = vld [vmem:[#allocation2] sm:$0xff]
        %v2776 = vld [vmem:[#allocation2 + $0x8] sm:$0xff]
        %v2777 = vld [vmem:[#allocation2 + $0x10] sm:$0xff]
        %v2778 = vld [vmem:[#allocation2 + $0x18] sm:$0xff]
        %v2779 = vld [vmem:[#allocation2 + $0x20] sm:$0xff]
        %v2780 = vld [vmem:[#allocation2 + $0x28] sm:$0xff]
        %v2781 = vld [vmem:[#allocation2 + $0x30] sm:$0xff]
        %s2782 = scalar_lea.vmem [#allocation2], 72
        %v2783 = vld [vmem:[%s2782] sm:$0xff]
        %v2784 = vld [vmem:[%s2782 + $0x8] sm:$0xff]
        %v2785 = vld [vmem:[%s2782 + $0x10] sm:$0xff]
        %v2786 = vld [vmem:[%s2782 + $0x18] sm:$0xff]
        %v2787 = vld [vmem:[%s2782 + $0x20] sm:$0xff]
        %v2788 = vld [vmem:[%s2782 + $0x28] sm:$0xff]
        %v2789 = vld [vmem:[%s2782 + $0x30] sm:$0xff]
        %v2790 = vld [vmem:[#allocation2 + $0x1] sm:$0xff]
        %v2791 = vld [vmem:[#allocation2 + $0x9] sm:$0xff]
        %v2792 = vld [vmem:[#allocation2 + $0x11] sm:$0xff]
        %v2793 = vld [vmem:[#allocation2 + $0x19] sm:$0xff]
        %v2794 = vld [vmem:[#allocation2 + $0x21] sm:$0xff]
        %v2795 = vld [vmem:[#allocation2 + $0x29] sm:$0xff]
        %v2796 = vld [vmem:[#allocation2 + $0x31] sm:$0xff]
        %s2797 = scalar_lea.vmem [#allocation2], 144
        %v2798 = vld [vmem:[%s2797] sm:$0xff]
        %v2799 = vld [vmem:[%s2797 + $0x8] sm:$0xff]
        %v2800 = vld [vmem:[%s2797 + $0x10] sm:$0xff]
        %v2801 = vld [vmem:[%s2797 + $0x18] sm:$0xff]
        %v2802 = vld [vmem:[%s2797 + $0x20] sm:$0xff]
        %v2803 = vld [vmem:[%s2797 + $0x28] sm:$0xff]
        %v2804 = vld [vmem:[%s2797 + $0x30] sm:$0xff]
        %s2805 = scalar_lea.vmem [#allocation2], 216
        %v2806 = vld [vmem:[%s2805] sm:$0xff]
        %v2807 = vld [vmem:[%s2805 + $0x8] sm:$0xff]
        %v2808 = vld [vmem:[%s2805 + $0x10] sm:$0xff]
        %v2809 = vld [vmem:[%s2805 + $0x18] sm:$0xff]
        %v2810 = vld [vmem:[%s2805 + $0x20] sm:$0xff]
        %v2811 = vld [vmem:[%s2805 + $0x28] sm:$0xff]
        %v2812 = vld [vmem:[%s2805 + $0x30] sm:$0xff]
        %v2813 = vld [vmem:[%s2797 + $0x1] sm:$0xff]
        %v2814 = vld [vmem:[%s2797 + $0x9] sm:$0xff]
        %v2815 = vld [vmem:[%s2797 + $0x11] sm:$0xff]
        %v2816 = vld [vmem:[%s2797 + $0x19] sm:$0xff]
        %v2817 = vld [vmem:[%s2797 + $0x21] sm:$0xff]
        %v2818 = vld [vmem:[%s2797 + $0x29] sm:$0xff]
        %v2819 = vld [vmem:[%s2797 + $0x31] sm:$0xff]
        %v2820 = vld [vmem:[#allocation2 + $0x38] sm:$0xff]
        %v2821 = vld [vmem:[%s2782 + $0x38] sm:$0xff]
        %v2822 = vld [vmem:[#allocation2 + $0x39] sm:$0xff]
        %2830 = vrot.lane.b32.xlu0 %v2783, 32
        %v2831 = vpop.permute.xlu0 %2830
        %2832 = vrot.lane.b32.xlu0 %v2784, 32
        %v2833 = vpop.permute.xlu0 %2832
        %2834 = vrot.lane.b32.xlu0 %v2785, 32
        %v2835 = vpop.permute.xlu0 %2834
        %2836 = vrot.lane.b32.xlu0 %v2786, 32
        %v2837 = vpop.permute.xlu0 %2836
        %2838 = vrot.lane.b32.xlu0 %v2787, 32
        %v2839 = vpop.permute.xlu0 %2838
        %2840 = vrot.lane.b32.xlu0 %v2788, 32
        %v2841 = vpop.permute.xlu0 %2840
        %2842 = vrot.lane.b32.xlu0 %v2789, 32
        %v2843 = vpop.permute.xlu0 %2842
        %2858 = vrot.lane.b32.xlu0 %v2790, 64
        %v2859 = vpop.permute.xlu0 %2858
        %2860 = vrot.lane.b32.xlu0 %v2791, 64
        %v2861 = vpop.permute.xlu0 %2860
        %2862 = vrot.lane.b32.xlu0 %v2792, 64
        %v2863 = vpop.permute.xlu0 %2862
        %2864 = vrot.lane.b32.xlu0 %v2793, 64
        %v2865 = vpop.permute.xlu0 %2864
        %2866 = vrot.lane.b32.xlu0 %v2794, 64
        %v2867 = vpop.permute.xlu0 %2866
        %2868 = vrot.lane.b32.xlu0 %v2795, 64
        %v2869 = vpop.permute.xlu0 %2868
        %2870 = vrot.lane.b32.xlu0 %v2796, 64
        %v2871 = vpop.permute.xlu0 %2870
        %2886 = vrot.lane.b32.xlu0 %v2798, 96
        %v2887 = vpop.permute.xlu0 %2886
        %2888 = vrot.lane.b32.xlu0 %v2799, 96
        %v2889 = vpop.permute.xlu0 %2888
        %2890 = vrot.lane.b32.xlu0 %v2800, 96
        %v2891 = vpop.permute.xlu0 %2890
        %2892 = vrot.lane.b32.xlu0 %v2801, 96
        %v2893 = vpop.permute.xlu0 %2892
        %2894 = vrot.lane.b32.xlu0 %v2802, 96
        %v2895 = vpop.permute.xlu0 %2894
        %2896 = vrot.lane.b32.xlu0 %v2803, 96
        %v2897 = vpop.permute.xlu0 %2896
        %2898 = vrot.lane.b32.xlu0 %v2804, 96
        %v2899 = vpop.permute.xlu0 %2898
        %2914 = vrot.lane.b32.xlu0 %v2813, 32
        %v2915 = vpop.permute.xlu0 %2914
        %2916 = vrot.lane.b32.xlu0 %v2814, 32
        %v2917 = vpop.permute.xlu0 %2916
        %2918 = vrot.lane.b32.xlu0 %v2815, 32
        %v2919 = vpop.permute.xlu0 %2918
        %2920 = vrot.lane.b32.xlu0 %v2816, 32
        %v2921 = vpop.permute.xlu0 %2920
        %2922 = vrot.lane.b32.xlu0 %v2817, 32
        %v2923 = vpop.permute.xlu0 %2922
        %2924 = vrot.lane.b32.xlu0 %v2818, 32
        %v2925 = vpop.permute.xlu0 %2924
        %2926 = vrot.lane.b32.xlu0 %v2819, 32
        %v2927 = vpop.permute.xlu0 %2926
        %2942 = vrot.lane.b32.xlu0 %v2776, 64
        %v2943 = vpop.permute.xlu0 %2942
        %2944 = vrot.lane.b32.xlu0 %v2777, 64
        %v2945 = vpop.permute.xlu0 %2944
        %2946 = vrot.lane.b32.xlu0 %v2778, 64
        %v2947 = vpop.permute.xlu0 %2946
        %2948 = vrot.lane.b32.xlu0 %v2779, 64
        %v2949 = vpop.permute.xlu0 %2948
        %2950 = vrot.lane.b32.xlu0 %v2780, 64
        %v2951 = vpop.permute.xlu0 %2950
        %2952 = vrot.lane.b32.xlu0 %v2781, 64
        %v2953 = vpop.permute.xlu0 %2952
        %2954 = vrot.lane.b32.xlu0 %v2820, 64
        %v2955 = vpop.permute.xlu0 %2954
        %2964 = vrot.lane.b32.xlu0 %v2784, 96
        %v2965 = vpop.permute.xlu0 %2964
        %2966 = vrot.lane.b32.xlu0 %v2785, 96
        %v2967 = vpop.permute.xlu0 %2966
        %2968 = vrot.lane.b32.xlu0 %v2786, 96
        %v2969 = vpop.permute.xlu0 %2968
        %2970 = vrot.lane.b32.xlu0 %v2787, 96
        %v2971 = vpop.permute.xlu0 %2970
        %2972 = vrot.lane.b32.xlu0 %v2788, 96
        %v2973 = vpop.permute.xlu0 %2972
        %2974 = vrot.lane.b32.xlu0 %v2789, 96
        %v2975 = vpop.permute.xlu0 %2974
        %2976 = vrot.lane.b32.xlu0 %v2821, 96
        %v2977 = vpop.permute.xlu0 %2976
        %v2985 = vsel %vm2738, %v2775, %v2831
        %v2986 = vsel %vm2738, %v2776, %v2833
        %v2987 = vsel %vm2738, %v2777, %v2835
        %v2988 = vsel %vm2738, %v2778, %v2837
        %v2989 = vsel %vm2738, %v2779, %v2839
        %v2990 = vsel %vm2738, %v2780, %v2841
        %v2991 = vsel %vm2738, %v2781, %v2843
        %vm2992 = vcmask 523264
        %v2993 = vsel %vm2992, %v2985, %v2859
        %v2994 = vsel %vm2992, %v2986, %v2861
        %v2995 = vsel %vm2992, %v2987, %v2863
        %v2996 = vsel %vm2992, %v2988, %v2865
        %v2997 = vsel %vm2992, %v2989, %v2867
        %v2998 = vsel %vm2992, %v2990, %v2869
        %v2999 = vsel %vm2992, %v2991, %v2871
        %vm3000 = vcmask 785408
        %v3001 = vsel %vm3000, %v2993, %v2887
        %v3002 = vsel %vm3000, %v2994, %v2889
        %v3003 = vsel %vm3000, %v2995, %v2891
        %v3004 = vsel %vm3000, %v2996, %v2893
        %v3005 = vsel %vm3000, %v2997, %v2895
        %v3006 = vsel %vm3000, %v2998, %v2897
        %v3007 = vsel %vm3000, %v2999, %v2899
        %v3008 = vsel %vm2738, %v2806, %v2915
        %v3009 = vsel %vm2738, %v2807, %v2917
        %v3010 = vsel %vm2738, %v2808, %v2919
        %v3011 = vsel %vm2738, %v2809, %v2921
        %v3012 = vsel %vm2738, %v2810, %v2923
        %v3013 = vsel %vm2738, %v2811, %v2925
        %v3014 = vsel %vm2738, %v2812, %v2927
        %v3015 = vsel %vm2992, %v3008, %v2943
        %v3016 = vsel %vm2992, %v3009, %v2945
        %v3017 = vsel %vm2992, %v3010, %v2947
        %v3018 = vsel %vm2992, %v3011, %v2949
        %v3019 = vsel %vm2992, %v3012, %v2951
        %v3020 = vsel %vm2992, %v3013, %v2953
        %v3021 = vsel %vm2992, %v3014, %v2955
        %v3022 = vsel %vm3000, %v3015, %v2965
        %v3023 = vsel %vm3000, %v3016, %v2967
        %v3024 = vsel %vm3000, %v3017, %v2969
        %v3025 = vsel %vm3000, %v3018, %v2971
        %v3026 = vsel %vm3000, %v3019, %v2973
        %v3027 = vsel %vm3000, %v3020, %v2975
        %v3028 = vsel %vm3000, %v3021, %v2977
        %v3029 = vld [vmem:[%s2782 + $0x1] sm:$0xff]
        %v3030 = vld [vmem:[%s2782 + $0x9] sm:$0xff]
        %v3031 = vld [vmem:[%s2782 + $0x11] sm:$0xff]
        %v3032 = vld [vmem:[%s2782 + $0x19] sm:$0xff]
        %v3033 = vld [vmem:[%s2782 + $0x21] sm:$0xff]
        %v3034 = vld [vmem:[%s2782 + $0x29] sm:$0xff]
        %v3035 = vld [vmem:[%s2782 + $0x31] sm:$0xff]
        %v3036 = vld [vmem:[%s2805 + $0x1] sm:$0xff]
        %v3037 = vld [vmem:[%s2805 + $0x9] sm:$0xff]
        %v3038 = vld [vmem:[%s2805 + $0x11] sm:$0xff]
        %v3039 = vld [vmem:[%s2805 + $0x19] sm:$0xff]
        %v3040 = vld [vmem:[%s2805 + $0x21] sm:$0xff]
        %v3041 = vld [vmem:[%s2805 + $0x29] sm:$0xff]
        %v3042 = vld [vmem:[%s2805 + $0x31] sm:$0xff]
        %v3043 = vld [vmem:[%s2782 + $0x39] sm:$0xff]
        %3044 = vrot.lane.b32.xlu0 %v2790, 32
        %v3045 = vpop.permute.xlu0 %3044
        %3046 = vrot.lane.b32.xlu0 %v2791, 32
        %v3047 = vpop.permute.xlu0 %3046
        %3048 = vrot.lane.b32.xlu0 %v2792, 32
        %v3049 = vpop.permute.xlu0 %3048
        %3050 = vrot.lane.b32.xlu0 %v2793, 32
        %v3051 = vpop.permute.xlu0 %3050
        %3052 = vrot.lane.b32.xlu0 %v2794, 32
        %v3053 = vpop.permute.xlu0 %3052
        %3054 = vrot.lane.b32.xlu0 %v2795, 32
        %v3055 = vpop.permute.xlu0 %3054
        %3056 = vrot.lane.b32.xlu0 %v2796, 32
        %v3057 = vpop.permute.xlu0 %3056
        %3072 = vrot.lane.b32.xlu0 %v3029, 64
        %v3073 = vpop.permute.xlu0 %3072
        %3074 = vrot.lane.b32.xlu0 %v3030, 64
        %v3075 = vpop.permute.xlu0 %3074
        %3076 = vrot.lane.b32.xlu0 %v3031, 64
        %v3077 = vpop.permute.xlu0 %3076
        %3078 = vrot.lane.b32.xlu0 %v3032, 64
        %v3079 = vpop.permute.xlu0 %3078
        %3080 = vrot.lane.b32.xlu0 %v3033, 64
        %v3081 = vpop.permute.xlu0 %3080
        %3082 = vrot.lane.b32.xlu0 %v3034, 64
        %v3083 = vpop.permute.xlu0 %3082
        %3084 = vrot.lane.b32.xlu0 %v3035, 64
        %v3085 = vpop.permute.xlu0 %3084
        %3100 = vrot.lane.b32.xlu0 %v2806, 96
        %v3101 = vpop.permute.xlu0 %3100
        %3102 = vrot.lane.b32.xlu0 %v2807, 96
        %v3103 = vpop.permute.xlu0 %3102
        %3104 = vrot.lane.b32.xlu0 %v2808, 96
        %v3105 = vpop.permute.xlu0 %3104
        %3106 = vrot.lane.b32.xlu0 %v2809, 96
        %v3107 = vpop.permute.xlu0 %3106
        %3108 = vrot.lane.b32.xlu0 %v2810, 96
        %v3109 = vpop.permute.xlu0 %3108
        %3110 = vrot.lane.b32.xlu0 %v2811, 96
        %v3111 = vpop.permute.xlu0 %3110
        %3112 = vrot.lane.b32.xlu0 %v2812, 96
        %v3113 = vpop.permute.xlu0 %3112
        %3128 = vrot.lane.b32.xlu0 %v3036, 32
        %v3129 = vpop.permute.xlu0 %3128
        %3130 = vrot.lane.b32.xlu0 %v3037, 32
        %v3131 = vpop.permute.xlu0 %3130
        %3132 = vrot.lane.b32.xlu0 %v3038, 32
        %v3133 = vpop.permute.xlu0 %3132
        %3134 = vrot.lane.b32.xlu0 %v3039, 32
        %v3135 = vpop.permute.xlu0 %3134
        %3136 = vrot.lane.b32.xlu0 %v3040, 32
        %v3137 = vpop.permute.xlu0 %3136
        %3138 = vrot.lane.b32.xlu0 %v3041, 32
        %v3139 = vpop.permute.xlu0 %3138
        %3140 = vrot.lane.b32.xlu0 %v3042, 32
        %v3141 = vpop.permute.xlu0 %3140
        %3149 = vrot.lane.b32.xlu0 %v2784, 64
        %v3150 = vpop.permute.xlu0 %3149
        %3151 = vrot.lane.b32.xlu0 %v2785, 64
        %v3152 = vpop.permute.xlu0 %3151
        %3153 = vrot.lane.b32.xlu0 %v2786, 64
        %v3154 = vpop.permute.xlu0 %3153
        %3155 = vrot.lane.b32.xlu0 %v2787, 64
        %v3156 = vpop.permute.xlu0 %3155
        %3157 = vrot.lane.b32.xlu0 %v2788, 64
        %v3158 = vpop.permute.xlu0 %3157
        %3159 = vrot.lane.b32.xlu0 %v2789, 64
        %v3160 = vpop.permute.xlu0 %3159
        %3161 = vrot.lane.b32.xlu0 %v2821, 64
        %v3162 = vpop.permute.xlu0 %3161
        %3171 = vrot.lane.b32.xlu0 %v2791, 96
        %v3172 = vpop.permute.xlu0 %3171
        %3173 = vrot.lane.b32.xlu0 %v2792, 96
        %v3174 = vpop.permute.xlu0 %3173
        %3175 = vrot.lane.b32.xlu0 %v2793, 96
        %v3176 = vpop.permute.xlu0 %3175
        %3177 = vrot.lane.b32.xlu0 %v2794, 96
        %v3178 = vpop.permute.xlu0 %3177
        %3179 = vrot.lane.b32.xlu0 %v2795, 96
        %v3180 = vpop.permute.xlu0 %3179
        %3181 = vrot.lane.b32.xlu0 %v2796, 96
        %v3182 = vpop.permute.xlu0 %3181
        %3183 = vrot.lane.b32.xlu0 %v2822, 96
        %v3184 = vpop.permute.xlu0 %3183
        %v3192 = vsel %vm2738, %v2783, %v3045
        %v3193 = vsel %vm2738, %v2784, %v3047
        %v3194 = vsel %vm2738, %v2785, %v3049
        %v3195 = vsel %vm2738, %v2786, %v3051
        %v3196 = vsel %vm2738, %v2787, %v3053
        %v3197 = vsel %vm2738, %v2788, %v3055
        %v3198 = vsel %vm2738, %v2789, %v3057
        %v3199 = vsel %vm2992, %v3192, %v3073
        %v3200 = vsel %vm2992, %v3193, %v3075
        %v3201 = vsel %vm2992, %v3194, %v3077
        %v3202 = vsel %vm2992, %v3195, %v3079
        %v3203 = vsel %vm2992, %v3196, %v3081
        %v3204 = vsel %vm2992, %v3197, %v3083
        %v3205 = vsel %vm2992, %v3198, %v3085
        %v3206 = vsel %vm3000, %v3199, %v3101
        %v3207 = vsel %vm3000, %v3200, %v3103
        %v3208 = vsel %vm3000, %v3201, %v3105
        %v3209 = vsel %vm3000, %v3202, %v3107
        %v3210 = vsel %vm3000, %v3203, %v3109
        %v3211 = vsel %vm3000, %v3204, %v3111
        %v3212 = vsel %vm3000, %v3205, %v3113
        %v3213 = vsel %vm2738, %v2813, %v3129
        %v3214 = vsel %vm2738, %v2814, %v3131
        %v3215 = vsel %vm2738, %v2815, %v3133
        %v3216 = vsel %vm2738, %v2816, %v3135
        %v3217 = vsel %vm2738, %v2817, %v3137
        %v3218 = vsel %vm2738, %v2818, %v3139
        %v3219 = vsel %vm2738, %v2819, %v3141
        %v3220 = vsel %vm2992, %v3213, %v3150
        %v3221 = vsel %vm2992, %v3214, %v3152
        %v3222 = vsel %vm2992, %v3215, %v3154
        %v3223 = vsel %vm2992, %v3216, %v3156
        %v3224 = vsel %vm2992, %v3217, %v3158
        %v3225 = vsel %vm2992, %v3218, %v3160
        %v3226 = vsel %vm2992, %v3219, %v3162
        %v3227 = vsel %vm3000, %v3220, %v3172
        %v3228 = vsel %vm3000, %v3221, %v3174
        %v3229 = vsel %vm3000, %v3222, %v3176
        %v3230 = vsel %vm3000, %v3223, %v3178
        %v3231 = vsel %vm3000, %v3224, %v3180
        %v3232 = vsel %vm3000, %v3225, %v3182
        %v3233 = vsel %vm3000, %v3226, %v3184
        %v3234 = vld [vmem:[%s2797 + $0x38] sm:$0xff]
        %v3235 = vld [vmem:[%s2805 + $0x38] sm:$0xff]
        %v3236 = vld [vmem:[%s2797 + $0x39] sm:$0xff]
        %3237 = vrot.lane.b32.xlu0 %v2806, 32
        %v3238 = vpop.permute.xlu0 %3237
        %3239 = vrot.lane.b32.xlu0 %v2807, 32
        %v3240 = vpop.permute.xlu0 %3239
        %3241 = vrot.lane.b32.xlu0 %v2808, 32
        %v3242 = vpop.permute.xlu0 %3241
        %3243 = vrot.lane.b32.xlu0 %v2809, 32
        %v3244 = vpop.permute.xlu0 %3243
        %3245 = vrot.lane.b32.xlu0 %v2810, 32
        %v3246 = vpop.permute.xlu0 %3245
        %3247 = vrot.lane.b32.xlu0 %v2811, 32
        %v3248 = vpop.permute.xlu0 %3247
        %3249 = vrot.lane.b32.xlu0 %v2812, 32
        %v3250 = vpop.permute.xlu0 %3249
        %3258 = vrot.lane.b32.xlu0 %v2813, 64
        %v3259 = vpop.permute.xlu0 %3258
        %3260 = vrot.lane.b32.xlu0 %v2814, 64
        %v3261 = vpop.permute.xlu0 %3260
        %3262 = vrot.lane.b32.xlu0 %v2815, 64
        %v3263 = vpop.permute.xlu0 %3262
        %3264 = vrot.lane.b32.xlu0 %v2816, 64
        %v3265 = vpop.permute.xlu0 %3264
        %3266 = vrot.lane.b32.xlu0 %v2817, 64
        %v3267 = vpop.permute.xlu0 %3266
        %3268 = vrot.lane.b32.xlu0 %v2818, 64
        %v3269 = vpop.permute.xlu0 %3268
        %3270 = vrot.lane.b32.xlu0 %v2819, 64
        %v3271 = vpop.permute.xlu0 %3270
        %3279 = vrot.lane.b32.xlu0 %v2776, 96
        %v3280 = vpop.permute.xlu0 %3279
        %3281 = vrot.lane.b32.xlu0 %v2777, 96
        %v3282 = vpop.permute.xlu0 %3281
        %3283 = vrot.lane.b32.xlu0 %v2778, 96
        %v3284 = vpop.permute.xlu0 %3283
        %3285 = vrot.lane.b32.xlu0 %v2779, 96
        %v3286 = vpop.permute.xlu0 %3285
        %3287 = vrot.lane.b32.xlu0 %v2780, 96
        %v3288 = vpop.permute.xlu0 %3287
        %3289 = vrot.lane.b32.xlu0 %v2781, 96
        %v3290 = vpop.permute.xlu0 %3289
        %3291 = vrot.lane.b32.xlu0 %v2820, 96
        %v3292 = vpop.permute.xlu0 %3291
        %3300 = vrot.lane.b32.xlu0 %v2822, 32
        %v3301 = vpop.permute.xlu0 %3300
        %3304 = vrot.lane.b32.xlu0 %v2799, 64
        %v3305 = vpop.permute.xlu0 %3304
        %3306 = vrot.lane.b32.xlu0 %v2800, 64
        %v3307 = vpop.permute.xlu0 %3306
        %3308 = vrot.lane.b32.xlu0 %v2801, 64
        %v3309 = vpop.permute.xlu0 %3308
        %3310 = vrot.lane.b32.xlu0 %v2802, 64
        %v3311 = vpop.permute.xlu0 %3310
        %3312 = vrot.lane.b32.xlu0 %v2803, 64
        %v3313 = vpop.permute.xlu0 %3312
        %3314 = vrot.lane.b32.xlu0 %v2804, 64
        %v3315 = vpop.permute.xlu0 %3314
        %3316 = vrot.lane.b32.xlu0 %v3234, 64
        %v3317 = vpop.permute.xlu0 %3316
        %3326 = vrot.lane.b32.xlu0 %v3235, 96
        %v3327 = vpop.permute.xlu0 %3326
        %v3329 = vsel %vm2738, %v2798, %v3238
        %v3330 = vsel %vm2738, %v2799, %v3240
        %v3331 = vsel %vm2738, %v2800, %v3242
        %v3332 = vsel %vm2738, %v2801, %v3244
        %v3333 = vsel %vm2738, %v2802, %v3246
        %v3334 = vsel %vm2738, %v2803, %v3248
        %v3335 = vsel %vm2738, %v2804, %v3250
        %v3336 = vsel %vm2992, %v3329, %v3259
        %v3337 = vsel %vm2992, %v3330, %v3261
        %v3338 = vsel %vm2992, %v3331, %v3263
        %v3339 = vsel %vm2992, %v3332, %v3265
        %v3340 = vsel %vm2992, %v3333, %v3267
        %v3341 = vsel %vm2992, %v3334, %v3269
        %v3342 = vsel %vm2992, %v3335, %v3271
        %v3343 = vsel %vm3000, %v3336, %v3280
        %v3344 = vsel %vm3000, %v3337, %v3282
        %v3345 = vsel %vm3000, %v3338, %v3284
        %v3346 = vsel %vm3000, %v3339, %v3286
        %v3347 = vsel %vm3000, %v3340, %v3288
        %v3348 = vsel %vm3000, %v3341, %v3290
        %v3349 = vsel %vm3000, %v3342, %v3292
        %v3350 = vsel %vm2738, %v2821, %v3301
        %v3351 = vsel %vm2992, %v3193, %v3305
        %v3352 = vsel %vm2992, %v3194, %v3307
        %v3353 = vsel %vm2992, %v3195, %v3309
        %v3354 = vsel %vm2992, %v3196, %v3311
        %v3355 = vsel %vm2992, %v3197, %v3313
        %v3356 = vsel %vm2992, %v3198, %v3315
        %v3357 = vsel %vm2992, %v3350, %v3317
        %v3358 = vsel %vm3000, %v3351, %v3103
        %v3359 = vsel %vm3000, %v3352, %v3105
        %v3360 = vsel %vm3000, %v3353, %v3107
        %v3361 = vsel %vm3000, %v3354, %v3109
        %v3362 = vsel %vm3000, %v3355, %v3111
        %v3363 = vsel %vm3000, %v3356, %v3113
        %v3364 = vsel %vm3000, %v3357, %v3327
        %v3365 = vld [vmem:[%s2805 + $0x39] sm:$0xff]
        %3366 = vrot.lane.b32.xlu0 %v3036, 64
        %v3367 = vpop.permute.xlu0 %3366
        %3368 = vrot.lane.b32.xlu0 %v3037, 64
        %v3369 = vpop.permute.xlu0 %3368
        %3370 = vrot.lane.b32.xlu0 %v3038, 64
        %v3371 = vpop.permute.xlu0 %3370
        %3372 = vrot.lane.b32.xlu0 %v3039, 64
        %v3373 = vpop.permute.xlu0 %3372
        %3374 = vrot.lane.b32.xlu0 %v3040, 64
        %v3375 = vpop.permute.xlu0 %3374
        %3376 = vrot.lane.b32.xlu0 %v3041, 64
        %v3377 = vpop.permute.xlu0 %3376
        %3378 = vrot.lane.b32.xlu0 %v3042, 64
        %v3379 = vpop.permute.xlu0 %3378
        %3388 = vrot.lane.b32.xlu0 %v3030, 32
        %v3389 = vpop.permute.xlu0 %3388
        %3390 = vrot.lane.b32.xlu0 %v3031, 32
        %v3391 = vpop.permute.xlu0 %3390
        %3392 = vrot.lane.b32.xlu0 %v3032, 32
        %v3393 = vpop.permute.xlu0 %3392
        %3394 = vrot.lane.b32.xlu0 %v3033, 32
        %v3395 = vpop.permute.xlu0 %3394
        %3396 = vrot.lane.b32.xlu0 %v3034, 32
        %v3397 = vpop.permute.xlu0 %3396
        %3398 = vrot.lane.b32.xlu0 %v3035, 32
        %v3399 = vpop.permute.xlu0 %3398
        %3400 = vrot.lane.b32.xlu0 %v3043, 32
        %v3401 = vpop.permute.xlu0 %3400
        %3409 = vrot.lane.b32.xlu0 %v2807, 64
        %v3410 = vpop.permute.xlu0 %3409
        %3411 = vrot.lane.b32.xlu0 %v2808, 64
        %v3412 = vpop.permute.xlu0 %3411
        %3413 = vrot.lane.b32.xlu0 %v2809, 64
        %v3414 = vpop.permute.xlu0 %3413
        %3415 = vrot.lane.b32.xlu0 %v2810, 64
        %v3416 = vpop.permute.xlu0 %3415
        %3417 = vrot.lane.b32.xlu0 %v2811, 64
        %v3418 = vpop.permute.xlu0 %3417
        %3419 = vrot.lane.b32.xlu0 %v2812, 64
        %v3420 = vpop.permute.xlu0 %3419
        %3421 = vrot.lane.b32.xlu0 %v3235, 64
        %v3422 = vpop.permute.xlu0 %3421
        %3431 = vrot.lane.b32.xlu0 %v2814, 96
        %v3432 = vpop.permute.xlu0 %3431
        %3433 = vrot.lane.b32.xlu0 %v2815, 96
        %v3434 = vpop.permute.xlu0 %3433
        %3435 = vrot.lane.b32.xlu0 %v2816, 96
        %v3436 = vpop.permute.xlu0 %3435
        %3437 = vrot.lane.b32.xlu0 %v2817, 96
        %v3438 = vpop.permute.xlu0 %3437
        %3439 = vrot.lane.b32.xlu0 %v2818, 96
        %v3440 = vpop.permute.xlu0 %3439
        %3441 = vrot.lane.b32.xlu0 %v2819, 96
        %v3442 = vpop.permute.xlu0 %3441
        %3443 = vrot.lane.b32.xlu0 %v3236, 96
        %v3444 = vpop.permute.xlu0 %3443
        %v3452 = vsel %vm2992, %v3008, %v3367
        %v3453 = vsel %vm2992, %v3009, %v3369
        %v3454 = vsel %vm2992, %v3010, %v3371
        %v3455 = vsel %vm2992, %v3011, %v3373
        %v3456 = vsel %vm2992, %v3012, %v3375
        %v3457 = vsel %vm2992, %v3013, %v3377
        %v3458 = vsel %vm2992, %v3014, %v3379
        %v3459 = vsel %vm3000, %v3452, %v2965
        %v3460 = vsel %vm3000, %v3453, %v2967
        %v3461 = vsel %vm3000, %v3454, %v2969
        %v3462 = vsel %vm3000, %v3455, %v2971
        %v3463 = vsel %vm3000, %v3456, %v2973
        %v3464 = vsel %vm3000, %v3457, %v2975
        %v3465 = vsel %vm3000, %v3458, %v2977
        %v3466 = vsel %vm2738, %v2791, %v3389
        %v3467 = vsel %vm2738, %v2792, %v3391
        %v3468 = vsel %vm2738, %v2793, %v3393
        %v3469 = vsel %vm2738, %v2794, %v3395
        %v3470 = vsel %vm2738, %v2795, %v3397
        %v3471 = vsel %vm2738, %v2796, %v3399
        %v3472 = vsel %vm2738, %v2822, %v3401
        %v3473 = vsel %vm2992, %v3466, %v3410
        %v3474 = vsel %vm2992, %v3467, %v3412
        %v3475 = vsel %vm2992, %v3468, %v3414
        %v3476 = vsel %vm2992, %v3469, %v3416
        %v3477 = vsel %vm2992, %v3470, %v3418
        %v3478 = vsel %vm2992, %v3471, %v3420
        %v3479 = vsel %vm2992, %v3472, %v3422
        %v3480 = vsel %vm3000, %v3473, %v3432
        %v3481 = vsel %vm3000, %v3474, %v3434
        %v3482 = vsel %vm3000, %v3475, %v3436
        %v3483 = vsel %vm3000, %v3476, %v3438
        %v3484 = vsel %vm3000, %v3477, %v3440
        %v3485 = vsel %vm3000, %v3478, %v3442
        %v3486 = vsel %vm3000, %v3479, %v3444
        %v3487 = vld [vmem:[%s4] sm:$0xff]
        %v3488 = vld [vmem:[%s4 + $0x8] sm:$0xff]
        %v3489 = vld [vmem:[%s4 + $0x10] sm:$0xff]
        %v3490 = vld [vmem:[%s4 + $0x18] sm:$0xff]
        %v3491 = vld [vmem:[%s4 + $0x20] sm:$0xff]
        %v3492 = vld [vmem:[%s4 + $0x28] sm:$0xff]
        %v3493 = vld [vmem:[%s4 + $0x30] sm:$0xff]
        %v3494 = vld [vmem:[%s4 + $0x38] sm:$0xff]
        %v3495 = vld [vmem:[%s4 + $0x40] sm:$0xff]
        %v3496 = vld [vmem:[%s4 + $0x48] sm:$0xff]
        %v3497 = vld [vmem:[%s4 + $0x50] sm:$0xff]
        %v3498 = vld [vmem:[%s4 + $0x58] sm:$0xff]
        %v3499 = vld [vmem:[%s4 + $0x60] sm:$0xff]
        %v3500 = vld [vmem:[%s4 + $0x68] sm:$0xff]
        %v3501 = vld [vmem:[%s4 + $0x70] sm:$0xff]
        %v3502 = vld [vmem:[%s4 + $0x78] sm:$0xff]
        %v3503 = vld [vmem:[%s4 + $0x80] sm:$0xff]
        %v3504 = vld [vmem:[%s4 + $0x88] sm:$0xff]
        %v3505 = vld [vmem:[%s4 + $0x90] sm:$0xff]
        %v3506 = vld [vmem:[%s4 + $0x98] sm:$0xff]
        %v3507 = vld [vmem:[%s4 + $0xa0] sm:$0xff]
        %v3508 = vld [vmem:[%s4 + $0xa8] sm:$0xff]
        %v3509 = vld [vmem:[%s4 + $0xb0] sm:$0xff]
        %v3510 = vld [vmem:[%s4 + $0xb8] sm:$0xff]
        %v3511 = vld [vmem:[%s4 + $0xc0] sm:$0xff]
        %v3512 = vld [vmem:[%s4 + $0xc8] sm:$0xff]
        %v3513 = vld [vmem:[%s4 + $0xd0] sm:$0xff]
        %v3514 = vld [vmem:[%s4 + $0xd8] sm:$0xff]
        %v3515 = vld [vmem:[%s4 + $0xe0] sm:$0xff]
        %v3516 = vld [vmem:[%s4 + $0xe8] sm:$0xff]
        %v3517 = vld [vmem:[%s4 + $0xf0] sm:$0xff]
        %v3518 = vld [vmem:[%s4 + $0xf8] sm:$0xff]
        %v3519 = vld [vmem:[%s4 + $0x100] sm:$0xff]
        %v3520 = vld [vmem:[%s4 + $0x108] sm:$0xff]
        %v3521 = vld [vmem:[%s4 + $0x110] sm:$0xff]
        %v3522 = vld [vmem:[%s4 + $0x118] sm:$0xff]
        %v3523 = vld [vmem:[%s5] sm:$0x1]
        %v3525 = vlaneseq
        %v3526 = vshrl.u32 %v3525, 7
        %v3527 = vsub.s32 0, %v3526
        %v3528 = vrot.slane %v3523, %v3527
        %v3530 = vsel %vm2738, %v2791, 0
        %v3532 = vsel %vm2738, %v2792, 0
        %v3534 = vsel %vm2738, %v2793, 0
        %v3536 = vsel %vm2738, %v2794, 0
        %v3538 = vsel %vm2738, %v2795, 0
        %v3540 = vsel %vm2738, %v2796, 0
        %v3542 = vsel %vm2738, %v2822, 0
        %v3544 = vsel %vm2738, %v3030, 0
        %v3546 = vsel %vm2738, %v3031, 0
        %v3548 = vsel %vm2738, %v3032, 0
        %v3550 = vsel %vm2738, %v3033, 0
        %v3552 = vsel %vm2738, %v3034, 0
        %v3554 = vsel %vm2738, %v3035, 0
        %v3556 = vsel %vm2738, %v3043, 0
        %v3558 = vsel %vm2738, %v2814, 0
        %v3560 = vsel %vm2738, %v2815, 0
        %v3562 = vsel %vm2738, %v2816, 0
        %v3564 = vsel %vm2738, %v2817, 0
        %v3566 = vsel %vm2738, %v2818, 0
        %v3568 = vsel %vm2738, %v2819, 0
        %v3570 = vsel %vm2738, %v3236, 0
        %v3572 = vsel %vm2738, %v3037, 0
        %v3574 = vsel %vm2738, %v3038, 0
        %v3576 = vsel %vm2738, %v3039, 0
        %v3578 = vsel %vm2738, %v3040, 0
        %v3580 = vsel %vm2738, %v3041, 0
        %v3582 = vsel %vm2738, %v3042, 0
        %v3585 = vsel %vm2738, %v3365, 0
        %3587 = vmatprep.subr.mxu0 0.0
        %3588 = vmatpush1.msra.mxu0 %v3487
        %3589 = vmatprep.subr.mxu0 0.0
        %3590 = vmatpush1.msra.mxu0 %v3488
        %3591 = vmatprep.subr.mxu0 0.0
        %3592 = vmatpush1.msra.mxu0 %v3489
        %3593 = vmatprep.subr.mxu0 0.0
        %3594 = vmatpush1.msra.mxu0 %v3490
        %3595 = vmatprep.subr.mxu0 0.0
        %3596 = vmatpush1.msra.mxu0 %v3491
        %3597 = vmatprep.subr.mxu0 0.0
        %3598 = vmatpush1.msra.mxu0 %v3492
        %3599 = vmatprep.subr.mxu0 0.0
        %3600 = vmatpush1.msra.mxu0 %v3493
        %3601 = vmatprep.subr.mxu0 0.0
        %3602 = vmatpush1.msra.mxu0 %v3494
        %3603 = vmatprep.subr.mxu0 0.0
        %3604 = vmatpush1.msra.mxu0 %v3495
        %3605 = vmatprep.subr.mxu0 0.0
        %3606 = vmatpush1.msra.mxu0 %v3496
        %3607 = vmatprep.subr.mxu0 0.0
        %3608 = vmatpush1.msra.mxu0 %v3497
        %3609 = vmatprep.subr.mxu0 0.0
        %3610 = vmatpush1.msra.mxu0 %v3498
        %3611 = vmatprep.subr.mxu0 0.0
        %3612 = vmatpush1.msra.mxu0 %v3499
        %3613 = vmatprep.subr.mxu0 0.0
        %3614 = vmatpush1.msra.mxu0 %v3500
        %3615 = vmatprep.subr.mxu0 0.0
        %3616 = vmatpush1.msra.mxu0 %v3501
        %3617 = vmatprep.subr.mxu0 0.0
        %3618 = vmatpush1.msra.mxu0 %v3502
        %3619 = vmatprep.subr.mxu0 0.0
        %3620 = vmatpush1.msra.mxu0 %v3503
        %3621 = vmatprep.subr.mxu0 0.0
        %3622 = vmatpush1.msra.mxu0 %v3504
        %3623 = vmatprep.subr.mxu0 0.0
        %3624 = vmatpush1.msra.mxu0 %v3505
        %3625 = vmatprep.subr.mxu0 0.0
        %3626 = vmatpush1.msra.mxu0 %v3506
        %3627 = vmatprep.subr.mxu0 0.0
        %3628 = vmatpush1.msra.mxu0 %v3507
        %3629 = vmatprep.subr.mxu0 0.0
        %3630 = vmatpush1.msra.mxu0 %v3508
        %3631 = vmatprep.subr.mxu0 0.0
        %3632 = vmatpush1.msra.mxu0 %v3509
        %3633 = vmatprep.subr.mxu0 0.0
        %3634 = vmatpush1.msra.mxu0 %v3510
        %3635 = vmatprep.subr.mxu0 0.0
        %3636 = vmatpush1.msra.mxu0 %v3511
        %3637 = vmatprep.subr.mxu0 0.0
        %3638 = vmatpush1.msra.mxu0 %v3512
        %3639 = vmatprep.subr.mxu0 0.0
        %3640 = vmatpush1.msra.mxu0 %v3513
        %3641 = vmatprep.subr.mxu0 0.0
        %3642 = vmatpush1.msra.mxu0 %v3514
        %3643 = vmatprep.subr.mxu0 0.0
        %3644 = vmatpush1.msra.mxu0 %v3515
        %3645 = vmatprep.subr.mxu0 0.0
        %3646 = vmatpush1.msra.mxu0 %v3516
        %3647 = vmatprep.subr.mxu0 0.0
        %3648 = vmatpush1.msra.mxu0 %v3517
        %3649 = vmatprep.subr.mxu0 0.0
        %3650 = vmatpush1.msra.mxu0 %v3518
        %3651 = vmatprep.mubr.f32.mxu0 %v3022
        %3652 = vmatmul.mubr.f32.gmra.mrb[0].mxu0 %v3001
        %v3653 = vpop.f32.mrb[0].mxu0
        %v3654 = vadd.f32 %v3528, %v3653
        %v3655 = vpop.f32.mrb[0].mxu0
        %3656 = vmatprep.mubr.f32.mxu0 %v3023
        %3657 = vmatmul.mubr.f32.gmra.mrb[0].mxu0 %v3002
        %v3658 = vpop.f32.mrb[0].mxu0
        %v3659 = vadd.f32 %v3528, %v3658
        %v3660 = vpop.f32.mrb[0].mxu0
        %3661 = vmatprep.mubr.f32.mxu0 %v3024
        %3662 = vmatmul.mubr.f32.gmra.mrb[0].mxu0 %v3003
        %v3663 = vpop.f32.mrb[0].mxu0
        %v3664 = vadd.f32 %v3528, %v3663
        %v3665 = vpop.f32.mrb[0].mxu0
        %3666 = vmatprep.mubr.f32.mxu0 %v3025
        %3667 = vmatmul.mubr.f32.gmra.mrb[0].mxu0 %v3004
        %v3668 = vpop.f32.mrb[0].mxu0
        %v3669 = vadd.f32 %v3528, %v3668
        %v3670 = vpop.f32.mrb[0].mxu0
        %3671 = vmatprep.mubr.f32.mxu0 %v3026
        %3672 = vmatmul.mubr.f32.gmra.mrb[0].mxu0 %v3005
        %v3673 = vpop.f32.mrb[0].mxu0
        %v3674 = vadd.f32 %v3528, %v3673
        %v3675 = vpop.f32.mrb[0].mxu0
        %3676 = vmatprep.mubr.f32.mxu0 %v3027
        %3677 = vmatmul.mubr.f32.gmra.mrb[0].mxu0 %v3006
        %v3678 = vpop.f32.mrb[0].mxu0
        %v3679 = vadd.f32 %v3528, %v3678
        %v3680 = vpop.f32.mrb[0].mxu0
        %3681 = vmatprep.mubr.f32.mxu0 %v3028
        %3682 = vmatmul.mubr.f32.gmra.mrb[0].mxu0 %v3007
        %v3683 = vpop.f32.mrb[0].mxu0
        %v3684 = vadd.f32 %v3528, %v3683
        %v3685 = vpop.f32.mrb[0].mxu0
        %3686 = vmatprep.mubr.f32.mxu0 %v3227
        %3687 = vmatmul.mubr.f32.gmra.mrb[0].mxu0 %v3206
        %v3688 = vpop.f32.mrb[0].mxu0
        %v3689 = vadd.f32 %v3528, %v3688
        %v3690 = vpop.f32.mrb[0].mxu0
        %3691 = vmatprep.mubr.f32.mxu0 %v3228
        %3692 = vmatmul.mubr.f32.gmra.mrb[0].mxu0 %v3207
        %v3693 = vpop.f32.mrb[0].mxu0
        %v3694 = vadd.f32 %v3528, %v3693
        %v3695 = vpop.f32.mrb[0].mxu0
        %3696 = vmatprep.mubr.f32.mxu0 %v3229
        %3697 = vmatmul.mubr.f32.gmra.mrb[0].mxu0 %v3208
        %v3698 = vpop.f32.mrb[0].mxu0
        %v3699 = vadd.f32 %v3528, %v3698
        %v3700 = vpop.f32.mrb[0].mxu0
        %3701 = vmatprep.mubr.f32.mxu0 %v3230
        %3702 = vmatmul.mubr.f32.gmra.mrb[0].mxu0 %v3209
        %v3703 = vpop.f32.mrb[0].mxu0
        %v3704 = vadd.f32 %v3528, %v3703
        %v3705 = vpop.f32.mrb[0].mxu0
        %3706 = vmatprep.mubr.f32.mxu0 %v3231
        %3707 = vmatmul.mubr.f32.gmra.mrb[0].mxu0 %v3210
        %v3708 = vpop.f32.mrb[0].mxu0
        %v3709 = vadd.f32 %v3528, %v3708
        %v3710 = vpop.f32.mrb[0].mxu0
        %3711 = vmatprep.mubr.f32.mxu0 %v3232
        %3712 = vmatmul.mubr.f32.gmra.mrb[0].mxu0 %v3211
        %v3713 = vpop.f32.mrb[0].mxu0
        %v3714 = vadd.f32 %v3528, %v3713
        %v3715 = vpop.f32.mrb[0].mxu0
        %3716 = vmatprep.mubr.f32.mxu0 %v3233
        %3717 = vmatmul.mubr.f32.gmra.mrb[0].mxu0 %v3212
        %v3718 = vpop.f32.mrb[0].mxu0
        %v3719 = vadd.f32 %v3528, %v3718
        %v3720 = vpop.f32.mrb[0].mxu0
        %3721 = vmatprep.mubr.f32.mxu0 %v3358
        %3722 = vmatmul.mubr.f32.gmra.mrb[0].mxu0 %v3343
        %v3723 = vpop.f32.mrb[0].mxu0
        %v3724 = vadd.f32 %v3528, %v3723
        %v3725 = vpop.f32.mrb[0].mxu0
        %3726 = vmatprep.mubr.f32.mxu0 %v3359
        %3727 = vmatmul.mubr.f32.gmra.mrb[0].mxu0 %v3344
        %v3728 = vpop.f32.mrb[0].mxu0
        %v3729 = vadd.f32 %v3528, %v3728
        %v3730 = vpop.f32.mrb[0].mxu0
        %3731 = vmatprep.mubr.f32.mxu0 %v3360
        %3732 = vmatmul.mubr.f32.gmra.mrb[0].mxu0 %v3345
        %v3733 = vpop.f32.mrb[0].mxu0
        %v3734 = vadd.f32 %v3528, %v3733
        %v3735 = vpop.f32.mrb[0].mxu0
        %3736 = vmatprep.mubr.f32.mxu0 %v3361
        %3737 = vmatmul.mubr.f32.gmra.mrb[0].mxu0 %v3346
        %v3738 = vpop.f32.mrb[0].mxu0
        %v3739 = vadd.f32 %v3528, %v3738
        %v3740 = vpop.f32.mrb[0].mxu0
        %3741 = vmatprep.mubr.f32.mxu0 %v3362
        %3742 = vmatmul.mubr.f32.gmra.mrb[0].mxu0 %v3347
        %v3743 = vpop.f32.mrb[0].mxu0
        %v3744 = vadd.f32 %v3528, %v3743
        %v3745 = vpop.f32.mrb[0].mxu0
        %3746 = vmatprep.mubr.f32.mxu0 %v3363
        %3747 = vmatmul.mubr.f32.gmra.mrb[0].mxu0 %v3348
        %v3748 = vpop.f32.mrb[0].mxu0
        %v3749 = vadd.f32 %v3528, %v3748
        %v3750 = vpop.f32.mrb[0].mxu0
        %3751 = vmatprep.mubr.f32.mxu0 %v3364
        %3752 = vmatmul.mubr.f32.gmra.mrb[0].mxu0 %v3349
        %v3753 = vpop.f32.mrb[0].mxu0
        %v3754 = vadd.f32 %v3528, %v3753
        %v3755 = vpop.f32.mrb[0].mxu0
        %3756 = vmatprep.mubr.f32.mxu0 %v3480
        %3757 = vmatmul.mubr.f32.gmra.mrb[0].mxu0 %v3459
        %v3758 = vpop.f32.mrb[0].mxu0
        %v3759 = vadd.f32 %v3528, %v3758
        %v3760 = vpop.f32.mrb[0].mxu0
        %3761 = vmatprep.mubr.f32.mxu0 %v3481
        %3762 = vmatmul.mubr.f32.gmra.mrb[0].mxu0 %v3460
        %v3763 = vpop.f32.mrb[0].mxu0
        %v3764 = vadd.f32 %v3528, %v3763
        %v3765 = vpop.f32.mrb[0].mxu0
        %3766 = vmatprep.mubr.f32.mxu0 %v3482
        %3767 = vmatmul.mubr.f32.gmra.mrb[0].mxu0 %v3461
        %v3768 = vpop.f32.mrb[0].mxu0
        %v3769 = vadd.f32 %v3528, %v3768
        %v3770 = vpop.f32.mrb[0].mxu0
        %3771 = vmatprep.mubr.f32.mxu0 %v3483
        %3772 = vmatmul.mubr.f32.gmra.mrb[0].mxu0 %v3462
        %v3773 = vpop.f32.mrb[0].mxu0
        %v3774 = vadd.f32 %v3528, %v3773
        %v3775 = vpop.f32.mrb[0].mxu0
        %3776 = vmatprep.mubr.f32.mxu0 %v3484
        %3777 = vmatmul.mubr.f32.gmra.mrb[0].mxu0 %v3463
        %v3778 = vpop.f32.mrb[0].mxu0
        %v3779 = vadd.f32 %v3528, %v3778
        %v3780 = vpop.f32.mrb[0].mxu0
        %3781 = vmatprep.mubr.f32.mxu0 %v3485
        %3782 = vmatmul.mubr.f32.gmra.mrb[0].mxu0 %v3464
        %v3783 = vpop.f32.mrb[0].mxu0
        %v3784 = vadd.f32 %v3528, %v3783
        %v3785 = vpop.f32.mrb[0].mxu0
        %3786 = vmatprep.mubr.f32.mxu0 %v3486
        %3787 = vmatmul.mubr.f32.gmra.mrb[0].mxu0 %v3465
        %v3788 = vpop.f32.mrb[0].mxu0
        %v3789 = vadd.f32 %v3528, %v3788
        %v3790 = vpop.f32.mrb[0].mxu0
        %3791 = vdwg.mxu0
        %3792 = vmatprep.subr.mxu0 0.0
        %3793 = vmatpush1.msra.mxu0 %v3519
        %3794 = vmatprep.subr.mxu0 0.0
        %3795 = vmatpush1.msra.mxu0 %v3520
        %3796 = vmatprep.subr.mxu0 0.0
        %3797 = vmatpush1.msra.mxu0 %v3521
        %3798 = vmatprep.subr.mxu0 0.0
        %3799 = vmatpush1.msra.mxu0 %v3522
        %3800 = vmatprep.subr.mxu0 0.0
        %3801 = vmatpush1.msra.mxu0 0.0
        %3802 = vmatprep.subr.mxu0 0.0
        %3803 = vmatpush1.msra.mxu0 0.0
        %3804 = vmatprep.subr.mxu0 0.0
        %3805 = vmatpush1.msra.mxu0 0.0
        %3806 = vmatprep.subr.mxu0 0.0
        %3807 = vmatpush1.msra.mxu0 0.0
        %3808 = vmatprep.subr.mxu0 0.0
        %3809 = vmatpush1.msra.mxu0 0.0
        %3810 = vmatprep.subr.mxu0 0.0
        %3811 = vmatpush1.msra.mxu0 0.0
        %3812 = vmatprep.subr.mxu0 0.0
        %3813 = vmatpush1.msra.mxu0 0.0
        %3814 = vmatprep.subr.mxu0 0.0
        %3815 = vmatpush1.msra.mxu0 0.0
        %3816 = vmatprep.subr.mxu0 0.0
        %3817 = vmatpush1.msra.mxu0 0.0
        %3818 = vmatprep.subr.mxu0 0.0
        %3819 = vmatpush1.msra.mxu0 0.0
        %3820 = vmatprep.subr.mxu0 0.0
        %3821 = vmatpush1.msra.mxu0 0.0
        %3822 = vmatprep.subr.mxu0 0.0
        %3823 = vmatpush1.msra.mxu0 0.0
        %3824 = vmatprep.subr.mxu0 0.0
        %3825 = vmatpush1.msra.mxu0 0.0
        %3826 = vmatprep.subr.mxu0 0.0
        %3827 = vmatpush1.msra.mxu0 0.0
        %3828 = vmatprep.subr.mxu0 0.0
        %3829 = vmatpush1.msra.mxu0 0.0
        %3830 = vmatprep.subr.mxu0 0.0
        %3831 = vmatpush1.msra.mxu0 0.0
        %3832 = vmatprep.subr.mxu0 0.0
        %3833 = vmatpush1.msra.mxu0 0.0
        %3834 = vmatprep.subr.mxu0 0.0
        %3835 = vmatpush1.msra.mxu0 0.0
        %3836 = vmatprep.subr.mxu0 0.0
        %3837 = vmatpush1.msra.mxu0 0.0
        %3838 = vmatprep.subr.mxu0 0.0
        %3839 = vmatpush1.msra.mxu0 0.0
        %3840 = vmatprep.subr.mxu0 0.0
        %3841 = vmatpush1.msra.mxu0 0.0
        %3842 = vmatprep.subr.mxu0 0.0
        %3843 = vmatpush1.msra.mxu0 0.0
        %3844 = vmatprep.subr.mxu0 0.0
        %3845 = vmatpush1.msra.mxu0 0.0
        %3846 = vmatprep.subr.mxu0 0.0
        %3847 = vmatpush1.msra.mxu0 0.0
        %3848 = vmatprep.subr.mxu0 0.0
        %3849 = vmatpush1.msra.mxu0 0.0
        %3850 = vmatprep.subr.mxu0 0.0
        %3851 = vmatpush1.msra.mxu0 0.0
        %3852 = vmatprep.subr.mxu0 0.0
        %3853 = vmatpush1.msra.mxu0 0.0
        %3854 = vmatprep.subr.mxu0 0.0
        %3855 = vmatpush1.msra.mxu0 0.0
        %3856 = vmatprep.mubr.f32.mxu0 0.0
        %3857 = vmatmul.mubr.f32.gmra.mrb[0].mxu0 %v3530
        %v3858 = vpop.f32.mrb[0].mxu0
        %v3859 = vadd.f32 %v3654, %v3858
        %v3860 = vpop.f32.mrb[0].mxu0
        %3861 = vmatprep.mubr.f32.mxu0 0.0
        %3862 = vmatmul.mubr.f32.gmra.mrb[0].mxu0 %v3532
        %v3863 = vpop.f32.mrb[0].mxu0
        %v3864 = vadd.f32 %v3659, %v3863
        %v3865 = vpop.f32.mrb[0].mxu0
        %3866 = vmatprep.mubr.f32.mxu0 0.0
        %3867 = vmatmul.mubr.f32.gmra.mrb[0].mxu0 %v3534
        %v3868 = vpop.f32.mrb[0].mxu0
        %v3869 = vadd.f32 %v3664, %v3868
        %v3870 = vpop.f32.mrb[0].mxu0
        %3871 = vmatprep.mubr.f32.mxu0 0.0
        %3872 = vmatmul.mubr.f32.gmra.mrb[0].mxu0 %v3536
        %v3873 = vpop.f32.mrb[0].mxu0
        %v3874 = vadd.f32 %v3669, %v3873
        %v3875 = vpop.f32.mrb[0].mxu0
        %3876 = vmatprep.mubr.f32.mxu0 0.0
        %3877 = vmatmul.mubr.f32.gmra.mrb[0].mxu0 %v3538
        %v3878 = vpop.f32.mrb[0].mxu0
        %v3879 = vadd.f32 %v3674, %v3878
        %v3880 = vpop.f32.mrb[0].mxu0
        %3881 = vmatprep.mubr.f32.mxu0 0.0
        %3882 = vmatmul.mubr.f32.gmra.mrb[0].mxu0 %v3540
        %v3883 = vpop.f32.mrb[0].mxu0
        %v3884 = vadd.f32 %v3679, %v3883
        %v3885 = vpop.f32.mrb[0].mxu0
        %3886 = vmatprep.mubr.f32.mxu0 0.0
        %3887 = vmatmul.mubr.f32.gmra.mrb[0].mxu0 %v3542
        %v3888 = vpop.f32.mrb[0].mxu0
        %v3889 = vadd.f32 %v3684, %v3888
        %v3890 = vpop.f32.mrb[0].mxu0
        %3891 = vmatprep.mubr.f32.mxu0 0.0
        %3892 = vmatmul.mubr.f32.gmra.mrb[0].mxu0 %v3544
        %v3893 = vpop.f32.mrb[0].mxu0
        %v3894 = vadd.f32 %v3689, %v3893
        %v3895 = vpop.f32.mrb[0].mxu0
        %3896 = vmatprep.mubr.f32.mxu0 0.0
        %3897 = vmatmul.mubr.f32.gmra.mrb[0].mxu0 %v3546
        %v3898 = vpop.f32.mrb[0].mxu0
        %v3899 = vadd.f32 %v3694, %v3898
        %v3900 = vpop.f32.mrb[0].mxu0
        %3901 = vmatprep.mubr.f32.mxu0 0.0
        %3902 = vmatmul.mubr.f32.gmra.mrb[0].mxu0 %v3548
        %v3903 = vpop.f32.mrb[0].mxu0
        %v3904 = vadd.f32 %v3699, %v3903
        %v3905 = vpop.f32.mrb[0].mxu0
        %3906 = vmatprep.mubr.f32.mxu0 0.0
        %3907 = vmatmul.mubr.f32.gmra.mrb[0].mxu0 %v3550
        %v3908 = vpop.f32.mrb[0].mxu0
        %v3909 = vadd.f32 %v3704, %v3908
        %v3910 = vpop.f32.mrb[0].mxu0
        %3911 = vmatprep.mubr.f32.mxu0 0.0
        %3912 = vmatmul.mubr.f32.gmra.mrb[0].mxu0 %v3552
        %v3913 = vpop.f32.mrb[0].mxu0
        %v3914 = vadd.f32 %v3709, %v3913
        %v3915 = vpop.f32.mrb[0].mxu0
        %3916 = vmatprep.mubr.f32.mxu0 0.0
        %3917 = vmatmul.mubr.f32.gmra.mrb[0].mxu0 %v3554
        %v3918 = vpop.f32.mrb[0].mxu0
        %v3919 = vadd.f32 %v3714, %v3918
        %v3920 = vpop.f32.mrb[0].mxu0
        %3921 = vmatprep.mubr.f32.mxu0 0.0
        %3922 = vmatmul.mubr.f32.gmra.mrb[0].mxu0 %v3556
        %v3923 = vpop.f32.mrb[0].mxu0
        %v3924 = vadd.f32 %v3719, %v3923
        %v3925 = vpop.f32.mrb[0].mxu0
        %3926 = vmatprep.mubr.f32.mxu0 0.0
        %3927 = vmatmul.mubr.f32.gmra.mrb[0].mxu0 %v3558
        %v3928 = vpop.f32.mrb[0].mxu0
        %v3929 = vadd.f32 %v3724, %v3928
        %v3930 = vpop.f32.mrb[0].mxu0
        %3931 = vmatprep.mubr.f32.mxu0 0.0
        %3932 = vmatmul.mubr.f32.gmra.mrb[0].mxu0 %v3560
        %v3933 = vpop.f32.mrb[0].mxu0
        %v3934 = vadd.f32 %v3729, %v3933
        %v3935 = vpop.f32.mrb[0].mxu0
        %3936 = vmatprep.mubr.f32.mxu0 0.0
        %3937 = vmatmul.mubr.f32.gmra.mrb[0].mxu0 %v3562
        %v3938 = vpop.f32.mrb[0].mxu0
        %v3939 = vadd.f32 %v3734, %v3938
        %v3940 = vpop.f32.mrb[0].mxu0
        %3941 = vmatprep.mubr.f32.mxu0 0.0
        %3942 = vmatmul.mubr.f32.gmra.mrb[0].mxu0 %v3564
        %v3943 = vpop.f32.mrb[0].mxu0
        %v3944 = vadd.f32 %v3739, %v3943
        %v3945 = vpop.f32.mrb[0].mxu0
        %3946 = vmatprep.mubr.f32.mxu0 0.0
        %3947 = vmatmul.mubr.f32.gmra.mrb[0].mxu0 %v3566
        %v3948 = vpop.f32.mrb[0].mxu0
        %v3949 = vadd.f32 %v3744, %v3948
        %v3950 = vpop.f32.mrb[0].mxu0
        %3951 = vmatprep.mubr.f32.mxu0 0.0
        %3952 = vmatmul.mubr.f32.gmra.mrb[0].mxu0 %v3568
        %v3953 = vpop.f32.mrb[0].mxu0
        %v3954 = vadd.f32 %v3749, %v3953
        %v3955 = vpop.f32.mrb[0].mxu0
        %3956 = vmatprep.mubr.f32.mxu0 0.0
        %3957 = vmatmul.mubr.f32.gmra.mrb[0].mxu0 %v3570
        %v3958 = vpop.f32.mrb[0].mxu0
        %v3959 = vadd.f32 %v3754, %v3958
        %v3960 = vpop.f32.mrb[0].mxu0
        %3961 = vmatprep.mubr.f32.mxu0 0.0
        %3962 = vmatmul.mubr.f32.gmra.mrb[0].mxu0 %v3572
        %v3963 = vpop.f32.mrb[0].mxu0
        %v3964 = vadd.f32 %v3759, %v3963
        %v3965 = vpop.f32.mrb[0].mxu0
        %3966 = vmatprep.mubr.f32.mxu0 0.0
        %3967 = vmatmul.mubr.f32.gmra.mrb[0].mxu0 %v3574
        %v3968 = vpop.f32.mrb[0].mxu0
        %v3969 = vadd.f32 %v3764, %v3968
        %v3970 = vpop.f32.mrb[0].mxu0
        %3971 = vmatprep.mubr.f32.mxu0 0.0
        %3972 = vmatmul.mubr.f32.gmra.mrb[0].mxu0 %v3576
        %v3973 = vpop.f32.mrb[0].mxu0
        %v3974 = vadd.f32 %v3769, %v3973
        %v3975 = vpop.f32.mrb[0].mxu0
        %3976 = vmatprep.mubr.f32.mxu0 0.0
        %3977 = vmatmul.mubr.f32.gmra.mrb[0].mxu0 %v3578
        %v3978 = vpop.f32.mrb[0].mxu0
        %v3979 = vadd.f32 %v3774, %v3978
        %v3980 = vpop.f32.mrb[0].mxu0
        %3981 = vmatprep.mubr.f32.mxu0 0.0
        %3982 = vmatmul.mubr.f32.gmra.mrb[0].mxu0 %v3580
        %v3983 = vpop.f32.mrb[0].mxu0
        %v3984 = vadd.f32 %v3779, %v3983
        %v3985 = vpop.f32.mrb[0].mxu0
        %3986 = vmatprep.mubr.f32.mxu0 0.0
        %3987 = vmatmul.mubr.f32.gmra.mrb[0].mxu0 %v3582
        %v3988 = vpop.f32.mrb[0].mxu0
        %v3989 = vadd.f32 %v3784, %v3988
        %v3990 = vpop.f32.mrb[0].mxu0
        %3991 = vmatprep.mubr.f32.mxu0 0.0
        %3992 = vmatmul.mubr.f32.gmra.mrb[0].mxu0 %v3585
        %v3993 = vpop.f32.mrb[0].mxu0
        %v3994 = vadd.f32 %v3789, %v3993
        %v3995 = vpop.f32.mrb[0].mxu0
        %3996 = vdwg.mxu0
        %v3997 = vmax.f32 %v3859, 0.0
        %v3998 = vmax.f32 %v3864, 0.0
        %v3999 = vmax.f32 %v3869, 0.0
        %v4000 = vmax.f32 %v3874, 0.0
        %v4001 = vmax.f32 %v3879, 0.0
        %v4002 = vmax.f32 %v3884, 0.0
        %v4003 = vmax.f32 %v3889, 0.0
        %v4004 = vmax.f32 %v3894, 0.0
        %v4005 = vmax.f32 %v3899, 0.0
        %v4006 = vmax.f32 %v3904, 0.0
        %v4007 = vmax.f32 %v3909, 0.0
        %v4008 = vmax.f32 %v3914, 0.0
        %v4009 = vmax.f32 %v3919, 0.0
        %v4010 = vmax.f32 %v3924, 0.0
        %v4011 = vmax.f32 %v3929, 0.0
        %v4012 = vmax.f32 %v3934, 0.0
        %v4013 = vmax.f32 %v3939, 0.0
        %v4014 = vmax.f32 %v3944, 0.0
        %v4015 = vmax.f32 %v3949, 0.0
        %v4016 = vmax.f32 %v3954, 0.0
        %v4017 = vmax.f32 %v3959, 0.0
        %v4018 = vmax.f32 %v3964, 0.0
        %v4019 = vmax.f32 %v3969, 0.0
        %v4020 = vmax.f32 %v3974, 0.0
        %v4021 = vmax.f32 %v3979, 0.0
        %v4022 = vmax.f32 %v3984, 0.0
        %v4023 = vmax.f32 %v3989, 0.0
        %v4024 = vmax.f32 %v3994, 0.0
        %v4025 = vmax.f32 %v3997, %v4004
        %v4026 = vmax.f32 %v3998, %v4005
        %v4027 = vmax.f32 %v3999, %v4006
        %v4028 = vmax.f32 %v4000, %v4007
        %v4029 = vmax.f32 %v4001, %v4008
        %v4030 = vmax.f32 %v4002, %v4009
        %v4031 = vmax.f32 %v4003, %v4010
        %v4032 = vmax.f32 %v4011, %v4018
        %v4033 = vmax.f32 %v4012, %v4019
        %v4034 = vmax.f32 %v4013, %v4020
        %v4035 = vmax.f32 %v4014, %v4021
        %v4036 = vmax.f32 %v4015, %v4022
        %v4037 = vmax.f32 %v4016, %v4023
        %v4038 = vmax.f32 %v4017, %v4024
        %v4039 = vmax.f32 %v4025, %v4032
        %v4040 = vmax.f32 %v4026, %v4033
        %v4041 = vmax.f32 %v4027, %v4034
        %v4042 = vmax.f32 %v4028, %v4035
        %v4043 = vmax.f32 %v4029, %v4036
        %v4044 = vmax.f32 %v4030, %v4037
        %v4045 = vmax.f32 %v4031, %v4038
        %4046 = vst.msk [vmem:[%s858] sm:$0xff] %vm2992, %v4039
        %4047 = vst.msk [vmem:[%s858 + $0x8] sm:$0xff] %vm2992, %v4040
        %4048 = vst.msk [vmem:[%s858 + $0x10] sm:$0xff] %vm2992, %v4041
        %4049 = vst.msk [vmem:[%s858 + $0x18] sm:$0xff] %vm2992, %v4042
        %4050 = vst.msk [vmem:[%s858 + $0x20] sm:$0xff] %vm2992, %v4043
        %4051 = vst.msk [vmem:[%s858 + $0x28] sm:$0xff] %vm2992, %v4044
        %4052 = vst.msk [vmem:[%s858 + $0x30] sm:$0xff] %vm2992, %v4045
        %p4053 = scmp.lt.s32.totalorder %s17, 1
        %s4054 = scalar_select %p4053, %s17, 1
        %s4055 = smul.addr %s4054, 7
        %s4056 = smul.addr %s4055, 8
        %s4057 = scalar_lea.vmem %s6, %s4056
        // Predicated region
        $region83: #{cnn_forward.2} parent=77 // pred_check
          %p4058 = pneg %p166
        $region84: #{cnn_forward.2} parent=77 // pred_check_branch
          %4060 = sbr.rel (%p4058) target = $region86
        $region85: #{cnn_forward.2} parent=77 // pred_region
          _
        $region86: #{cnn_forward.2} parent=77 // pred_fallthru
          _
      $region78: #{cnn_forward.2} parent=5 // pred_fallthru
        _
      %p4061 = scmp.le.s32.totalorder 2, %s12
      // Predicated region
      $region87: #{cnn_forward.2} parent=5 // pred_check
        %p4062 = pneg %p4061
      $region88: #{cnn_forward.2} parent=5 // pred_check_branch
        %4064 = sbr.rel (%p4062) target = $region90
      $region89: #{cnn_forward.2} parent=5 // pred_region
        %s4065 = ssub.s32 %s12, 2
        // Predicated region
        $region91: #{cnn_forward.2} parent=89 // pred_check
          %p4066 = pneg %p172
        $region92: #{cnn_forward.2} parent=89 // pred_check_branch
          %4068 = sbr.rel (%p4066) target = $region94
        $region93: #{cnn_forward.2} parent=89 // pred_region
          %p4069 = scmp.lt.s32.totalorder %s18, 1
          %s4070 = scalar_select %p4069, %s18, 1
          %s4071 = smul.addr %s4070, 7
          %s4072 = smul.addr %s4071, 8
          %s4073 = scalar_lea.vmem %s6, %s4072
        $region94: #{cnn_forward.2} parent=89 // pred_fallthru
          _
      $region90: #{cnn_forward.2} parent=5 // pred_fallthru
        _
    $region6: #{cnn_forward.2} parent=1 // loop_footer
      %s16 = sadd.s32 1, %s12
    $region7: #{cnn_forward.2} parent=1 // loop_footer_branch
      %11 = sbr.rel target = $region3
    $region8: #{cnn_forward.2} parent=1 // loop_exit
      _

</llo_original>
